<compile_context>
chip_gen: v6e
topology: v6e:2x2x1
jax: 0.10.0
libtpu: 0.0.40
codegen_flags: <defaults>
</compile_context>

<pallas_src>
import functools
import math

import jax
import jax.numpy as jnp
from jax import lax
from jax.experimental import pallas as pl
from jax.experimental.pallas import tpu as pltpu

_VMEM_LIMIT = 64 * 1024 * 1024


def _pick_block(n, target, align=8):
    """Largest tile t <= target with t | n and t % align == 0 (fallbacks: align=8, then n)."""
    if n <= target:
        return n
    for a in (align, 8):
        t = (target // a) * a
        while t >= a:
            if n % t == 0:
                return t
            t -= a
    return n  # no aligned divisor: fall back to the full (untiled) dimension


# ---------------------------------------------------------------------------
# Stage 1: SparseGraphLearn (densified) -> row-wise softmax graph `sgraph`.
#   grid = (B, N // tq): one batch element x one node row-block per step.
# TODO(synk): original uses a sparse edge list (self.edge) + tf.sparse_softmax;
# here the dense all-pairs graph is learned instead.
# ---------------------------------------------------------------------------
def _sgraph_kernel(xq_ref, xf_ref, wgl_ref, a_ref, sg_ref, *, col_block):
    xq = xq_ref[0]                           # [tq, Din]
    xf = xf_ref[0]                           # [N,  Din]
    wgl = wgl_ref[...]                       # [Din, H]
    a_row = a_ref[...][None, :, :]           # [1, 1, H]

    # h stays f32: |h_i - h_j| is the cancellation-prone part of the kernel.
    hq = jnp.dot(xq, wgl, preferred_element_type=jnp.float32)   # [tq, H]
    hf = jnp.dot(xf, wgl, preferred_element_type=jnp.float32)   # [N,  H]

    n = hf.shape[0]
    chunks = []
    for c in range(n // col_block):          # bound the live temp to [tq, tk, H]
        hk = hf[c * col_block:(c + 1) * col_block]               # [tk, H]
        d = jnp.abs(hq[:, None, :] - hk[None, :, :])             # [tq, tk, H]
        # TODO(synk): the a-weighted H-reduction could be moved onto the MXU as
        # d.reshape(tq*tk, H) @ a[H,1]; kept as a fused VPU mul + lane reduce to
        # avoid the (tq*tk,1)->(tq,tk) relayout, which Mosaic may reject.
        chunks.append(jnp.sum(d * a_row, axis=-1))               # [tq, tk]
    e = chunks[0] if len(chunks) == 1 else jnp.concatenate(chunks, axis=-1)

    e = jnp.maximum(e, 0.0)                                      # act = ReLU
    e = e - jnp.max(e, axis=-1, keepdims=True)                   # stable softmax
    p = jnp.exp(e)
    inv = pl.reciprocal(jnp.sum(p, axis=-1, keepdims=True), approx=True)   # EUP
    sg_ref[0] = (p * inv).astype(sg_ref.dtype)


# ---------------------------------------------------------------------------
# Stages 2-3: GraphConv -> ReLU -> BatchNorm1d(N) (train-mode batch stats).
#   grid = (N // tq,): sgraph row-blocks streamed; full batch kept in-block so
#   BN stats (per node, over batch+feature) never cross tiles.
# ---------------------------------------------------------------------------
def _conv_bn_kernel(sg_ref, x_ref, w_ref, b_ref, out_ref):
    nb = sg_ref.shape[0]                     # B
    w = w_ref[...]                           # [D, E]   (here D <= E, so A@x first)
    bias = b_ref[...][0]                     # [E]
    eo = w.shape[1]

    ys = []
    row_sum = None
    for bi in range(nb):
        # sgraph @ x : per-batch 2-D MXU matmul, bf16 operands, f32 accumulation.
        ax = jnp.dot(sg_ref[bi].astype(jnp.bfloat16), x_ref[bi].astype(jnp.bfloat16),
                     preferred_element_type=jnp.float32)          # [tq, D]
        y = jnp.dot(ax, w, preferred_element_type=jnp.float32) + bias   # [tq, E]
        # F.normalize(p=2, dim=2, eps=1e-12)
        ss = jnp.sum(y * y, axis=-1, keepdims=True)
        y = y * lax.rsqrt(jnp.maximum(ss, 1e-24))
        y = jnp.maximum(y, 0.0)                                   # ReLU
        ys.append(y)
        rs = jnp.sum(y, axis=-1, keepdims=True)                   # [tq, 1]
        row_sum = rs if row_sum is None else row_sum + rs

    # fresh nn.BatchNorm1d(N) in train mode: per-node stats over (batch, feature)
    denom = float(nb * eo)
    mean = row_sum / denom                                        # [tq, 1]
    var_sum = None
    for bi in range(nb):
        dv = ys[bi] - mean
        vs = jnp.sum(dv * dv, axis=-1, keepdims=True)
        var_sum = vs if var_sum is None else var_sum + vs
    inv_std = lax.rsqrt(var_sum / denom + 1e-5)                   # [tq, 1]
    for bi in range(nb):
        out_ref[bi] = ((ys[bi] - mean) * inv_std).astype(out_ref.dtype)


# ---------------------------------------------------------------------------
# Stage 4: last GraphConv (no ReLU / BN) + prediction linear, fused.
#   pred = x1 @ Wp1 + x2 @ Wp2 + x3 @ Wp3 + b_pred   (concat folded away)
# ---------------------------------------------------------------------------
def _conv_last_pred_kernel(sg_ref, x2f_ref, wl_ref, bl_ref,
                           x1q_ref, x2q_ref, wp1_ref, wp2_ref, wp3_ref, bp_ref,
                           pred_ref):
    nb = sg_ref.shape[0]
    wl = wl_ref[...]
    bl = bl_ref[...][0]
    wp1 = wp1_ref[...]
    wp2 = wp2_ref[...]
    wp3 = wp3_ref[...]
    bp = bp_ref[...][0]

    for bi in range(nb):
        ax = jnp.dot(sg_ref[bi].astype(jnp.bfloat16), x2f_ref[bi].astype(jnp.bfloat16),
                     preferred_element_type=jnp.float32)          # [tq, H]
        y = jnp.dot(ax, wl, preferred_element_type=jnp.float32) + bl   # [tq, E]
        ss = jnp.sum(y * y, axis=-1, keepdims=True)
        x3 = y * lax.rsqrt(jnp.maximum(ss, 1e-24))                # L2 norm only
        pred = (jnp.dot(x1q_ref[bi], wp1, preferred_element_type=jnp.float32)
                + jnp.dot(x2q_ref[bi], wp2, preferred_element_type=jnp.float32)
                + jnp.dot(x3, wp3, preferred_element_type=jnp.float32)
                + bp)
        pred_ref[bi] = pred.astype(pred_ref.dtype)


def glcn_encoder_forward(x, adj, params, *, row_block=128, col_block=256):
    """GlcnEncoder.forward(x, adj, type='train') -> (pred, sgraph).

    adj is only inspected for shape in the train path (sgraph replaces it)."""
    del adj
    x = x.astype(jnp.float32)
    B, N, Din = x.shape
    H = params['w1'].shape[1]
    E = params['w_last'].shape[1]
    L = params['b_pred'].shape[-1]

    tq = _pick_block(N, row_block, align=8)       # node row-block
    tk = _pick_block(N, col_block, align=128)     # column chunk for edge scoring
    nb = N // tq

    # ------------------ stage 1: learned graph (B x row-block grid) ----------
    sgraph = pl.pallas_call(
        functools.partial(_sgraph_kernel, col_block=tk),
        out_shape=jax.ShapeDtypeStruct((B, N, N), jnp.float32),
        grid=(B, nb),
        in_specs=[
            pl.BlockSpec((1, tq, Din), lambda b, i: (b, i, 0)),   # query rows
            pl.BlockSpec((1, N, Din), lambda b, i: (b, 0, 0)),    # all nodes
            pl.BlockSpec((Din, H), lambda b, i: (0, 0)),          # W_gl
            pl.BlockSpec((1, H), lambda b, i: (0, 0)),            # a
        ],
        out_specs=pl.BlockSpec((1, tq, N), lambda b, i: (b, i, 0)),
        compiler_params=pltpu.CompilerParams(
            dimension_semantics=("parallel", "parallel"),
            vmem_limit_bytes=_VMEM_LIMIT),
    )(x, x, params['w_gl'], params['a'])

    conv_params = pltpu.CompilerParams(
        dimension_semantics=("parallel",), vmem_limit_bytes=_VMEM_LIMIT)

    # ------------------ stages 2-3: GraphConv + ReLU + BN ---------------------
    def conv_bn(xin, w, b):
        din, eo = w.shape
        return pl.pallas_call(
            _conv_bn_kernel,
            out_shape=jax.ShapeDtypeStruct((B, N, eo), jnp.float32),
            grid=(nb,),
            in_specs=[
                pl.BlockSpec((B, tq, N), lambda i: (0, i, 0)),    # sgraph row-block
                pl.BlockSpec((B, N, din), lambda i: (0, 0, 0)),   # all-node features
                pl.BlockSpec((din, eo), lambda i: (0, 0)),
                pl.BlockSpec((1, eo), lambda i: (0, 0)),
            ],
            out_specs=pl.BlockSpec((B, tq, eo), lambda i: (0, i, 0)),
            compiler_params=conv_params,
        )(sgraph, xin, w, b)

    x1 = conv_bn(x, params['w1'], params['b1'])
    x2 = conv_bn(x1, params['w2'], params['b2'])

    # ------------------ stage 4: last GraphConv + prediction linear -----------
    pred = pl.pallas_call(
        _conv_last_pred_kernel,
        out_shape=jax.ShapeDtypeStruct((B, N, L), jnp.float32),
        grid=(nb,),
        in_specs=[
            pl.BlockSpec((B, tq, N), lambda i: (0, i, 0)),        # sgraph row-block
            pl.BlockSpec((B, N, H), lambda i: (0, 0, 0)),         # x2 all nodes
            pl.BlockSpec((H, E), lambda i: (0, 0)),               # W_last
            pl.BlockSpec((1, E), lambda i: (0, 0)),               # b_last
            pl.BlockSpec((B, tq, H), lambda i: (0, i, 0)),        # x1 rows
            pl.BlockSpec((B, tq, H), lambda i: (0, i, 0)),        # x2 rows
            pl.BlockSpec((H, L), lambda i: (0, 0)),               # Wp1
            pl.BlockSpec((H, L), lambda i: (0, 0)),               # Wp2
            pl.BlockSpec((E, L), lambda i: (0, 0)),               # Wp3
            pl.BlockSpec((1, L), lambda i: (0, 0)),               # b_pred
        ],
        out_specs=pl.BlockSpec((B, tq, L), lambda i: (0, i, 0)),
        compiler_params=conv_params,
    )(sgraph, x2, params['w_last'], params['b_last'], x1, x2,
      params['wp1'], params['wp2'], params['wp3'], params['b_pred'])

    return pred, sgraph


def init_params(key, input_dim, hidden_dim, embedding_dim, label_dim):
    """Deterministic xavier-uniform (relu gain) init matching the module's __init__."""
    ks = jax.random.split(key, 8)
    gain = math.sqrt(2.0)

    def xavier(k, shape):
        fi, fo = shape[0], shape[1]
        bound = gain * math.sqrt(6.0 / (fi + fo))
        return jax.random.uniform(k, shape, jnp.float32, -bound, bound)

    pred_in = 2 * hidden_dim + embedding_dim   # concat=True, num_layers=3
    wp = xavier(ks[6], (pred_in, label_dim))
    inv = 1.0 / math.sqrt(pred_in)
    # TODO(synk): SparseGraphLearn's (unused-for-sgraph) bias on h is omitted,
    # matching the GLCN reference (only weight and `a` are initialized).
    return dict(
        w_gl=xavier(ks[0], (input_dim, hidden_dim)),
        a=xavier(ks[1], (1, hidden_dim)),
        w1=xavier(ks[2], (input_dim, hidden_dim)),
        b1=jnp.zeros((1, hidden_dim), jnp.float32),
        w2=xavier(ks[3], (hidden_dim, hidden_dim)),
        b2=jnp.zeros((1, hidden_dim), jnp.float32),
        w_last=xavier(ks[4], (hidden_dim, embedding_dim)),
        b_last=jnp.zeros((1, embedding_dim), jnp.float32),
        wp1=wp[:hidden_dim],
        wp2=wp[hidden_dim:2 * hidden_dim],
        wp3=wp[2 * hidden_dim:],
        b_pred=jax.random.uniform(ks[7], (1, label_dim), jnp.float32, -inv, inv),
    )


if __name__ == "__main__":
    key = jax.random.PRNGKey(0)
    kx, kp = jax.random.split(key)

    B, N = 2, 16
    INPUT_DIM, HIDDEN_DIM, EMBEDDING_DIM, LABEL_DIM = 8, 32, 32, 8

    x = jax.random.normal(kx, (B, N, INPUT_DIM), dtype=jnp.float32)
    adj = jnp.broadcast_to(jnp.eye(N, dtype=jnp.float32), (B, N, N))
    params = init_params(kp, INPUT_DIM, HIDDEN_DIM, EMBEDDING_DIM, LABEL_DIM)

    fwd = jax.jit(glcn_encoder_forward)
    pred, sgraph = fwd(x, adj, params)
    jax.block_until_ready((pred, sgraph))

    assert pred.shape == (B, N, LABEL_DIM)
    assert sgraph.shape == (B, N, N)
    assert bool(jnp.all(jnp.isfinite(pred))) and bool(jnp.all(jnp.isfinite(sgraph)))
    # learned graph rows are a softmax -> should sum to ~1 (approx reciprocal tolerance)
    row_sums = jnp.sum(sgraph, axis=-1)
    assert bool(jnp.all(jnp.abs(row_sums - 1.0) < 1e-2))
    print("KERNEL_OK")
</pallas_src>

<mosaic_0001>
module attributes {stable_mosaic.version = 11 : i64} {
  func.func @_conv_bn_kernel(%arg0: i32, %arg1: memref<2x16x16xf32, #tpu.memory_space<vmem>>, %arg2: memref<2x16x32xf32, #tpu.memory_space<vmem>>, %arg3: memref<32x32xf32, #tpu.memory_space<vmem>>, %arg4: memref<1x32xf32, #tpu.memory_space<vmem>>, %arg5: memref<2x16x32xf32, #tpu.memory_space<vmem>>) attributes {dimension_semantics = [#tpu.dimension_semantics<parallel>], iteration_bounds = array<i64: 1>, scalar_prefetch = 0 : i64, scratch_operands = 0 : i64, tpu.core_type = #tpu.core_type<tc>, window_params = [{transform_indices = @transform_0, window_bounds = array<i64: 2, 16, 16>}, {pipeline_mode = #tpu.pipeline_mode<synchronous>, transform_indices = @transform_1, window_bounds = array<i64: 2, 16, 32>}, {pipeline_mode = #tpu.pipeline_mode<synchronous>, transform_indices = @transform_2, window_bounds = array<i64: 32, 32>}, {pipeline_mode = #tpu.pipeline_mode<synchronous>, transform_indices = @transform_3, window_bounds = array<i64: 1, 32>}, {transform_indices = @transform_4, window_bounds = array<i64: 2, 16, 32>}]} {
    %c0 = arith.constant 0 : index
    %c0_0 = arith.constant 0 : index
    %0 = vector.load %arg3[%c0, %c0_0] : memref<32x32xf32, #tpu.memory_space<vmem>>, vector<32x32xf32>
    %c0_1 = arith.constant 0 : index
    %c0_2 = arith.constant 0 : index
    %1 = vector.load %arg4[%c0_1, %c0_2] : memref<1x32xf32, #tpu.memory_space<vmem>>, vector<1x32xf32>
    %2 = vector.shape_cast %1 : vector<1x32xf32> to vector<32xf32>
    %c0_3 = arith.constant 0 : index
    %c0_4 = arith.constant 0 : index
    %c0_5 = arith.constant 0 : index
    %3 = vector.load %arg1[%c0_3, %c0_4, %c0_5] : memref<2x16x16xf32, #tpu.memory_space<vmem>>, vector<1x16x16xf32>
    %4 = vector.shape_cast %3 : vector<1x16x16xf32> to vector<16x16xf32>
    %5 = arith.truncf %4 : vector<16x16xf32> to vector<16x16xbf16>
    %c0_6 = arith.constant 0 : index
    %c0_7 = arith.constant 0 : index
    %c0_8 = arith.constant 0 : index
    %6 = vector.load %arg2[%c0_6, %c0_7, %c0_8] : memref<2x16x32xf32, #tpu.memory_space<vmem>>, vector<1x16x32xf32>
    %7 = vector.shape_cast %6 : vector<1x16x32xf32> to vector<16x32xf32>
    %8 = arith.truncf %7 : vector<16x32xf32> to vector<16x32xbf16>
    %cst = arith.constant dense<0.000000e+00> : vector<16x32xf32>
    %9 = tpu.matmul %5, %8, %cst {dimension_numbers = #tpu.dot_dimension_numbers<[1], [0], [0], [1], [0, 0, 1, 1], [], []>} : vector<16x16xbf16>, vector<16x32xbf16>, vector<16x32xf32> -> vector<16x32xf32>
    %cst_9 = arith.constant dense<0.000000e+00> : vector<16x32xf32>
    %10 = tpu.matmul %9, %0, %cst_9 {dimension_numbers = #tpu.dot_dimension_numbers<[1], [0], [0], [1], [0, 0, 1, 1], [], []>} : vector<16x32xf32>, vector<32x32xf32>, vector<16x32xf32> -> vector<16x32xf32>
    %11 = vector.shape_cast %2 : vector<32xf32> to vector<1x32xf32>
    %12 = vector.broadcast %11 : vector<1x32xf32> to vector<16x32xf32>
    %13 = arith.addf %10, %12 : vector<16x32xf32>
    %14 = arith.mulf %13, %13 : vector<16x32xf32>
    %cst_10 = arith.constant dense<0.000000e+00> : vector<16xf32>
    %15 = vector.multi_reduction <add>, %14, %cst_10 [1] : vector<16x32xf32> to vector<16xf32>
    %16 = vector.shape_cast %15 : vector<16xf32> to vector<16x1xf32>
    %cst_11 = arith.constant 1.000000e-24 : f32
    %17 = vector.broadcast %cst_11 : f32 to vector<16x1xf32>
    %18 = arith.maximumf %16, %17 : vector<16x1xf32>
    %19 = math.rsqrt %18 : vector<16x1xf32>
    %20 = vector.broadcast %19 : vector<16x1xf32> to vector<16x32xf32>
    %21 = arith.mulf %13, %20 : vector<16x32xf32>
    %cst_12 = arith.constant 0.000000e+00 : f32
    %22 = vector.broadcast %cst_12 : f32 to vector<16x32xf32>
    %23 = arith.maximumf %21, %22 : vector<16x32xf32>
    %cst_13 = arith.constant dense<0.000000e+00> : vector<16xf32>
    %24 = vector.multi_reduction <add>, %23, %cst_13 [1] : vector<16x32xf32> to vector<16xf32>
    %25 = vector.shape_cast %24 : vector<16xf32> to vector<16x1xf32>
    %c1 = arith.constant 1 : index
    %c0_14 = arith.constant 0 : index
    %c0_15 = arith.constant 0 : index
    %26 = vector.load %arg1[%c1, %c0_14, %c0_15] : memref<2x16x16xf32, #tpu.memory_space<vmem>>, vector<1x16x16xf32>
    %27 = vector.shape_cast %26 : vector<1x16x16xf32> to vector<16x16xf32>
    %28 = arith.truncf %27 : vector<16x16xf32> to vector<16x16xbf16>
    %c1_16 = arith.constant 1 : index
    %c0_17 = arith.constant 0 : index
    %c0_18 = arith.constant 0 : index
    %29 = vector.load %arg2[%c1_16, %c0_17, %c0_18] : memref<2x16x32xf32, #tpu.memory_space<vmem>>, vector<1x16x32xf32>
    %30 = vector.shape_cast %29 : vector<1x16x32xf32> to vector<16x32xf32>
    %31 = arith.truncf %30 : vector<16x32xf32> to vector<16x32xbf16>
    %cst_19 = arith.constant dense<0.000000e+00> : vector<16x32xf32>
    %32 = tpu.matmul %28, %31, %cst_19 {dimension_numbers = #tpu.dot_dimension_numbers<[1], [0], [0], [1], [0, 0, 1, 1], [], []>} : vector<16x16xbf16>, vector<16x32xbf16>, vector<16x32xf32> -> vector<16x32xf32>
    %cst_20 = arith.constant dense<0.000000e+00> : vector<16x32xf32>
    %33 = tpu.matmul %32, %0, %cst_20 {dimension_numbers = #tpu.dot_dimension_numbers<[1], [0], [0], [1], [0, 0, 1, 1], [], []>} : vector<16x32xf32>, vector<32x32xf32>, vector<16x32xf32> -> vector<16x32xf32>
    %34 = vector.shape_cast %2 : vector<32xf32> to vector<1x32xf32>
    %35 = vector.broadcast %34 : vector<1x32xf32> to vector<16x32xf32>
    %36 = arith.addf %33, %35 : vector<16x32xf32>
    %37 = arith.mulf %36, %36 : vector<16x32xf32>
    %cst_21 = arith.constant dense<0.000000e+00> : vector<16xf32>
    %38 = vector.multi_reduction <add>, %37, %cst_21 [1] : vector<16x32xf32> to vector<16xf32>
    %39 = vector.shape_cast %38 : vector<16xf32> to vector<16x1xf32>
    %cst_22 = arith.constant 1.000000e-24 : f32
    %40 = vector.broadcast %cst_22 : f32 to vector<16x1xf32>
    %41 = arith.maximumf %39, %40 : vector<16x1xf32>
    %42 = math.rsqrt %41 : vector<16x1xf32>
    %43 = vector.broadcast %42 : vector<16x1xf32> to vector<16x32xf32>
    %44 = arith.mulf %36, %43 : vector<16x32xf32>
    %cst_23 = arith.constant 0.000000e+00 : f32
    %45 = vector.broadcast %cst_23 : f32 to vector<16x32xf32>
    %46 = arith.maximumf %44, %45 : vector<16x32xf32>
    %cst_24 = arith.constant dense<0.000000e+00> : vector<16xf32>
    %47 = vector.multi_reduction <add>, %46, %cst_24 [1] : vector<16x32xf32> to vector<16xf32>
    %48 = vector.shape_cast %47 : vector<16xf32> to vector<16x1xf32>
    %49 = arith.addf %25, %48 : vector<16x1xf32>
    %cst_25 = arith.constant 6.400000e+01 : f32
    %50 = vector.broadcast %cst_25 : f32 to vector<16x1xf32>
    %51 = arith.divf %49, %50 : vector<16x1xf32>
    %52 = vector.broadcast %51 : vector<16x1xf32> to vector<16x32xf32>
    %53 = arith.subf %23, %52 : vector<16x32xf32>
    %54 = arith.mulf %53, %53 : vector<16x32xf32>
    %cst_26 = arith.constant dense<0.000000e+00> : vector<16xf32>
    %55 = vector.multi_reduction <add>, %54, %cst_26 [1] : vector<16x32xf32> to vector<16xf32>
    %56 = vector.shape_cast %55 : vector<16xf32> to vector<16x1xf32>
    %57 = vector.broadcast %51 : vector<16x1xf32> to vector<16x32xf32>
    %58 = arith.subf %46, %57 : vector<16x32xf32>
    %59 = arith.mulf %58, %58 : vector<16x32xf32>
    %cst_27 = arith.constant dense<0.000000e+00> : vector<16xf32>
    %60 = vector.multi_reduction <add>, %59, %cst_27 [1] : vector<16x32xf32> to vector<16xf32>
    %61 = vector.shape_cast %60 : vector<16xf32> to vector<16x1xf32>
    %62 = arith.addf %56, %61 : vector<16x1xf32>
    %cst_28 = arith.constant 6.400000e+01 : f32
    %63 = vector.broadcast %cst_28 : f32 to vector<16x1xf32>
    %64 = arith.divf %62, %63 : vector<16x1xf32>
    %cst_29 = arith.constant 9.99999974E-6 : f32
    %65 = vector.broadcast %cst_29 : f32 to vector<16x1xf32>
    %66 = arith.addf %64, %65 : vector<16x1xf32>
    %67 = math.rsqrt %66 : vector<16x1xf32>
    %68 = vector.broadcast %51 : vector<16x1xf32> to vector<16x32xf32>
    %69 = arith.subf %23, %68 : vector<16x32xf32>
    %70 = vector.broadcast %67 : vector<16x1xf32> to vector<16x32xf32>
    %71 = arith.mulf %69, %70 : vector<16x32xf32>
    %c0_30 = arith.constant 0 : index
    %c0_31 = arith.constant 0 : index
    %c0_32 = arith.constant 0 : index
    %72 = vector.load %arg5[%c0_30, %c0_31, %c0_32] : memref<2x16x32xf32, #tpu.memory_space<vmem>>, vector<1x16x32xf32>
    %73 = vector.shape_cast %72 : vector<1x16x32xf32> to vector<16x32xf32>
    %74 = vector.shape_cast %71 : vector<16x32xf32> to vector<1x16x32xf32>
    tpu.vector_store %arg5[%c0_30, %c0_31, %c0_32], %74 {strides = array<i32>} : memref<2x16x32xf32, #tpu.memory_space<vmem>>, vector<1x16x32xf32>,
    %75 = vector.broadcast %51 : vector<16x1xf32> to vector<16x32xf32>
    %76 = arith.subf %46, %75 : vector<16x32xf32>
    %77 = vector.broadcast %67 : vector<16x1xf32> to vector<16x32xf32>
    %78 = arith.mulf %76, %77 : vector<16x32xf32>
    %c1_33 = arith.constant 1 : index
    %c0_34 = arith.constant 0 : index
    %c0_35 = arith.constant 0 : index
    %79 = vector.load %arg5[%c1_33, %c0_34, %c0_35] : memref<2x16x32xf32, #tpu.memory_space<vmem>>, vector<1x16x32xf32>
    %80 = vector.shape_cast %79 : vector<1x16x32xf32> to vector<16x32xf32>
    %81 = vector.shape_cast %78 : vector<16x32xf32> to vector<1x16x32xf32>
    tpu.vector_store %arg5[%c1_33, %c0_34, %c0_35], %81 {strides = array<i32>} : memref<2x16x32xf32, #tpu.memory_space<vmem>>, vector<1x16x32xf32>,
    return
  }
  func.func @transform_0(%arg0: i32) -> (i32, i32, i32) {
    %c0_i32 = arith.constant 0 : i32
    %c0_i32_0 = arith.constant 0 : i32
    %c0_i32_1 = arith.constant 0 : i32
    return %c0_i32, %arg0, %c0_i32_0 : i32, i32, i32
  }
  func.func @transform_1(%arg0: i32) -> (i32, i32, i32) {
    %c0_i32 = arith.constant 0 : i32
    %c0_i32_0 = arith.constant 0 : i32
    %c0_i32_1 = arith.constant 0 : i32
    %c0_i32_2 = arith.constant 0 : i32
    return %c0_i32, %c0_i32_0, %c0_i32_1 : i32, i32, i32
  }
  func.func @transform_2(%arg0: i32) -> (i32, i32) {
    %c0_i32 = arith.constant 0 : i32
    %c0_i32_0 = arith.constant 0 : i32
    %c0_i32_1 = arith.constant 0 : i32
    return %c0_i32, %c0_i32_0 : i32, i32
  }
  func.func @transform_3(%arg0: i32) -> (i32, i32) {
    %c0_i32 = arith.constant 0 : i32
    %c0_i32_0 = arith.constant 0 : i32
    %c0_i32_1 = arith.constant 0 : i32
    return %c0_i32, %c0_i32_0 : i32, i32
  }
  func.func @transform_4(%arg0: i32) -> (i32, i32, i32) {
    %c0_i32 = arith.constant 0 : i32
    %c0_i32_0 = arith.constant 0 : i32
    %c0_i32_1 = arith.constant 0 : i32
    return %c0_i32, %arg0, %c0_i32_0 : i32, i32, i32
  }
}

module attributes {stable_mosaic.version = 11 : i64} {
  func.func @_conv_bn_kernel(%arg0: i32, %arg1: memref<2x16x16xf32, #tpu.memory_space<vmem>>, %arg2: memref<2x16x8xf32, #tpu.memory_space<vmem>>, %arg3: memref<8x32xf32, #tpu.memory_space<vmem>>, %arg4: memref<1x32xf32, #tpu.memory_space<vmem>>, %arg5: memref<2x16x32xf32, #tpu.memory_space<vmem>>) attributes {dimension_semantics = [#tpu.dimension_semantics<parallel>], iteration_bounds = array<i64: 1>, scalar_prefetch = 0 : i64, scratch_operands = 0 : i64, tpu.core_type = #tpu.core_type<tc>, window_params = [{transform_indices = @transform_0, window_bounds = array<i64: 2, 16, 16>}, {pipeline_mode = #tpu.pipeline_mode<synchronous>, transform_indices = @transform_1, window_bounds = array<i64: 2, 16, 8>}, {pipeline_mode = #tpu.pipeline_mode<synchronous>, transform_indices = @transform_2, window_bounds = array<i64: 8, 32>}, {pipeline_mode = #tpu.pipeline_mode<synchronous>, transform_indices = @transform_3, window_bounds = array<i64: 1, 32>}, {transform_indices = @transform_4, window_bounds = array<i64: 2, 16, 32>}]} {
    %c0 = arith.constant 0 : index
    %c0_0 = arith.constant 0 : index
    %0 = vector.load %arg3[%c0, %c0_0] : memref<8x32xf32, #tpu.memory_space<vmem>>, vector<8x32xf32>
    %c0_1 = arith.constant 0 : index
    %c0_2 = arith.constant 0 : index
    %1 = vector.load %arg4[%c0_1, %c0_2] : memref<1x32xf32, #tpu.memory_space<vmem>>, vector<1x32xf32>
    %2 = vector.shape_cast %1 : vector<1x32xf32> to vector<32xf32>
    %c0_3 = arith.constant 0 : index
    %c0_4 = arith.constant 0 : index
    %c0_5 = arith.constant 0 : index
    %3 = vector.load %arg1[%c0_3, %c0_4, %c0_5] : memref<2x16x16xf32, #tpu.memory_space<vmem>>, vector<1x16x16xf32>
    %4 = vector.shape_cast %3 : vector<1x16x16xf32> to vector<16x16xf32>
    %5 = arith.truncf %4 : vector<16x16xf32> to vector<16x16xbf16>
    %c0_6 = arith.constant 0 : index
    %c0_7 = arith.constant 0 : index
    %c0_8 = arith.constant 0 : index
    %6 = vector.load %arg2[%c0_6, %c0_7, %c0_8] : memref<2x16x8xf32, #tpu.memory_space<vmem>>, vector<1x16x8xf32>
    %7 = vector.shape_cast %6 : vector<1x16x8xf32> to vector<16x8xf32>
    %8 = arith.truncf %7 : vector<16x8xf32> to vector<16x8xbf16>
    %cst = arith.constant dense<0.000000e+00> : vector<16x8xf32>
    %9 = tpu.matmul %5, %8, %cst {dimension_numbers = #tpu.dot_dimension_numbers<[1], [0], [0], [1], [0, 0, 1, 1], [], []>} : vector<16x16xbf16>, vector<16x8xbf16>, vector<16x8xf32> -> vector<16x8xf32>
    %cst_9 = arith.constant dense<0.000000e+00> : vector<16x32xf32>
    %10 = tpu.matmul %9, %0, %cst_9 {dimension_numbers = #tpu.dot_dimension_numbers<[1], [0], [0], [1], [0, 0, 1, 1], [], []>} : vector<16x8xf32>, vector<8x32xf32>, vector<16x32xf32> -> vector<16x32xf32>
    %11 = vector.shape_cast %2 : vector<32xf32> to vector<1x32xf32>
    %12 = vector.broadcast %11 : vector<1x32xf32> to vector<16x32xf32>
    %13 = arith.addf %10, %12 : vector<16x32xf32>
    %14 = arith.mulf %13, %13 : vector<16x32xf32>
    %cst_10 = arith.constant dense<0.000000e+00> : vector<16xf32>
    %15 = vector.multi_reduction <add>, %14, %cst_10 [1] : vector<16x32xf32> to vector<16xf32>
    %16 = vector.shape_cast %15 : vector<16xf32> to vector<16x1xf32>
    %cst_11 = arith.constant 1.000000e-24 : f32
    %17 = vector.broadcast %cst_11 : f32 to vector<16x1xf32>
    %18 = arith.maximumf %16, %17 : vector<16x1xf32>
    %19 = math.rsqrt %18 : vector<16x1xf32>
    %20 = vector.broadcast %19 : vector<16x1xf32> to vector<16x32xf32>
    %21 = arith.mulf %13, %20 : vector<16x32xf32>
    %cst_12 = arith.constant 0.000000e+00 : f32
    %22 = vector.broadcast %cst_12 : f32 to vector<16x32xf32>
    %23 = arith.maximumf %21, %22 : vector<16x32xf32>
    %cst_13 = arith.constant dense<0.000000e+00> : vector<16xf32>
    %24 = vector.multi_reduction <add>, %23, %cst_13 [1] : vector<16x32xf32> to vector<16xf32>
    %25 = vector.shape_cast %24 : vector<16xf32> to vector<16x1xf32>
    %c1 = arith.constant 1 : index
    %c0_14 = arith.constant 0 : index
    %c0_15 = arith.constant 0 : index
    %26 = vector.load %arg1[%c1, %c0_14, %c0_15] : memref<2x16x16xf32, #tpu.memory_space<vmem>>, vector<1x16x16xf32>
    %27 = vector.shape_cast %26 : vector<1x16x16xf32> to vector<16x16xf32>
    %28 = arith.truncf %27 : vector<16x16xf32> to vector<16x16xbf16>
    %c1_16 = arith.constant 1 : index
    %c0_17 = arith.constant 0 : index
    %c0_18 = arith.constant 0 : index
    %29 = vector.load %arg2[%c1_16, %c0_17, %c0_18] : memref<2x16x8xf32, #tpu.memory_space<vmem>>, vector<1x16x8xf32>
    %30 = vector.shape_cast %29 : vector<1x16x8xf32> to vector<16x8xf32>
    %31 = arith.truncf %30 : vector<16x8xf32> to vector<16x8xbf16>
    %cst_19 = arith.constant dense<0.000000e+00> : vector<16x8xf32>
    %32 = tpu.matmul %28, %31, %cst_19 {dimension_numbers = #tpu.dot_dimension_numbers<[1], [0], [0], [1], [0, 0, 1, 1], [], []>} : vector<16x16xbf16>, vector<16x8xbf16>, vector<16x8xf32> -> vector<16x8xf32>
    %cst_20 = arith.constant dense<0.000000e+00> : vector<16x32xf32>
    %33 = tpu.matmul %32, %0, %cst_20 {dimension_numbers = #tpu.dot_dimension_numbers<[1], [0], [0], [1], [0, 0, 1, 1], [], []>} : vector<16x8xf32>, vector<8x32xf32>, vector<16x32xf32> -> vector<16x32xf32>
    %34 = vector.shape_cast %2 : vector<32xf32> to vector<1x32xf32>
    %35 = vector.broadcast %34 : vector<1x32xf32> to vector<16x32xf32>
    %36 = arith.addf %33, %35 : vector<16x32xf32>
    %37 = arith.mulf %36, %36 : vector<16x32xf32>
    %cst_21 = arith.constant dense<0.000000e+00> : vector<16xf32>
    %38 = vector.multi_reduction <add>, %37, %cst_21 [1] : vector<16x32xf32> to vector<16xf32>
    %39 = vector.shape_cast %38 : vector<16xf32> to vector<16x1xf32>
    %cst_22 = arith.constant 1.000000e-24 : f32
    %40 = vector.broadcast %cst_22 : f32 to vector<16x1xf32>
    %41 = arith.maximumf %39, %40 : vector<16x1xf32>
    %42 = math.rsqrt %41 : vector<16x1xf32>
    %43 = vector.broadcast %42 : vector<16x1xf32> to vector<16x32xf32>
    %44 = arith.mulf %36, %43 : vector<16x32xf32>
    %cst_23 = arith.constant 0.000000e+00 : f32
    %45 = vector.broadcast %cst_23 : f32 to vector<16x32xf32>
    %46 = arith.maximumf %44, %45 : vector<16x32xf32>
    %cst_24 = arith.constant dense<0.000000e+00> : vector<16xf32>
    %47 = vector.multi_reduction <add>, %46, %cst_24 [1] : vector<16x32xf32> to vector<16xf32>
    %48 = vector.shape_cast %47 : vector<16xf32> to vector<16x1xf32>
    %49 = arith.addf %25, %48 : vector<16x1xf32>
    %cst_25 = arith.constant 6.400000e+01 : f32
    %50 = vector.broadcast %cst_25 : f32 to vector<16x1xf32>
    %51 = arith.divf %49, %50 : vector<16x1xf32>
    %52 = vector.broadcast %51 : vector<16x1xf32> to vector<16x32xf32>
    %53 = arith.subf %23, %52 : vector<16x32xf32>
    %54 = arith.mulf %53, %53 : vector<16x32xf32>
    %cst_26 = arith.constant dense<0.000000e+00> : vector<16xf32>
    %55 = vector.multi_reduction <add>, %54, %cst_26 [1] : vector<16x32xf32> to vector<16xf32>
    %56 = vector.shape_cast %55 : vector<16xf32> to vector<16x1xf32>
    %57 = vector.broadcast %51 : vector<16x1xf32> to vector<16x32xf32>
    %58 = arith.subf %46, %57 : vector<16x32xf32>
    %59 = arith.mulf %58, %58 : vector<16x32xf32>
    %cst_27 = arith.constant dense<0.000000e+00> : vector<16xf32>
    %60 = vector.multi_reduction <add>, %59, %cst_27 [1] : vector<16x32xf32> to vector<16xf32>
    %61 = vector.shape_cast %60 : vector<16xf32> to vector<16x1xf32>
    %62 = arith.addf %56, %61 : vector<16x1xf32>
    %cst_28 = arith.constant 6.400000e+01 : f32
    %63 = vector.broadcast %cst_28 : f32 to vector<16x1xf32>
    %64 = arith.divf %62, %63 : vector<16x1xf32>
    %cst_29 = arith.constant 9.99999974E-6 : f32
    %65 = vector.broadcast %cst_29 : f32 to vector<16x1xf32>
    %66 = arith.addf %64, %65 : vector<16x1xf32>
    %67 = math.rsqrt %66 : vector<16x1xf32>
    %68 = vector.broadcast %51 : vector<16x1xf32> to vector<16x32xf32>
    %69 = arith.subf %23, %68 : vector<16x32xf32>
    %70 = vector.broadcast %67 : vector<16x1xf32> to vector<16x32xf32>
    %71 = arith.mulf %69, %70 : vector<16x32xf32>
    %c0_30 = arith.constant 0 : index
    %c0_31 = arith.constant 0 : index
    %c0_32 = arith.constant 0 : index
    %72 = vector.load %arg5[%c0_30, %c0_31, %c0_32] : memref<2x16x32xf32, #tpu.memory_space<vmem>>, vector<1x16x32xf32>
    %73 = vector.shape_cast %72 : vector<1x16x32xf32> to vector<16x32xf32>
    %74 = vector.shape_cast %71 : vector<16x32xf32> to vector<1x16x32xf32>
    tpu.vector_store %arg5[%c0_30, %c0_31, %c0_32], %74 {strides = array<i32>} : memref<2x16x32xf32, #tpu.memory_space<vmem>>, vector<1x16x32xf32>,
    %75 = vector.broadcast %51 : vector<16x1xf32> to vector<16x32xf32>
    %76 = arith.subf %46, %75 : vector<16x32xf32>
    %77 = vector.broadcast %67 : vector<16x1xf32> to vector<16x32xf32>
    %78 = arith.mulf %76, %77 : vector<16x32xf32>
    %c1_33 = arith.constant 1 : index
    %c0_34 = arith.constant 0 : index
    %c0_35 = arith.constant 0 : index
    %79 = vector.load %arg5[%c1_33, %c0_34, %c0_35] : memref<2x16x32xf32, #tpu.memory_space<vmem>>, vector<1x16x32xf32>
    %80 = vector.shape_cast %79 : vector<1x16x32xf32> to vector<16x32xf32>
    %81 = vector.shape_cast %78 : vector<16x32xf32> to vector<1x16x32xf32>
    tpu.vector_store %arg5[%c1_33, %c0_34, %c0_35], %81 {strides = array<i32>} : memref<2x16x32xf32, #tpu.memory_space<vmem>>, vector<1x16x32xf32>,
    return
  }
  func.func @transform_0(%arg0: i32) -> (i32, i32, i32) {
    %c0_i32 = arith.constant 0 : i32
    %c0_i32_0 = arith.constant 0 : i32
    %c0_i32_1 = arith.constant 0 : i32
    return %c0_i32, %arg0, %c0_i32_0 : i32, i32, i32
  }
  func.func @transform_1(%arg0: i32) -> (i32, i32, i32) {
    %c0_i32 = arith.constant 0 : i32
    %c0_i32_0 = arith.constant 0 : i32
    %c0_i32_1 = arith.constant 0 : i32
    %c0_i32_2 = arith.constant 0 : i32
    return %c0_i32, %c0_i32_0, %c0_i32_1 : i32, i32, i32
  }
  func.func @transform_2(%arg0: i32) -> (i32, i32) {
    %c0_i32 = arith.constant 0 : i32
    %c0_i32_0 = arith.constant 0 : i32
    %c0_i32_1 = arith.constant 0 : i32
    return %c0_i32, %c0_i32_0 : i32, i32
  }
  func.func @transform_3(%arg0: i32) -> (i32, i32) {
    %c0_i32 = arith.constant 0 : i32
    %c0_i32_0 = arith.constant 0 : i32
    %c0_i32_1 = arith.constant 0 : i32
    return %c0_i32, %c0_i32_0 : i32, i32
  }
  func.func @transform_4(%arg0: i32) -> (i32, i32, i32) {
    %c0_i32 = arith.constant 0 : i32
    %c0_i32_0 = arith.constant 0 : i32
    %c0_i32_1 = arith.constant 0 : i32
    return %c0_i32, %arg0, %c0_i32_0 : i32, i32, i32
  }
}

module attributes {stable_mosaic.version = 11 : i64} {
  func.func @_sgraph_kernel(%arg0: i32, %arg1: i32, %arg2: memref<1x16x8xf32, #tpu.memory_space<vmem>>, %arg3: memref<1x16x8xf32, #tpu.memory_space<vmem>>, %arg4: memref<8x32xf32, #tpu.memory_space<vmem>>, %arg5: memref<1x32xf32, #tpu.memory_space<vmem>>, %arg6: memref<1x16x16xf32, #tpu.memory_space<vmem>>) attributes {dimension_semantics = [#tpu.dimension_semantics<parallel>, #tpu.dimension_semantics<parallel>], iteration_bounds = array<i64: 2, 1>, scalar_prefetch = 0 : i64, scratch_operands = 0 : i64, tpu.core_type = #tpu.core_type<tc>, window_params = [{transform_indices = @transform_0, window_bounds = array<i64: 1, 16, 8>}, {transform_indices = @transform_1, window_bounds = array<i64: 1, 16, 8>}, {pipeline_mode = #tpu.pipeline_mode<synchronous>, transform_indices = @transform_2, window_bounds = array<i64: 8, 32>}, {pipeline_mode = #tpu.pipeline_mode<synchronous>, transform_indices = @transform_3, window_bounds = array<i64: 1, 32>}, {transform_indices = @transform_4, window_bounds = array<i64: 1, 16, 16>}]} {
    %c0 = arith.constant 0 : index
    %c0_0 = arith.constant 0 : index
    %c0_1 = arith.constant 0 : index
    %0 = vector.load %arg2[%c0, %c0_0, %c0_1] : memref<1x16x8xf32, #tpu.memory_space<vmem>>, vector<1x16x8xf32>
    %1 = vector.shape_cast %0 : vector<1x16x8xf32> to vector<16x8xf32>
    %c0_2 = arith.constant 0 : index
    %c0_3 = arith.constant 0 : index
    %c0_4 = arith.constant 0 : index
    %2 = vector.load %arg3[%c0_2, %c0_3, %c0_4] : memref<1x16x8xf32, #tpu.memory_space<vmem>>, vector<1x16x8xf32>
    %3 = vector.shape_cast %2 : vector<1x16x8xf32> to vector<16x8xf32>
    %c0_5 = arith.constant 0 : index
    %c0_6 = arith.constant 0 : index
    %4 = vector.load %arg4[%c0_5, %c0_6] : memref<8x32xf32, #tpu.memory_space<vmem>>, vector<8x32xf32>
    %c0_7 = arith.constant 0 : index
    %c0_8 = arith.constant 0 : index
    %5 = vector.load %arg5[%c0_7, %c0_8] : memref<1x32xf32, #tpu.memory_space<vmem>>, vector<1x32xf32>
    %6 = vector.shape_cast %5 : vector<1x32xf32> to vector<1x1x32xf32>
    %cst = arith.constant dense<0.000000e+00> : vector<16x32xf32>
    %7 = tpu.matmul %1, %4, %cst {dimension_numbers = #tpu.dot_dimension_numbers<[1], [0], [0], [1], [0, 0, 1, 1], [], []>} : vector<16x8xf32>, vector<8x32xf32>, vector<16x32xf32> -> vector<16x32xf32>
    %cst_9 = arith.constant dense<0.000000e+00> : vector<16x32xf32>
    %8 = tpu.matmul %3, %4, %cst_9 {dimension_numbers = #tpu.dot_dimension_numbers<[1], [0], [0], [1], [0, 0, 1, 1], [], []>} : vector<16x8xf32>, vector<8x32xf32>, vector<16x32xf32> -> vector<16x32xf32>
    %9 = vector.shape_cast %7 : vector<16x32xf32> to vector<16x1x32xf32>
    %10 = vector.shape_cast %8 : vector<16x32xf32> to vector<1x16x32xf32>
    %11 = vector.broadcast %9 : vector<16x1x32xf32> to vector<16x16x32xf32>
    %12 = vector.broadcast %10 : vector<1x16x32xf32> to vector<16x16x32xf32>
    %13 = arith.subf %11, %12 : vector<16x16x32xf32>
    %14 = math.absf %13 : vector<16x16x32xf32>
    %15 = vector.broadcast %6 : vector<1x1x32xf32> to vector<16x16x32xf32>
    %16 = arith.mulf %14, %15 : vector<16x16x32xf32>
    %cst_10 = arith.constant dense<0.000000e+00> : vector<16x16xf32>
    %17 = vector.multi_reduction <add>, %16, %cst_10 [2] : vector<16x16x32xf32> to vector<16x16xf32>
    %cst_11 = arith.constant 0.000000e+00 : f32
    %18 = vector.broadcast %cst_11 : f32 to vector<16x16xf32>
    %19 = arith.maximumf %17, %18 : vector<16x16xf32>
    %cst_12 = arith.constant dense<0xFF800000> : vector<16xf32>
    %20 = vector.multi_reduction <maximumf>, %19, %cst_12 [1] : vector<16x16xf32> to vector<16xf32>
    %21 = vector.shape_cast %20 : vector<16xf32> to vector<16x1xf32>
    %22 = vector.broadcast %21 : vector<16x1xf32> to vector<16x16xf32>
    %23 = arith.subf %19, %22 : vector<16x16xf32>
    %24 = math.exp %23 : vector<16x16xf32>
    %cst_13 = arith.constant dense<0.000000e+00> : vector<16xf32>
    %25 = vector.multi_reduction <add>, %24, %cst_13 [1] : vector<16x16xf32> to vector<16xf32>
    %26 = vector.shape_cast %25 : vector<16xf32> to vector<16x1xf32>
    %27 = tpu.reciprocal %26 {approx = true} : vector<16x1xf32> -> vector<16x1xf32>
    %28 = vector.broadcast %27 : vector<16x1xf32> to vector<16x16xf32>
    %29 = arith.mulf %24, %28 : vector<16x16xf32>
    %c0_14 = arith.constant 0 : index
    %c0_15 = arith.constant 0 : index
    %c0_16 = arith.constant 0 : index
    %30 = vector.load %arg6[%c0_14, %c0_15, %c0_16] : memref<1x16x16xf32, #tpu.memory_space<vmem>>, vector<1x16x16xf32>
    %31 = vector.shape_cast %30 : vector<1x16x16xf32> to vector<16x16xf32>
    %32 = vector.shape_cast %29 : vector<16x16xf32> to vector<1x16x16xf32>
    tpu.vector_store %arg6[%c0_14, %c0_15, %c0_16], %32 {strides = array<i32>} : memref<1x16x16xf32, #tpu.memory_space<vmem>>, vector<1x16x16xf32>,
    return
  }
  func.func @transform_0(%arg0: i32, %arg1: i32) -> (i32, i32, i32) {
    %c0_i32 = arith.constant 0 : i32
    %c0_i32_0 = arith.constant 0 : i32
    return %arg0, %arg1, %c0_i32 : i32, i32, i32
  }
  func.func @transform_1(%arg0: i32, %arg1: i32) -> (i32, i32, i32) {
    %c0_i32 = arith.constant 0 : i32
    %c0_i32_0 = arith.constant 0 : i32
    %c0_i32_1 = arith.constant 0 : i32
    return %arg0, %c0_i32, %c0_i32_0 : i32, i32, i32
  }
  func.func @transform_2(%arg0: i32, %arg1: i32) -> (i32, i32) {
    %c0_i32 = arith.constant 0 : i32
    %c0_i32_0 = arith.constant 0 : i32
    %c0_i32_1 = arith.constant 0 : i32
    return %c0_i32, %c0_i32_0 : i32, i32
  }
  func.func @transform_3(%arg0: i32, %arg1: i32) -> (i32, i32) {
    %c0_i32 = arith.constant 0 : i32
    %c0_i32_0 = arith.constant 0 : i32
    %c0_i32_1 = arith.constant 0 : i32
    return %c0_i32, %c0_i32_0 : i32, i32
  }
  func.func @transform_4(%arg0: i32, %arg1: i32) -> (i32, i32, i32) {
    %c0_i32 = arith.constant 0 : i32
    %c0_i32_0 = arith.constant 0 : i32
    return %arg0, %arg1, %c0_i32 : i32, i32, i32
  }
}

module attributes {stable_mosaic.version = 11 : i64} {
  func.func @_conv_last_pred_kernel(%arg0: i32, %arg1: memref<2x16x16xf32, #tpu.memory_space<vmem>>, %arg2: memref<2x16x32xf32, #tpu.memory_space<vmem>>, %arg3: memref<32x32xf32, #tpu.memory_space<vmem>>, %arg4: memref<1x32xf32, #tpu.memory_space<vmem>>, %arg5: memref<2x16x32xf32, #tpu.memory_space<vmem>>, %arg6: memref<2x16x32xf32, #tpu.memory_space<vmem>>, %arg7: memref<32x8xf32, #tpu.memory_space<vmem>>, %arg8: memref<32x8xf32, #tpu.memory_space<vmem>>, %arg9: memref<32x8xf32, #tpu.memory_space<vmem>>, %arg10: memref<1x8xf32, #tpu.memory_space<vmem>>, %arg11: memref<2x16x8xf32, #tpu.memory_space<vmem>>) attributes {dimension_semantics = [#tpu.dimension_semantics<parallel>], iteration_bounds = array<i64: 1>, scalar_prefetch = 0 : i64, scratch_operands = 0 : i64, tpu.core_type = #tpu.core_type<tc>, window_params = [{transform_indices = @transform_0, window_bounds = array<i64: 2, 16, 16>}, {pipeline_mode = #tpu.pipeline_mode<synchronous>, transform_indices = @transform_1, window_bounds = array<i64: 2, 16, 32>}, {pipeline_mode = #tpu.pipeline_mode<synchronous>, transform_indices = @transform_2, window_bounds = array<i64: 32, 32>}, {pipeline_mode = #tpu.pipeline_mode<synchronous>, transform_indices = @transform_3, window_bounds = array<i64: 1, 32>}, {transform_indices = @transform_4, window_bounds = array<i64: 2, 16, 32>}, {transform_indices = @transform_5, window_bounds = array<i64: 2, 16, 32>}, {pipeline_mode = #tpu.pipeline_mode<synchronous>, transform_indices = @transform_6, window_bounds = array<i64: 32, 8>}, {pipeline_mode = #tpu.pipeline_mode<synchronous>, transform_indices = @transform_7, window_bounds = array<i64: 32, 8>}, {pipeline_mode = #tpu.pipeline_mode<synchronous>, transform_indices = @transform_8, window_bounds = array<i64: 32, 8>}, {pipeline_mode = #tpu.pipeline_mode<synchronous>, transform_indices = @transform_9, window_bounds = array<i64: 1, 8>}, {transform_indices = @transform_10, window_bounds = array<i64: 2, 16, 8>}]} {
    %c0 = arith.constant 0 : index
    %c0_0 = arith.constant 0 : index
    %0 = vector.load %arg3[%c0, %c0_0] : memref<32x32xf32, #tpu.memory_space<vmem>>, vector<32x32xf32>
    %c0_1 = arith.constant 0 : index
    %c0_2 = arith.constant 0 : index
    %1 = vector.load %arg4[%c0_1, %c0_2] : memref<1x32xf32, #tpu.memory_space<vmem>>, vector<1x32xf32>
    %2 = vector.shape_cast %1 : vector<1x32xf32> to vector<32xf32>
    %c0_3 = arith.constant 0 : index
    %c0_4 = arith.constant 0 : index
    %3 = vector.load %arg7[%c0_3, %c0_4] : memref<32x8xf32, #tpu.memory_space<vmem>>, vector<32x8xf32>
    %c0_5 = arith.constant 0 : index
    %c0_6 = arith.constant 0 : index
    %4 = vector.load %arg8[%c0_5, %c0_6] : memref<32x8xf32, #tpu.memory_space<vmem>>, vector<32x8xf32>
    %c0_7 = arith.constant 0 : index
    %c0_8 = arith.constant 0 : index
    %5 = vector.load %arg9[%c0_7, %c0_8] : memref<32x8xf32, #tpu.memory_space<vmem>>, vector<32x8xf32>
    %c0_9 = arith.constant 0 : index
    %c0_10 = arith.constant 0 : index
    %6 = vector.load %arg10[%c0_9, %c0_10] : memref<1x8xf32, #tpu.memory_space<vmem>>, vector<1x8xf32>
    %7 = vector.shape_cast %6 : vector<1x8xf32> to vector<8xf32>
    %c0_11 = arith.constant 0 : index
    %c0_12 = arith.constant 0 : index
    %c0_13 = arith.constant 0 : index
    %8 = vector.load %arg1[%c0_11, %c0_12, %c0_13] : memref<2x16x16xf32, #tpu.memory_space<vmem>>, vector<1x16x16xf32>
    %9 = vector.shape_cast %8 : vector<1x16x16xf32> to vector<16x16xf32>
    %10 = arith.truncf %9 : vector<16x16xf32> to vector<16x16xbf16>
    %c0_14 = arith.constant 0 : index
    %c0_15 = arith.constant 0 : index
    %c0_16 = arith.constant 0 : index
    %11 = vector.load %arg2[%c0_14, %c0_15, %c0_16] : memref<2x16x32xf32, #tpu.memory_space<vmem>>, vector<1x16x32xf32>
    %12 = vector.shape_cast %11 : vector<1x16x32xf32> to vector<16x32xf32>
    %13 = arith.truncf %12 : vector<16x32xf32> to vector<16x32xbf16>
    %cst = arith.constant dense<0.000000e+00> : vector<16x32xf32>
    %14 = tpu.matmul %10, %13, %cst {dimension_numbers = #tpu.dot_dimension_numbers<[1], [0], [0], [1], [0, 0, 1, 1], [], []>} : vector<16x16xbf16>, vector<16x32xbf16>, vector<16x32xf32> -> vector<16x32xf32>
    %cst_17 = arith.constant dense<0.000000e+00> : vector<16x32xf32>
    %15 = tpu.matmul %14, %0, %cst_17 {dimension_numbers = #tpu.dot_dimension_numbers<[1], [0], [0], [1], [0, 0, 1, 1], [], []>} : vector<16x32xf32>, vector<32x32xf32>, vector<16x32xf32> -> vector<16x32xf32>
    %16 = vector.shape_cast %2 : vector<32xf32> to vector<1x32xf32>
    %17 = vector.broadcast %16 : vector<1x32xf32> to vector<16x32xf32>
    %18 = arith.addf %15, %17 : vector<16x32xf32>
    %19 = arith.mulf %18, %18 : vector<16x32xf32>
    %cst_18 = arith.constant dense<0.000000e+00> : vector<16xf32>
    %20 = vector.multi_reduction <add>, %19, %cst_18 [1] : vector<16x32xf32> to vector<16xf32>
    %21 = vector.shape_cast %20 : vector<16xf32> to vector<16x1xf32>
    %cst_19 = arith.constant 1.000000e-24 : f32
    %22 = vector.broadcast %cst_19 : f32 to vector<16x1xf32>
    %23 = arith.maximumf %21, %22 : vector<16x1xf32>
    %24 = math.rsqrt %23 : vector<16x1xf32>
    %25 = vector.broadcast %24 : vector<16x1xf32> to vector<16x32xf32>
    %26 = arith.mulf %18, %25 : vector<16x32xf32>
    %c0_20 = arith.constant 0 : index
    %c0_21 = arith.constant 0 : index
    %c0_22 = arith.constant 0 : index
    %27 = vector.load %arg5[%c0_20, %c0_21, %c0_22] : memref<2x16x32xf32, #tpu.memory_space<vmem>>, vector<1x16x32xf32>
    %28 = vector.shape_cast %27 : vector<1x16x32xf32> to vector<16x32xf32>
    %cst_23 = arith.constant dense<0.000000e+00> : vector<16x8xf32>
    %29 = tpu.matmul %28, %3, %cst_23 {dimension_numbers = #tpu.dot_dimension_numbers<[1], [0], [0], [1], [0, 0, 1, 1], [], []>} : vector<16x32xf32>, vector<32x8xf32>, vector<16x8xf32> -> vector<16x8xf32>
    %c0_24 = arith.constant 0 : index
    %c0_25 = arith.constant 0 : index
    %c0_26 = arith.constant 0 : index
    %30 = vector.load %arg6[%c0_24, %c0_25, %c0_26] : memref<2x16x32xf32, #tpu.memory_space<vmem>>, vector<1x16x32xf32>
    %31 = vector.shape_cast %30 : vector<1x16x32xf32> to vector<16x32xf32>
    %cst_27 = arith.constant dense<0.000000e+00> : vector<16x8xf32>
    %32 = tpu.matmul %31, %4, %cst_27 {dimension_numbers = #tpu.dot_dimension_numbers<[1], [0], [0], [1], [0, 0, 1, 1], [], []>} : vector<16x32xf32>, vector<32x8xf32>, vector<16x8xf32> -> vector<16x8xf32>
    %33 = arith.addf %29, %32 : vector<16x8xf32>
    %cst_28 = arith.constant dense<0.000000e+00> : vector<16x8xf32>
    %34 = tpu.matmul %26, %5, %cst_28 {dimension_numbers = #tpu.dot_dimension_numbers<[1], [0], [0], [1], [0, 0, 1, 1], [], []>} : vector<16x32xf32>, vector<32x8xf32>, vector<16x8xf32> -> vector<16x8xf32>
    %35 = arith.addf %33, %34 : vector<16x8xf32>
    %36 = vector.shape_cast %7 : vector<8xf32> to vector<1x8xf32>
    %37 = vector.broadcast %36 : vector<1x8xf32> to vector<16x8xf32>
    %38 = arith.addf %35, %37 : vector<16x8xf32>
    %c0_29 = arith.constant 0 : index
    %c0_30 = arith.constant 0 : index
    %c0_31 = arith.constant 0 : index
    %39 = vector.load %arg11[%c0_29, %c0_30, %c0_31] : memref<2x16x8xf32, #tpu.memory_space<vmem>>, vector<1x16x8xf32>
    %40 = vector.shape_cast %39 : vector<1x16x8xf32> to vector<16x8xf32>
    %41 = vector.shape_cast %38 : vector<16x8xf32> to vector<1x16x8xf32>
    tpu.vector_store %arg11[%c0_29, %c0_30, %c0_31], %41 {strides = array<i32>} : memref<2x16x8xf32, #tpu.memory_space<vmem>>, vector<1x16x8xf32>,
    %c1 = arith.constant 1 : index
    %c0_32 = arith.constant 0 : index
    %c0_33 = arith.constant 0 : index
    %42 = vector.load %arg1[%c1, %c0_32, %c0_33] : memref<2x16x16xf32, #tpu.memory_space<vmem>>, vector<1x16x16xf32>
    %43 = vector.shape_cast %42 : vector<1x16x16xf32> to vector<16x16xf32>
    %44 = arith.truncf %43 : vector<16x16xf32> to vector<16x16xbf16>
    %c1_34 = arith.constant 1 : index
    %c0_35 = arith.constant 0 : index
    %c0_36 = arith.constant 0 : index
    %45 = vector.load %arg2[%c1_34, %c0_35, %c0_36] : memref<2x16x32xf32, #tpu.memory_space<vmem>>, vector<1x16x32xf32>
    %46 = vector.shape_cast %45 : vector<1x16x32xf32> to vector<16x32xf32>
    %47 = arith.truncf %46 : vector<16x32xf32> to vector<16x32xbf16>
    %cst_37 = arith.constant dense<0.000000e+00> : vector<16x32xf32>
    %48 = tpu.matmul %44, %47, %cst_37 {dimension_numbers = #tpu.dot_dimension_numbers<[1], [0], [0], [1], [0, 0, 1, 1], [], []>} : vector<16x16xbf16>, vector<16x32xbf16>, vector<16x32xf32> -> vector<16x32xf32>
    %cst_38 = arith.constant dense<0.000000e+00> : vector<16x32xf32>
    %49 = tpu.matmul %48, %0, %cst_38 {dimension_numbers = #tpu.dot_dimension_numbers<[1], [0], [0], [1], [0, 0, 1, 1], [], []>} : vector<16x32xf32>, vector<32x32xf32>, vector<16x32xf32> -> vector<16x32xf32>
    %50 = vector.shape_cast %2 : vector<32xf32> to vector<1x32xf32>
    %51 = vector.broadcast %50 : vector<1x32xf32> to vector<16x32xf32>
    %52 = arith.addf %49, %51 : vector<16x32xf32>
    %53 = arith.mulf %52, %52 : vector<16x32xf32>
    %cst_39 = arith.constant dense<0.000000e+00> : vector<16xf32>
    %54 = vector.multi_reduction <add>, %53, %cst_39 [1] : vector<16x32xf32> to vector<16xf32>
    %55 = vector.shape_cast %54 : vector<16xf32> to vector<16x1xf32>
    %cst_40 = arith.constant 1.000000e-24 : f32
    %56 = vector.broadcast %cst_40 : f32 to vector<16x1xf32>
    %57 = arith.maximumf %55, %56 : vector<16x1xf32>
    %58 = math.rsqrt %57 : vector<16x1xf32>
    %59 = vector.broadcast %58 : vector<16x1xf32> to vector<16x32xf32>
    %60 = arith.mulf %52, %59 : vector<16x32xf32>
    %c1_41 = arith.constant 1 : index
    %c0_42 = arith.constant 0 : index
    %c0_43 = arith.constant 0 : index
    %61 = vector.load %arg5[%c1_41, %c0_42, %c0_43] : memref<2x16x32xf32, #tpu.memory_space<vmem>>, vector<1x16x32xf32>
    %62 = vector.shape_cast %61 : vector<1x16x32xf32> to vector<16x32xf32>
    %cst_44 = arith.constant dense<0.000000e+00> : vector<16x8xf32>
    %63 = tpu.matmul %62, %3, %cst_44 {dimension_numbers = #tpu.dot_dimension_numbers<[1], [0], [0], [1], [0, 0, 1, 1], [], []>} : vector<16x32xf32>, vector<32x8xf32>, vector<16x8xf32> -> vector<16x8xf32>
    %c1_45 = arith.constant 1 : index
    %c0_46 = arith.constant 0 : index
    %c0_47 = arith.constant 0 : index
    %64 = vector.load %arg6[%c1_45, %c0_46, %c0_47] : memref<2x16x32xf32, #tpu.memory_space<vmem>>, vector<1x16x32xf32>
    %65 = vector.shape_cast %64 : vector<1x16x32xf32> to vector<16x32xf32>
    %cst_48 = arith.constant dense<0.000000e+00> : vector<16x8xf32>
    %66 = tpu.matmul %65, %4, %cst_48 {dimension_numbers = #tpu.dot_dimension_numbers<[1], [0], [0], [1], [0, 0, 1, 1], [], []>} : vector<16x32xf32>, vector<32x8xf32>, vector<16x8xf32> -> vector<16x8xf32>
    %67 = arith.addf %63, %66 : vector<16x8xf32>
    %cst_49 = arith.constant dense<0.000000e+00> : vector<16x8xf32>
    %68 = tpu.matmul %60, %5, %cst_49 {dimension_numbers = #tpu.dot_dimension_numbers<[1], [0], [0], [1], [0, 0, 1, 1], [], []>} : vector<16x32xf32>, vector<32x8xf32>, vector<16x8xf32> -> vector<16x8xf32>
    %69 = arith.addf %67, %68 : vector<16x8xf32>
    %70 = vector.shape_cast %7 : vector<8xf32> to vector<1x8xf32>
    %71 = vector.broadcast %70 : vector<1x8xf32> to vector<16x8xf32>
    %72 = arith.addf %69, %71 : vector<16x8xf32>
    %c1_50 = arith.constant 1 : index
    %c0_51 = arith.constant 0 : index
    %c0_52 = arith.constant 0 : index
    %73 = vector.load %arg11[%c1_50, %c0_51, %c0_52] : memref<2x16x8xf32, #tpu.memory_space<vmem>>, vector<1x16x8xf32>
    %74 = vector.shape_cast %73 : vector<1x16x8xf32> to vector<16x8xf32>
    %75 = vector.shape_cast %72 : vector<16x8xf32> to vector<1x16x8xf32>
    tpu.vector_store %arg11[%c1_50, %c0_51, %c0_52], %75 {strides = array<i32>} : memref<2x16x8xf32, #tpu.memory_space<vmem>>, vector<1x16x8xf32>,
    return
  }
  func.func @transform_0(%arg0: i32) -> (i32, i32, i32) {
    %c0_i32 = arith.constant 0 : i32
    %c0_i32_0 = arith.constant 0 : i32
    %c0_i32_1 = arith.constant 0 : i32
    return %c0_i32, %arg0, %c0_i32_0 : i32, i32, i32
  }
  func.func @transform_1(%arg0: i32) -> (i32, i32, i32) {
    %c0_i32 = arith.constant 0 : i32
    %c0_i32_0 = arith.constant 0 : i32
    %c0_i32_1 = arith.constant 0 : i32
    %c0_i32_2 = arith.constant 0 : i32
    return %c0_i32, %c0_i32_0, %c0_i32_1 : i32, i32, i32
  }
  func.func @transform_2(%arg0: i32) -> (i32, i32) {
    %c0_i32 = arith.constant 0 : i32
    %c0_i32_0 = arith.constant 0 : i32
    %c0_i32_1 = arith.constant 0 : i32
    return %c0_i32, %c0_i32_0 : i32, i32
  }
  func.func @transform_3(%arg0: i32) -> (i32, i32) {
    %c0_i32 = arith.constant 0 : i32
    %c0_i32_0 = arith.constant 0 : i32
    %c0_i32_1 = arith.constant 0 : i32
    return %c0_i32, %c0_i32_0 : i32, i32
  }
  func.func @transform_4(%arg0: i32) -> (i32, i32, i32) {
    %c0_i32 = arith.constant 0 : i32
    %c0_i32_0 = arith.constant 0 : i32
    %c0_i32_1 = arith.constant 0 : i32
    return %c0_i32, %arg0, %c0_i32_0 : i32, i32, i32
  }
  func.func @transform_5(%arg0: i32) -> (i32, i32, i32) {
    %c0_i32 = arith.constant 0 : i32
    %c0_i32_0 = arith.constant 0 : i32
    %c0_i32_1 = arith.constant 0 : i32
    return %c0_i32, %arg0, %c0_i32_0 : i32, i32, i32
  }
  func.func @transform_6(%arg0: i32) -> (i32, i32) {
    %c0_i32 = arith.constant 0 : i32
    %c0_i32_0 = arith.constant 0 : i32
    %c0_i32_1 = arith.constant 0 : i32
    return %c0_i32, %c0_i32_0 : i32, i32
  }
  func.func @transform_7(%arg0: i32) -> (i32, i32) {
    %c0_i32 = arith.constant 0 : i32
    %c0_i32_0 = arith.constant 0 : i32
    %c0_i32_1 = arith.constant 0 : i32
    return %c0_i32, %c0_i32_0 : i32, i32
  }
  func.func @transform_8(%arg0: i32) -> (i32, i32) {
    %c0_i32 = arith.constant 0 : i32
    %c0_i32_0 = arith.constant 0 : i32
    %c0_i32_1 = arith.constant 0 : i32
    return %c0_i32, %c0_i32_0 : i32, i32
  }
  func.func @transform_9(%arg0: i32) -> (i32, i32) {
    %c0_i32 = arith.constant 0 : i32
    %c0_i32_0 = arith.constant 0 : i32
    %c0_i32_1 = arith.constant 0 : i32
    return %c0_i32, %c0_i32_0 : i32, i32
  }
  func.func @transform_10(%arg0: i32) -> (i32, i32, i32) {
    %c0_i32 = arith.constant 0 : i32
    %c0_i32_0 = arith.constant 0 : i32
    %c0_i32_1 = arith.constant 0 : i32
    return %c0_i32, %arg0, %c0_i32_0 : i32, i32, i32
  }
}

</mosaic_0001>

<llo_original>
// kernel: glcn_encoder_forward.6
$region0: #{glcn_encoder_forward.6}
  #allocation0 [shape = 'u32[]', space=smem, size = 0x4, offset = 0x4, fixed_abs, tag = 'smem constant byte address 0x4 - core index']
  #allocation1 [shape = 'u32[144,128]{1,0:T(1,128)}', space=vmem, size = 0x12000, scoped, tag = 'internal scratch']
  %s0 = inlined_call_operand.vmem [shape: f32[2,16,16], index: 0, kind: input, shape index: {}]
  %s1 = inlined_call_operand.vmem [shape: f32[2,16,32], index: 1, kind: input, shape index: {}]
  %s2 = inlined_call_operand.vmem [shape: f32[32,32], index: 2, kind: input, shape index: {}]
  %s3 = inlined_call_operand.vmem [shape: f32[1,32], index: 3, kind: input, shape index: {}]
  %s4 = inlined_call_operand.vmem [shape: f32[2,16,32], index: 4, kind: output, shape index: {}]
  %s5 = sld [smem:[#allocation0]]
  $region26: #{glcn_encoder_forward.6} parent=0
    _
  %s7 = ssub.s32 1, %s5
  %s8 = scalar_select 0, %s7, %s5
  // Predicated region
  $region2: #{glcn_encoder_forward.6} parent=0 // pred_check
    _
  $region3: #{glcn_encoder_forward.6} parent=0 // pred_check_branch
    %10 = sbr.rel (0) target = $region5
  $region4: #{glcn_encoder_forward.6} parent=0 // pred_region
    _
  $region5: #{glcn_encoder_forward.6} parent=0 // pred_fallthru
    _
  // Predicated region
  $region6: #{glcn_encoder_forward.6} parent=0 // pred_check
    _
  $region7: #{glcn_encoder_forward.6} parent=0 // pred_check_branch
    %12 = sbr.rel (0) target = $region9
  $region8: #{glcn_encoder_forward.6} parent=0 // pred_region
    _
  $region9: #{glcn_encoder_forward.6} parent=0 // pred_fallthru
    _
  // Predicated region
  $region10: #{glcn_encoder_forward.6} parent=0 // pred_check
    _
  $region11: #{glcn_encoder_forward.6} parent=0 // pred_check_branch
    %14 = sbr.rel (0) target = $region13
  $region12: #{glcn_encoder_forward.6} parent=0 // pred_region
    _
  $region13: #{glcn_encoder_forward.6} parent=0 // pred_fallthru
    _
  // Predicated region
  $region14: #{glcn_encoder_forward.6} parent=0 // pred_check
    _
  $region15: #{glcn_encoder_forward.6} parent=0 // pred_check_branch
    %16 = sbr.rel (0) target = $region17
  $region16: #{glcn_encoder_forward.6} parent=0 // pred_region
    _
  $region17: #{glcn_encoder_forward.6} parent=0 // pred_fallthru
    _
  %v18 = vld [vmem:[%s2] sm:$0xff]
  %v19 = vld [vmem:[%s2 + $0x8] sm:$0xff]
  %v20 = vld [vmem:[%s2 + $0x10] sm:$0xff]
  %v21 = vld [vmem:[%s2 + $0x18] sm:$0xff]
  %v22 = vld [vmem:[%s3] sm:$0x1]
  %v23 = vld [vmem:[%s0] sm:$0xff]
  %v24 = vld [vmem:[%s0 + $0x8] sm:$0xff]
  %v25 = vpack.c.bf16 %v24, %v23
  %v26 = vld [vmem:[%s1] sm:$0xff]
  %v27 = vld [vmem:[%s1 + $0x8] sm:$0xff]
  %v28 = vpack.c.bf16 %v27, %v26
  %vm29 = vcmask 130048
  %v31 = vsel %vm29, %v25, 0
  %33 = vmatprep.subr.bf16.mxu0 0
  %34 = vmatpush1.bf16.msra.mxu0 0
  %35 = vmatprep.subr.bf16.mxu0 0
  %36 = vmatpush1.bf16.msra.mxu0 0
  %37 = vmatprep.subr.bf16.mxu0 0
  %38 = vmatpush1.bf16.msra.mxu0 0
  %39 = vmatprep.subr.bf16.mxu0 0
  %40 = vmatpush1.bf16.msra.mxu0 0
  %41 = vmatprep.subr.bf16.mxu0 0
  %42 = vmatpush1.bf16.msra.mxu0 0
  %43 = vmatprep.subr.bf16.mxu0 0
  %44 = vmatpush1.bf16.msra.mxu0 0
  %45 = vmatprep.subr.bf16.mxu0 0
  %46 = vmatpush1.bf16.msra.mxu0 0
  %47 = vmatprep.subr.bf16.mxu0 0
  %48 = vmatpush1.bf16.msra.mxu0 %v28
  %49 = vmatprep.subr.bf16.mxu0 0
  %50 = vmatpush2.bf16.msra.mxu0 0
  %51 = vmatprep.subr.bf16.mxu0 0
  %52 = vmatpush2.bf16.msra.mxu0 0
  %53 = vmatprep.subr.bf16.mxu0 0
  %54 = vmatpush2.bf16.msra.mxu0 0
  %55 = vmatprep.subr.bf16.mxu0 0
  %56 = vmatpush2.bf16.msra.mxu0 0
  %57 = vmatprep.subr.bf16.mxu0 0
  %58 = vmatpush2.bf16.msra.mxu0 0
  %59 = vmatprep.subr.bf16.mxu0 0
  %60 = vmatpush2.bf16.msra.mxu0 0
  %61 = vmatprep.subr.bf16.mxu0 0
  %62 = vmatpush2.bf16.msra.mxu0 0
  %63 = vmatprep.subr.bf16.mxu0 0
  %64 = vmatpush2.bf16.msra.mxu0 0
  %65 = vmatprep.mubr.bf16.mxu0 0
  %66 = vmatmul.mubr.bf16.gmra.mxu0 %v31
  %v67 = vpop.f32.mrf.mxu0
  %v68 = vadd.f32 0.0, %v67
  %v69 = vpop.f32.mrf.mxu0
  %v70 = vpop.f32.mrf.mxu0
  %v71 = vadd.f32 0.0, %v70
  %v72 = vpop.f32.mrf.mxu0
  %73 = vdwg.mxu0
  %v75 = vlaneseq
  %v76 = vshrl.u32 %v75, 7
  %v77 = vsub.s32 0, %v76
  %v78 = vrot.slane %v22, %v77
  %vm80 = vcmask 261120
  %v82 = vsel %vm80, %v68, 0
  %v85 = vsel %vm80, %v71, 0
  %87 = vmatprep.subr.mxu0 0.0
  %88 = vmatpush1.msra.mxu0 0.0
  %89 = vmatprep.subr.mxu0 0.0
  %90 = vmatpush1.msra.mxu0 0.0
  %91 = vmatprep.subr.mxu0 0.0
  %92 = vmatpush1.msra.mxu0 0.0
  %93 = vmatprep.subr.mxu0 0.0
  %94 = vmatpush1.msra.mxu0 0.0
  %95 = vmatprep.subr.mxu0 0.0
  %96 = vmatpush1.msra.mxu0 0.0
  %97 = vmatprep.subr.mxu0 0.0
  %98 = vmatpush1.msra.mxu0 0.0
  %99 = vmatprep.subr.mxu0 0.0
  %100 = vmatpush1.msra.mxu0 0.0
  %101 = vmatprep.subr.mxu0 0.0
  %102 = vmatpush1.msra.mxu0 0.0
  %103 = vmatprep.subr.mxu0 0.0
  %104 = vmatpush1.msra.mxu0 0.0
  %105 = vmatprep.subr.mxu0 0.0
  %106 = vmatpush1.msra.mxu0 0.0
  %107 = vmatprep.subr.mxu0 0.0
  %108 = vmatpush1.msra.mxu0 0.0
  %109 = vmatprep.subr.mxu0 0.0
  %110 = vmatpush1.msra.mxu0 0.0
  %111 = vmatprep.subr.mxu0 0.0
  %112 = vmatpush1.msra.mxu0 %v21
  %113 = vmatprep.subr.mxu0 0.0
  %114 = vmatpush1.msra.mxu0 %v20
  %115 = vmatprep.subr.mxu0 0.0
  %116 = vmatpush1.msra.mxu0 %v19
  %117 = vmatprep.subr.mxu0 0.0
  %118 = vmatpush1.msra.mxu0 %v18
  %119 = vmatprep.subr.mxu0 0.0
  %120 = vmatpush2.msra.mxu0 0.0
  %121 = vmatprep.subr.mxu0 0.0
  %122 = vmatpush2.msra.mxu0 0.0
  %123 = vmatprep.subr.mxu0 0.0
  %124 = vmatpush2.msra.mxu0 0.0
  %125 = vmatprep.subr.mxu0 0.0
  %126 = vmatpush2.msra.mxu0 0.0
  %127 = vmatprep.subr.mxu0 0.0
  %128 = vmatpush2.msra.mxu0 0.0
  %129 = vmatprep.subr.mxu0 0.0
  %130 = vmatpush2.msra.mxu0 0.0
  %131 = vmatprep.subr.mxu0 0.0
  %132 = vmatpush2.msra.mxu0 0.0
  %133 = vmatprep.subr.mxu0 0.0
  %134 = vmatpush2.msra.mxu0 0.0
  %135 = vmatprep.subr.mxu0 0.0
  %136 = vmatpush2.msra.mxu0 0.0
  %137 = vmatprep.subr.mxu0 0.0
  %138 = vmatpush2.msra.mxu0 0.0
  %139 = vmatprep.subr.mxu0 0.0
  %140 = vmatpush2.msra.mxu0 0.0
  %141 = vmatprep.subr.mxu0 0.0
  %142 = vmatpush2.msra.mxu0 0.0
  %143 = vmatprep.subr.mxu0 0.0
  %144 = vmatpush2.msra.mxu0 0.0
  %145 = vmatprep.subr.mxu0 0.0
  %146 = vmatpush2.msra.mxu0 0.0
  %147 = vmatprep.subr.mxu0 0.0
  %148 = vmatpush2.msra.mxu0 0.0
  %149 = vmatprep.subr.mxu0 0.0
  %150 = vmatpush2.msra.mxu0 0.0
  %151 = vmatprep.mubr.f32.mxu0 0.0
  %152 = vmatmul.mubr.f32.gmra.mxu0 %v82
  %v153 = vpop.f32.mrf.mxu0
  %v154 = vadd.f32 %v78, %v153
  %v155 = vpop.f32.mrf.mxu0
  %156 = vmatprep.mubr.f32.mxu0 0.0
  %157 = vmatmul.mubr.f32.gmra.mxu0 %v85
  %v158 = vpop.f32.mrf.mxu0
  %v159 = vadd.f32 %v78, %v158
  %v160 = vpop.f32.mrf.mxu0
  %161 = vdwg.mxu0
  %v162 = vmul.f32 %v154, %v154
  %v163 = vmul.f32 %v159, %v159
  %v164 = vsel %vm80, %v162, 0.0
  %165 = vadd.xlane.f32.xlu0 %v164
  %v166 = vpop.xlane.xlu0 %165
  %v167 = vsel %vm80, %v163, 0.0
  %168 = vadd.xlane.f32.xlu0 %v167
  %v169 = vpop.xlane.xlu0 %168
  %v170 = vmax.f32 %v166, 1e-24
  %v171 = vmax.f32 %v169, 1e-24
  %v172 = vrsqrt.pop %v170
  %v173 = vrsqrt.pop %v171
  %v174 = vmul.f32 %v154, %v172
  %v175 = vmul.f32 %v159, %v173
  %v176 = vmax.f32 %v174, 0.0
  %v177 = vmax.f32 %v175, 0.0
  %v178 = vsel %vm80, %v176, 0.0
  %179 = vadd.xlane.f32.xlu0 %v178
  %v180 = vpop.xlane.xlu0 %179
  %v181 = vsel %vm80, %v177, 0.0
  %182 = vadd.xlane.f32.xlu0 %v181
  %v183 = vpop.xlane.xlu0 %182
  %s184 = scalar_lea.vmem %s0, 16
  %v185 = vld [vmem:[%s184] sm:$0xff]
  %v186 = vld [vmem:[%s184 + $0x8] sm:$0xff]
  %v187 = vpack.c.bf16 %v186, %v185
  %s188 = scalar_lea.vmem %s1, 16
  %v189 = vld [vmem:[%s188] sm:$0xff]
  %v190 = vld [vmem:[%s188 + $0x8] sm:$0xff]
  %v191 = vpack.c.bf16 %v190, %v189
  %v193 = vsel %vm29, %v187, 0
  %195 = vmatprep.subr.bf16.mxu0 0
  %196 = vmatpush1.bf16.msra.mxu0 0
  %197 = vmatprep.subr.bf16.mxu0 0
  %198 = vmatpush1.bf16.msra.mxu0 0
  %199 = vmatprep.subr.bf16.mxu0 0
  %200 = vmatpush1.bf16.msra.mxu0 0
  %201 = vmatprep.subr.bf16.mxu0 0
  %202 = vmatpush1.bf16.msra.mxu0 0
  %203 = vmatprep.subr.bf16.mxu0 0
  %204 = vmatpush1.bf16.msra.mxu0 0
  %205 = vmatprep.subr.bf16.mxu0 0
  %206 = vmatpush1.bf16.msra.mxu0 0
  %207 = vmatprep.subr.bf16.mxu0 0
  %208 = vmatpush1.bf16.msra.mxu0 0
  %209 = vmatprep.subr.bf16.mxu0 0
  %210 = vmatpush1.bf16.msra.mxu0 %v191
  %211 = vmatprep.subr.bf16.mxu0 0
  %212 = vmatpush2.bf16.msra.mxu0 0
  %213 = vmatprep.subr.bf16.mxu0 0
  %214 = vmatpush2.bf16.msra.mxu0 0
  %215 = vmatprep.subr.bf16.mxu0 0
  %216 = vmatpush2.bf16.msra.mxu0 0
  %217 = vmatprep.subr.bf16.mxu0 0
  %218 = vmatpush2.bf16.msra.mxu0 0
  %219 = vmatprep.subr.bf16.mxu0 0
  %220 = vmatpush2.bf16.msra.mxu0 0
  %221 = vmatprep.subr.bf16.mxu0 0
  %222 = vmatpush2.bf16.msra.mxu0 0
  %223 = vmatprep.subr.bf16.mxu0 0
  %224 = vmatpush2.bf16.msra.mxu0 0
  %225 = vmatprep.subr.bf16.mxu0 0
  %226 = vmatpush2.bf16.msra.mxu0 0
  %227 = vmatprep.mubr.bf16.mxu0 0
  %228 = vmatmul.mubr.bf16.gmra.mxu0 %v193
  %v229 = vpop.f32.mrf.mxu0
  %v230 = vadd.f32 0.0, %v229
  %v231 = vpop.f32.mrf.mxu0
  %v232 = vpop.f32.mrf.mxu0
  %v233 = vadd.f32 0.0, %v232
  %v234 = vpop.f32.mrf.mxu0
  %235 = vdwg.mxu0
  %v237 = vsel %vm80, %v230, 0
  %v240 = vsel %vm80, %v233, 0
  %242 = vmatprep.subr.mxu0 0.0
  %243 = vmatpush1.msra.mxu0 0.0
  %244 = vmatprep.subr.mxu0 0.0
  %245 = vmatpush1.msra.mxu0 0.0
  %246 = vmatprep.subr.mxu0 0.0
  %247 = vmatpush1.msra.mxu0 0.0
  %248 = vmatprep.subr.mxu0 0.0
  %249 = vmatpush1.msra.mxu0 0.0
  %250 = vmatprep.subr.mxu0 0.0
  %251 = vmatpush1.msra.mxu0 0.0
  %252 = vmatprep.subr.mxu0 0.0
  %253 = vmatpush1.msra.mxu0 0.0
  %254 = vmatprep.subr.mxu0 0.0
  %255 = vmatpush1.msra.mxu0 0.0
  %256 = vmatprep.subr.mxu0 0.0
  %257 = vmatpush1.msra.mxu0 0.0
  %258 = vmatprep.subr.mxu0 0.0
  %259 = vmatpush1.msra.mxu0 0.0
  %260 = vmatprep.subr.mxu0 0.0
  %261 = vmatpush1.msra.mxu0 0.0
  %262 = vmatprep.subr.mxu0 0.0
  %263 = vmatpush1.msra.mxu0 0.0
  %264 = vmatprep.subr.mxu0 0.0
  %265 = vmatpush1.msra.mxu0 0.0
  %266 = vmatprep.subr.mxu0 0.0
  %267 = vmatpush1.msra.mxu0 %v21
  %268 = vmatprep.subr.mxu0 0.0
  %269 = vmatpush1.msra.mxu0 %v20
  %270 = vmatprep.subr.mxu0 0.0
  %271 = vmatpush1.msra.mxu0 %v19
  %272 = vmatprep.subr.mxu0 0.0
  %273 = vmatpush1.msra.mxu0 %v18
  %274 = vmatprep.subr.mxu0 0.0
  %275 = vmatpush2.msra.mxu0 0.0
  %276 = vmatprep.subr.mxu0 0.0
  %277 = vmatpush2.msra.mxu0 0.0
  %278 = vmatprep.subr.mxu0 0.0
  %279 = vmatpush2.msra.mxu0 0.0
  %280 = vmatprep.subr.mxu0 0.0
  %281 = vmatpush2.msra.mxu0 0.0
  %282 = vmatprep.subr.mxu0 0.0
  %283 = vmatpush2.msra.mxu0 0.0
  %284 = vmatprep.subr.mxu0 0.0
  %285 = vmatpush2.msra.mxu0 0.0
  %286 = vmatprep.subr.mxu0 0.0
  %287 = vmatpush2.msra.mxu0 0.0
  %288 = vmatprep.subr.mxu0 0.0
  %289 = vmatpush2.msra.mxu0 0.0
  %290 = vmatprep.subr.mxu0 0.0
  %291 = vmatpush2.msra.mxu0 0.0
  %292 = vmatprep.subr.mxu0 0.0
  %293 = vmatpush2.msra.mxu0 0.0
  %294 = vmatprep.subr.mxu0 0.0
  %295 = vmatpush2.msra.mxu0 0.0
  %296 = vmatprep.subr.mxu0 0.0
  %297 = vmatpush2.msra.mxu0 0.0
  %298 = vmatprep.subr.mxu0 0.0
  %299 = vmatpush2.msra.mxu0 0.0
  %300 = vmatprep.subr.mxu0 0.0
  %301 = vmatpush2.msra.mxu0 0.0
  %302 = vmatprep.subr.mxu0 0.0
  %303 = vmatpush2.msra.mxu0 0.0
  %304 = vmatprep.subr.mxu0 0.0
  %305 = vmatpush2.msra.mxu0 0.0
  %306 = vmatprep.mubr.f32.mxu0 0.0
  %307 = vmatmul.mubr.f32.gmra.mxu0 %v237
  %v308 = vpop.f32.mrf.mxu0
  %v309 = vadd.f32 %v78, %v308
  %v310 = vpop.f32.mrf.mxu0
  %311 = vmatprep.mubr.f32.mxu0 0.0
  %312 = vmatmul.mubr.f32.gmra.mxu0 %v240
  %v313 = vpop.f32.mrf.mxu0
  %v314 = vadd.f32 %v78, %v313
  %v315 = vpop.f32.mrf.mxu0
  %316 = vdwg.mxu0
  %v317 = vmul.f32 %v309, %v309
  %v318 = vmul.f32 %v314, %v314
  %v319 = vsel %vm80, %v317, 0.0
  %320 = vadd.xlane.f32.xlu0 %v319
  %v321 = vpop.xlane.xlu0 %320
  %v322 = vsel %vm80, %v318, 0.0
  %323 = vadd.xlane.f32.xlu0 %v322
  %v324 = vpop.xlane.xlu0 %323
  %v325 = vmax.f32 %v321, 1e-24
  %v326 = vmax.f32 %v324, 1e-24
  %v327 = vrsqrt.pop %v325
  %v328 = vrsqrt.pop %v326
  %v329 = vmul.f32 %v309, %v327
  %v330 = vmul.f32 %v314, %v328
  %v331 = vmax.f32 %v329, 0.0
  %v332 = vmax.f32 %v330, 0.0
  %v333 = vsel %vm80, %v331, 0.0
  %334 = vadd.xlane.f32.xlu0 %v333
  %v335 = vpop.xlane.xlu0 %334
  %v336 = vsel %vm80, %v332, 0.0
  %337 = vadd.xlane.f32.xlu0 %v336
  %v338 = vpop.xlane.xlu0 %337
  %v339 = vadd.f32 %v180, %v335
  %v340 = vadd.f32 %v183, %v338
  %v341 = vrcp.pop 64.0
  %v342 = vmul.f32 %v339, %v341
  %v343 = vmul.f32 %v340, %v341
  %v344 = vsub.f32 %v176, %v342
  %v345 = vsub.f32 %v177, %v343
  %v346 = vmul.f32 %v344, %v344
  %v347 = vmul.f32 %v345, %v345
  %v348 = vsel %vm80, %v346, 0.0
  %349 = vadd.xlane.f32.xlu0 %v348
  %v350 = vpop.xlane.xlu0 %349
  %v351 = vsel %vm80, %v347, 0.0
  %352 = vadd.xlane.f32.xlu0 %v351
  %v353 = vpop.xlane.xlu0 %352
  %v354 = vsub.f32 %v331, %v342
  %v355 = vsub.f32 %v332, %v343
  %v356 = vmul.f32 %v354, %v354
  %v357 = vmul.f32 %v355, %v355
  %v358 = vsel %vm80, %v356, 0.0
  %359 = vadd.xlane.f32.xlu0 %v358
  %v360 = vpop.xlane.xlu0 %359
  %v361 = vsel %vm80, %v357, 0.0
  %362 = vadd.xlane.f32.xlu0 %v361
  %v363 = vpop.xlane.xlu0 %362
  %v364 = vadd.f32 %v350, %v360
  %v365 = vadd.f32 %v353, %v363
  %v366 = vmul.f32 %v364, %v341
  %v367 = vmul.f32 %v365, %v341
  %v368 = vadd.f32 %v366, 1e-05
  %v369 = vadd.f32 %v367, 1e-05
  %v370 = vrsqrt.pop %v368
  %v371 = vrsqrt.pop %v369
  %v372 = vmul.f32 %v344, %v370
  %v373 = vmul.f32 %v345, %v371
  %374 = vst.msk [vmem:[%s4] sm:$0xff] %vm80, %v372
  %375 = vst.msk [vmem:[%s4 + $0x8] sm:$0xff] %vm80, %v373
  %v376 = vmul.f32 %v354, %v370
  %v377 = vmul.f32 %v355, %v371
  %s378 = scalar_lea.vmem %s4, 16
  %379 = vst.msk [vmem:[%s378] sm:$0xff] %vm80, %v376
  %380 = vst.msk [vmem:[%s378 + $0x8] sm:$0xff] %vm80, %v377
  // Predicated region
  $region18: #{glcn_encoder_forward.6} parent=0 // pred_check
    _
  $region19: #{glcn_encoder_forward.6} parent=0 // pred_check_branch
    %382 = sbr.rel (0) target = $region21
  $region20: #{glcn_encoder_forward.6} parent=0 // pred_region
    _
  $region21: #{glcn_encoder_forward.6} parent=0 // pred_fallthru
    _
  // Predicated region
  $region22: #{glcn_encoder_forward.6} parent=0 // pred_check
    _
  $region23: #{glcn_encoder_forward.6} parent=0 // pred_check_branch
    %384 = sbr.rel (0) target = $region25
  $region24: #{glcn_encoder_forward.6} parent=0 // pred_region
    _
  $region25: #{glcn_encoder_forward.6} parent=0 // pred_fallthru
    _

// kernel: glcn_encoder_forward.5
$region0: #{glcn_encoder_forward.5}
  #allocation0 [shape = 'u32[]', space=smem, size = 0x4, offset = 0x4, fixed_abs, tag = 'smem constant byte address 0x4 - core index']
  #allocation1 [shape = 'u32[144,128]{1,0:T(1,128)}', space=vmem, size = 0x12000, scoped, tag = 'internal scratch']
  %s0 = inlined_call_operand.vmem [shape: f32[2,16,16], index: 0, kind: input, shape index: {}]
  %s1 = inlined_call_operand.vmem [shape: f32[2,16,8], index: 1, kind: input, shape index: {}]
  %s2 = inlined_call_operand.vmem [shape: f32[8,32], index: 2, kind: input, shape index: {}]
  %s3 = inlined_call_operand.vmem [shape: f32[1,32], index: 3, kind: input, shape index: {}]
  %s4 = inlined_call_operand.vmem [shape: f32[2,16,32], index: 4, kind: output, shape index: {}]
  %s5 = sld [smem:[#allocation0]]
  $region26: #{glcn_encoder_forward.5} parent=0
    _
  %s7 = ssub.s32 1, %s5
  %s8 = scalar_select 0, %s7, %s5
  // Predicated region
  $region2: #{glcn_encoder_forward.5} parent=0 // pred_check
    _
  $region3: #{glcn_encoder_forward.5} parent=0 // pred_check_branch
    %10 = sbr.rel (0) target = $region5
  $region4: #{glcn_encoder_forward.5} parent=0 // pred_region
    _
  $region5: #{glcn_encoder_forward.5} parent=0 // pred_fallthru
    _
  // Predicated region
  $region6: #{glcn_encoder_forward.5} parent=0 // pred_check
    _
  $region7: #{glcn_encoder_forward.5} parent=0 // pred_check_branch
    %12 = sbr.rel (0) target = $region9
  $region8: #{glcn_encoder_forward.5} parent=0 // pred_region
    _
  $region9: #{glcn_encoder_forward.5} parent=0 // pred_fallthru
    _
  // Predicated region
  $region10: #{glcn_encoder_forward.5} parent=0 // pred_check
    _
  $region11: #{glcn_encoder_forward.5} parent=0 // pred_check_branch
    %14 = sbr.rel (0) target = $region13
  $region12: #{glcn_encoder_forward.5} parent=0 // pred_region
    _
  $region13: #{glcn_encoder_forward.5} parent=0 // pred_fallthru
    _
  // Predicated region
  $region14: #{glcn_encoder_forward.5} parent=0 // pred_check
    _
  $region15: #{glcn_encoder_forward.5} parent=0 // pred_check_branch
    %16 = sbr.rel (0) target = $region17
  $region16: #{glcn_encoder_forward.5} parent=0 // pred_region
    _
  $region17: #{glcn_encoder_forward.5} parent=0 // pred_fallthru
    _
  %v18 = vld [vmem:[%s2] sm:$0xff]
  %v19 = vld [vmem:[%s3] sm:$0x1]
  %v20 = vld [vmem:[%s0] sm:$0xff]
  %v21 = vld [vmem:[%s0 + $0x8] sm:$0xff]
  %v22 = vpack.c.bf16 %v21, %v20
  %v23 = vld [vmem:[%s1] sm:$0xff]
  %v24 = vld [vmem:[%s1 + $0x8] sm:$0xff]
  %v25 = vpack.c.bf16 %v24, %v23
  %vm26 = vcmask 130048
  %v28 = vsel %vm26, %v22, 0
  %30 = vmatprep.subr.bf16.mxu0 0
  %31 = vmatpush1.bf16.msra.mxu0 0
  %32 = vmatprep.subr.bf16.mxu0 0
  %33 = vmatpush1.bf16.msra.mxu0 0
  %34 = vmatprep.subr.bf16.mxu0 0
  %35 = vmatpush1.bf16.msra.mxu0 0
  %36 = vmatprep.subr.bf16.mxu0 0
  %37 = vmatpush1.bf16.msra.mxu0 0
  %38 = vmatprep.subr.bf16.mxu0 0
  %39 = vmatpush1.bf16.msra.mxu0 0
  %40 = vmatprep.subr.bf16.mxu0 0
  %41 = vmatpush1.bf16.msra.mxu0 0
  %42 = vmatprep.subr.bf16.mxu0 0
  %43 = vmatpush1.bf16.msra.mxu0 0
  %44 = vmatprep.subr.bf16.mxu0 0
  %45 = vmatpush1.bf16.msra.mxu0 %v25
  %46 = vmatprep.subr.bf16.mxu0 0
  %47 = vmatpush2.bf16.msra.mxu0 0
  %48 = vmatprep.subr.bf16.mxu0 0
  %49 = vmatpush2.bf16.msra.mxu0 0
  %50 = vmatprep.subr.bf16.mxu0 0
  %51 = vmatpush2.bf16.msra.mxu0 0
  %52 = vmatprep.subr.bf16.mxu0 0
  %53 = vmatpush2.bf16.msra.mxu0 0
  %54 = vmatprep.subr.bf16.mxu0 0
  %55 = vmatpush2.bf16.msra.mxu0 0
  %56 = vmatprep.subr.bf16.mxu0 0
  %57 = vmatpush2.bf16.msra.mxu0 0
  %58 = vmatprep.subr.bf16.mxu0 0
  %59 = vmatpush2.bf16.msra.mxu0 0
  %60 = vmatprep.subr.bf16.mxu0 0
  %61 = vmatpush2.bf16.msra.mxu0 0
  %62 = vmatprep.mubr.bf16.mxu0 0
  %63 = vmatmul.mubr.bf16.gmra.mxu0 %v28
  %v64 = vpop.f32.mrf.mxu0
  %v65 = vadd.f32 0.0, %v64
  %v66 = vpop.f32.mrf.mxu0
  %v67 = vpop.f32.mrf.mxu0
  %v68 = vadd.f32 0.0, %v67
  %v69 = vpop.f32.mrf.mxu0
  %70 = vdwg.mxu0
  %v72 = vlaneseq
  %v73 = vshrl.u32 %v72, 7
  %v74 = vsub.s32 0, %v73
  %v75 = vrot.slane %v19, %v74
  %vm77 = vcmask 64512
  %v79 = vsel %vm77, %v65, 0
  %v82 = vsel %vm77, %v68, 0
  %84 = vmatprep.subr.mxu0 0.0
  %85 = vmatpush1.msra.mxu0 0.0
  %86 = vmatprep.subr.mxu0 0.0
  %87 = vmatpush1.msra.mxu0 0.0
  %88 = vmatprep.subr.mxu0 0.0
  %89 = vmatpush1.msra.mxu0 0.0
  %90 = vmatprep.subr.mxu0 0.0
  %91 = vmatpush1.msra.mxu0 0.0
  %92 = vmatprep.subr.mxu0 0.0
  %93 = vmatpush1.msra.mxu0 0.0
  %94 = vmatprep.subr.mxu0 0.0
  %95 = vmatpush1.msra.mxu0 0.0
  %96 = vmatprep.subr.mxu0 0.0
  %97 = vmatpush1.msra.mxu0 0.0
  %98 = vmatprep.subr.mxu0 0.0
  %99 = vmatpush1.msra.mxu0 0.0
  %100 = vmatprep.subr.mxu0 0.0
  %101 = vmatpush1.msra.mxu0 0.0
  %102 = vmatprep.subr.mxu0 0.0
  %103 = vmatpush1.msra.mxu0 0.0
  %104 = vmatprep.subr.mxu0 0.0
  %105 = vmatpush1.msra.mxu0 0.0
  %106 = vmatprep.subr.mxu0 0.0
  %107 = vmatpush1.msra.mxu0 0.0
  %108 = vmatprep.subr.mxu0 0.0
  %109 = vmatpush1.msra.mxu0 0.0
  %110 = vmatprep.subr.mxu0 0.0
  %111 = vmatpush1.msra.mxu0 0.0
  %112 = vmatprep.subr.mxu0 0.0
  %113 = vmatpush1.msra.mxu0 0.0
  %114 = vmatprep.subr.mxu0 0.0
  %115 = vmatpush1.msra.mxu0 %v18
  %116 = vmatprep.subr.mxu0 0.0
  %117 = vmatpush2.msra.mxu0 0.0
  %118 = vmatprep.subr.mxu0 0.0
  %119 = vmatpush2.msra.mxu0 0.0
  %120 = vmatprep.subr.mxu0 0.0
  %121 = vmatpush2.msra.mxu0 0.0
  %122 = vmatprep.subr.mxu0 0.0
  %123 = vmatpush2.msra.mxu0 0.0
  %124 = vmatprep.subr.mxu0 0.0
  %125 = vmatpush2.msra.mxu0 0.0
  %126 = vmatprep.subr.mxu0 0.0
  %127 = vmatpush2.msra.mxu0 0.0
  %128 = vmatprep.subr.mxu0 0.0
  %129 = vmatpush2.msra.mxu0 0.0
  %130 = vmatprep.subr.mxu0 0.0
  %131 = vmatpush2.msra.mxu0 0.0
  %132 = vmatprep.subr.mxu0 0.0
  %133 = vmatpush2.msra.mxu0 0.0
  %134 = vmatprep.subr.mxu0 0.0
  %135 = vmatpush2.msra.mxu0 0.0
  %136 = vmatprep.subr.mxu0 0.0
  %137 = vmatpush2.msra.mxu0 0.0
  %138 = vmatprep.subr.mxu0 0.0
  %139 = vmatpush2.msra.mxu0 0.0
  %140 = vmatprep.subr.mxu0 0.0
  %141 = vmatpush2.msra.mxu0 0.0
  %142 = vmatprep.subr.mxu0 0.0
  %143 = vmatpush2.msra.mxu0 0.0
  %144 = vmatprep.subr.mxu0 0.0
  %145 = vmatpush2.msra.mxu0 0.0
  %146 = vmatprep.subr.mxu0 0.0
  %147 = vmatpush2.msra.mxu0 0.0
  %148 = vmatprep.mubr.f32.mxu0 0.0
  %149 = vmatmul.mubr.f32.gmra.mxu0 %v79
  %v150 = vpop.f32.mrf.mxu0
  %v151 = vadd.f32 %v75, %v150
  %v152 = vpop.f32.mrf.mxu0
  %153 = vmatprep.mubr.f32.mxu0 0.0
  %154 = vmatmul.mubr.f32.gmra.mxu0 %v82
  %v155 = vpop.f32.mrf.mxu0
  %v156 = vadd.f32 %v75, %v155
  %v157 = vpop.f32.mrf.mxu0
  %158 = vdwg.mxu0
  %v159 = vmul.f32 %v151, %v151
  %v160 = vmul.f32 %v156, %v156
  %vm161 = vcmask 261120
  %v162 = vsel %vm161, %v159, 0.0
  %163 = vadd.xlane.f32.xlu0 %v162
  %v164 = vpop.xlane.xlu0 %163
  %v165 = vsel %vm161, %v160, 0.0
  %166 = vadd.xlane.f32.xlu0 %v165
  %v167 = vpop.xlane.xlu0 %166
  %v168 = vmax.f32 %v164, 1e-24
  %v169 = vmax.f32 %v167, 1e-24
  %v170 = vrsqrt.pop %v168
  %v171 = vrsqrt.pop %v169
  %v172 = vmul.f32 %v151, %v170
  %v173 = vmul.f32 %v156, %v171
  %v174 = vmax.f32 %v172, 0.0
  %v175 = vmax.f32 %v173, 0.0
  %v176 = vsel %vm161, %v174, 0.0
  %177 = vadd.xlane.f32.xlu0 %v176
  %v178 = vpop.xlane.xlu0 %177
  %v179 = vsel %vm161, %v175, 0.0
  %180 = vadd.xlane.f32.xlu0 %v179
  %v181 = vpop.xlane.xlu0 %180
  %s182 = scalar_lea.vmem %s0, 16
  %v183 = vld [vmem:[%s182] sm:$0xff]
  %v184 = vld [vmem:[%s182 + $0x8] sm:$0xff]
  %v185 = vpack.c.bf16 %v184, %v183
  %s186 = scalar_lea.vmem %s1, 16
  %v187 = vld [vmem:[%s186] sm:$0xff]
  %v188 = vld [vmem:[%s186 + $0x8] sm:$0xff]
  %v189 = vpack.c.bf16 %v188, %v187
  %v191 = vsel %vm26, %v185, 0
  %193 = vmatprep.subr.bf16.mxu0 0
  %194 = vmatpush1.bf16.msra.mxu0 0
  %195 = vmatprep.subr.bf16.mxu0 0
  %196 = vmatpush1.bf16.msra.mxu0 0
  %197 = vmatprep.subr.bf16.mxu0 0
  %198 = vmatpush1.bf16.msra.mxu0 0
  %199 = vmatprep.subr.bf16.mxu0 0
  %200 = vmatpush1.bf16.msra.mxu0 0
  %201 = vmatprep.subr.bf16.mxu0 0
  %202 = vmatpush1.bf16.msra.mxu0 0
  %203 = vmatprep.subr.bf16.mxu0 0
  %204 = vmatpush1.bf16.msra.mxu0 0
  %205 = vmatprep.subr.bf16.mxu0 0
  %206 = vmatpush1.bf16.msra.mxu0 0
  %207 = vmatprep.subr.bf16.mxu0 0
  %208 = vmatpush1.bf16.msra.mxu0 %v189
  %209 = vmatprep.subr.bf16.mxu0 0
  %210 = vmatpush2.bf16.msra.mxu0 0
  %211 = vmatprep.subr.bf16.mxu0 0
  %212 = vmatpush2.bf16.msra.mxu0 0
  %213 = vmatprep.subr.bf16.mxu0 0
  %214 = vmatpush2.bf16.msra.mxu0 0
  %215 = vmatprep.subr.bf16.mxu0 0
  %216 = vmatpush2.bf16.msra.mxu0 0
  %217 = vmatprep.subr.bf16.mxu0 0
  %218 = vmatpush2.bf16.msra.mxu0 0
  %219 = vmatprep.subr.bf16.mxu0 0
  %220 = vmatpush2.bf16.msra.mxu0 0
  %221 = vmatprep.subr.bf16.mxu0 0
  %222 = vmatpush2.bf16.msra.mxu0 0
  %223 = vmatprep.subr.bf16.mxu0 0
  %224 = vmatpush2.bf16.msra.mxu0 0
  %225 = vmatprep.mubr.bf16.mxu0 0
  %226 = vmatmul.mubr.bf16.gmra.mxu0 %v191
  %v227 = vpop.f32.mrf.mxu0
  %v228 = vadd.f32 0.0, %v227
  %v229 = vpop.f32.mrf.mxu0
  %v230 = vpop.f32.mrf.mxu0
  %v231 = vadd.f32 0.0, %v230
  %v232 = vpop.f32.mrf.mxu0
  %233 = vdwg.mxu0
  %v235 = vsel %vm77, %v228, 0
  %v238 = vsel %vm77, %v231, 0
  %240 = vmatprep.subr.mxu0 0.0
  %241 = vmatpush1.msra.mxu0 0.0
  %242 = vmatprep.subr.mxu0 0.0
  %243 = vmatpush1.msra.mxu0 0.0
  %244 = vmatprep.subr.mxu0 0.0
  %245 = vmatpush1.msra.mxu0 0.0
  %246 = vmatprep.subr.mxu0 0.0
  %247 = vmatpush1.msra.mxu0 0.0
  %248 = vmatprep.subr.mxu0 0.0
  %249 = vmatpush1.msra.mxu0 0.0
  %250 = vmatprep.subr.mxu0 0.0
  %251 = vmatpush1.msra.mxu0 0.0
  %252 = vmatprep.subr.mxu0 0.0
  %253 = vmatpush1.msra.mxu0 0.0
  %254 = vmatprep.subr.mxu0 0.0
  %255 = vmatpush1.msra.mxu0 0.0
  %256 = vmatprep.subr.mxu0 0.0
  %257 = vmatpush1.msra.mxu0 0.0
  %258 = vmatprep.subr.mxu0 0.0
  %259 = vmatpush1.msra.mxu0 0.0
  %260 = vmatprep.subr.mxu0 0.0
  %261 = vmatpush1.msra.mxu0 0.0
  %262 = vmatprep.subr.mxu0 0.0
  %263 = vmatpush1.msra.mxu0 0.0
  %264 = vmatprep.subr.mxu0 0.0
  %265 = vmatpush1.msra.mxu0 0.0
  %266 = vmatprep.subr.mxu0 0.0
  %267 = vmatpush1.msra.mxu0 0.0
  %268 = vmatprep.subr.mxu0 0.0
  %269 = vmatpush1.msra.mxu0 0.0
  %270 = vmatprep.subr.mxu0 0.0
  %271 = vmatpush1.msra.mxu0 %v18
  %272 = vmatprep.subr.mxu0 0.0
  %273 = vmatpush2.msra.mxu0 0.0
  %274 = vmatprep.subr.mxu0 0.0
  %275 = vmatpush2.msra.mxu0 0.0
  %276 = vmatprep.subr.mxu0 0.0
  %277 = vmatpush2.msra.mxu0 0.0
  %278 = vmatprep.subr.mxu0 0.0
  %279 = vmatpush2.msra.mxu0 0.0
  %280 = vmatprep.subr.mxu0 0.0
  %281 = vmatpush2.msra.mxu0 0.0
  %282 = vmatprep.subr.mxu0 0.0
  %283 = vmatpush2.msra.mxu0 0.0
  %284 = vmatprep.subr.mxu0 0.0
  %285 = vmatpush2.msra.mxu0 0.0
  %286 = vmatprep.subr.mxu0 0.0
  %287 = vmatpush2.msra.mxu0 0.0
  %288 = vmatprep.subr.mxu0 0.0
  %289 = vmatpush2.msra.mxu0 0.0
  %290 = vmatprep.subr.mxu0 0.0
  %291 = vmatpush2.msra.mxu0 0.0
  %292 = vmatprep.subr.mxu0 0.0
  %293 = vmatpush2.msra.mxu0 0.0
  %294 = vmatprep.subr.mxu0 0.0
  %295 = vmatpush2.msra.mxu0 0.0
  %296 = vmatprep.subr.mxu0 0.0
  %297 = vmatpush2.msra.mxu0 0.0
  %298 = vmatprep.subr.mxu0 0.0
  %299 = vmatpush2.msra.mxu0 0.0
  %300 = vmatprep.subr.mxu0 0.0
  %301 = vmatpush2.msra.mxu0 0.0
  %302 = vmatprep.subr.mxu0 0.0
  %303 = vmatpush2.msra.mxu0 0.0
  %304 = vmatprep.mubr.f32.mxu0 0.0
  %305 = vmatmul.mubr.f32.gmra.mxu0 %v235
  %v306 = vpop.f32.mrf.mxu0
  %v307 = vadd.f32 %v75, %v306
  %v308 = vpop.f32.mrf.mxu0
  %309 = vmatprep.mubr.f32.mxu0 0.0
  %310 = vmatmul.mubr.f32.gmra.mxu0 %v238
  %v311 = vpop.f32.mrf.mxu0
  %v312 = vadd.f32 %v75, %v311
  %v313 = vpop.f32.mrf.mxu0
  %314 = vdwg.mxu0
  %v315 = vmul.f32 %v307, %v307
  %v316 = vmul.f32 %v312, %v312
  %v317 = vsel %vm161, %v315, 0.0
  %318 = vadd.xlane.f32.xlu0 %v317
  %v319 = vpop.xlane.xlu0 %318
  %v320 = vsel %vm161, %v316, 0.0
  %321 = vadd.xlane.f32.xlu0 %v320
  %v322 = vpop.xlane.xlu0 %321
  %v323 = vmax.f32 %v319, 1e-24
  %v324 = vmax.f32 %v322, 1e-24
  %v325 = vrsqrt.pop %v323
  %v326 = vrsqrt.pop %v324
  %v327 = vmul.f32 %v307, %v325
  %v328 = vmul.f32 %v312, %v326
  %v329 = vmax.f32 %v327, 0.0
  %v330 = vmax.f32 %v328, 0.0
  %v331 = vsel %vm161, %v329, 0.0
  %332 = vadd.xlane.f32.xlu0 %v331
  %v333 = vpop.xlane.xlu0 %332
  %v334 = vsel %vm161, %v330, 0.0
  %335 = vadd.xlane.f32.xlu0 %v334
  %v336 = vpop.xlane.xlu0 %335
  %v337 = vadd.f32 %v178, %v333
  %v338 = vadd.f32 %v181, %v336
  %v339 = vrcp.pop 64.0
  %v340 = vmul.f32 %v337, %v339
  %v341 = vmul.f32 %v338, %v339
  %v342 = vsub.f32 %v174, %v340
  %v343 = vsub.f32 %v175, %v341
  %v344 = vmul.f32 %v342, %v342
  %v345 = vmul.f32 %v343, %v343
  %v346 = vsel %vm161, %v344, 0.0
  %347 = vadd.xlane.f32.xlu0 %v346
  %v348 = vpop.xlane.xlu0 %347
  %v349 = vsel %vm161, %v345, 0.0
  %350 = vadd.xlane.f32.xlu0 %v349
  %v351 = vpop.xlane.xlu0 %350
  %v352 = vsub.f32 %v329, %v340
  %v353 = vsub.f32 %v330, %v341
  %v354 = vmul.f32 %v352, %v352
  %v355 = vmul.f32 %v353, %v353
  %v356 = vsel %vm161, %v354, 0.0
  %357 = vadd.xlane.f32.xlu0 %v356
  %v358 = vpop.xlane.xlu0 %357
  %v359 = vsel %vm161, %v355, 0.0
  %360 = vadd.xlane.f32.xlu0 %v359
  %v361 = vpop.xlane.xlu0 %360
  %v362 = vadd.f32 %v348, %v358
  %v363 = vadd.f32 %v351, %v361
  %v364 = vmul.f32 %v362, %v339
  %v365 = vmul.f32 %v363, %v339
  %v366 = vadd.f32 %v364, 1e-05
  %v367 = vadd.f32 %v365, 1e-05
  %v368 = vrsqrt.pop %v366
  %v369 = vrsqrt.pop %v367
  %v370 = vmul.f32 %v342, %v368
  %v371 = vmul.f32 %v343, %v369
  %372 = vst.msk [vmem:[%s4] sm:$0xff] %vm161, %v370
  %373 = vst.msk [vmem:[%s4 + $0x8] sm:$0xff] %vm161, %v371
  %v374 = vmul.f32 %v352, %v368
  %v375 = vmul.f32 %v353, %v369
  %s376 = scalar_lea.vmem %s4, 16
  %377 = vst.msk [vmem:[%s376] sm:$0xff] %vm161, %v374
  %378 = vst.msk [vmem:[%s376 + $0x8] sm:$0xff] %vm161, %v375
  // Predicated region
  $region18: #{glcn_encoder_forward.5} parent=0 // pred_check
    _
  $region19: #{glcn_encoder_forward.5} parent=0 // pred_check_branch
    %380 = sbr.rel (0) target = $region21
  $region20: #{glcn_encoder_forward.5} parent=0 // pred_region
    _
  $region21: #{glcn_encoder_forward.5} parent=0 // pred_fallthru
    _
  // Predicated region
  $region22: #{glcn_encoder_forward.5} parent=0 // pred_check
    _
  $region23: #{glcn_encoder_forward.5} parent=0 // pred_check_branch
    %382 = sbr.rel (0) target = $region25
  $region24: #{glcn_encoder_forward.5} parent=0 // pred_region
    _
  $region25: #{glcn_encoder_forward.5} parent=0 // pred_fallthru
    _

// kernel: glcn_encoder_forward.4
$region0: #{glcn_encoder_forward.4}
  #allocation0 [shape = 'u32[]', space=smem, size = 0x4, offset = 0x4, fixed_abs, tag = 'smem constant byte address 0x4 - core index']
  #allocation1 [shape = 'u32[144,128]{1,0:T(1,128)}', space=vmem, size = 0x12000, scoped, tag = 'internal scratch']
  %s0 = inlined_call_operand.vmem [shape: f32[2,16,8], index: 0, kind: input, shape index: {}, may-alias: {0,1}]
  %s1 = inlined_call_operand.vmem [shape: f32[2,16,8], index: 1, kind: input, shape index: {}, may-alias: {0,1}]
  %s2 = inlined_call_operand.vmem [shape: f32[8,32], index: 2, kind: input, shape index: {}]
  %s3 = inlined_call_operand.vmem [shape: f32[1,32], index: 3, kind: input, shape index: {}]
  %s4 = inlined_call_operand.vmem [shape: f32[2,16,16], index: 4, kind: output, shape index: {}]
  %s5 = sld [smem:[#allocation0]]
  $region49: #{glcn_encoder_forward.4} parent=0
    _
  %s7 = ssub.s32 1, %s5
  %s8 = scalar_select 0, %s7, %s5
  loop: start=0, step=1, limit=4
  $region2: #{glcn_encoder_forward.4} parent=0 // loop_pre_header
    _
  $region3: #{glcn_encoder_forward.4} parent=0 // loop_header
    %s10 = sphi 0, %s14
    %p11 = scmp.ge.s32.totalorder %s10, 4
    %s17 = sphi 0, %s29
    %s18 = sphi 0, %s25
    %s19 = sphi 0, %s17
    %s20 = sphi 0, %s18
    %s21 = sphi 0, %s19
    %s22 = sphi 0, %s20
    %s34 = sphi 0, %s36
    %s37 = sphi 0, %s34
    %s38 = sphi 0, %s37
    %s54 = sphi 0, %s38
    %s60 = sphi 0, %s62
    %s63 = sphi 0, %s60
    %s64 = sphi 0, %s63
    %s80 = sphi 0, %s64
    %s84 = sphi 0, %s84
    %s86 = sphi 0, %s84
    %s87 = sphi 0, %s86
    %s101 = sphi 0, %s87
    %s105 = sphi 0, %s105
    %s107 = sphi 0, %s105
    %s108 = sphi 0, %s107
    %s122 = sphi 0, %s108
    %s130 = sphi 0, %s132
    %s133 = sphi 0, %s130
    %s134 = sphi 0, %s133
    %s150 = sphi 0, %s134
  $region4: #{glcn_encoder_forward.4} parent=0 // loop_header_branch
    %13 = sbr.rel (%p11) target = $region8
  $region5: #{glcn_encoder_forward.4} parent=0 // loop_body
    %s15 = ssub.s32 %s10, 1
    %s16 = ssub.s32 %s10, 2
    %s23 = sadd.s32 1, %s18
    %p24 = scmp.ge.s32.totalorder %s23, 1
    %s25 = scalar_select %p24, 0, %s23
    %s26 = sadd.s32 1, %s17
    %s27 = scalar_select %p24, %s26, %s17
    %p28 = scmp.ge.s32.totalorder %s27, 2
    %s29 = scalar_select %p28, 0, %s27
    %s30 = ssub.s32 %s17, %s29
    %s31 = ssub.s32 %s18, %s25
    %s32 = sor.u32 %s30, %s31
    %p33 = scmp.eq.s32.totalorder %s32, 0
    %s35 = sadd.s32 %s34, 1
    %s36 = scalar_select %p33, %s34, %s35
    %p39 = pneg %p33
    %p40 = scmp.eq.s32.totalorder %s10, 1
    %p41 = por %p39, %p40
    %p42 = scmp.ne.s32.totalorder %s34, %s37
    %p43 = scmp.eq.s32.totalorder %s10, 0
    %p44 = por %p42, %p43
    %p45 = scmp.ne.s32.totalorder %s34, %s37
    %p46 = scmp.eq.s32.totalorder %s15, 1
    %p47 = por %p45, %p46
    %p48 = scmp.ne.s32.totalorder %s37, %s38
    %p49 = scmp.eq.s32.totalorder %s15, 0
    %p50 = por %p48, %p49
    %p51 = scmp.ne.s32.totalorder %s37, %s38
    %p52 = scmp.eq.s32.totalorder %s16, 1
    %p53 = por %p51, %p52
    %p55 = scmp.ne.s32.totalorder %s38, %s54
    %p56 = scmp.eq.s32.totalorder %s16, 0
    %p57 = por %p55, %p56
    %s58 = ssub.s32 %s17, %s29
    %p59 = scmp.eq.s32.totalorder %s58, 0
    %s61 = sadd.s32 %s60, 1
    %s62 = scalar_select %p59, %s60, %s61
    %p65 = pneg %p59
    %p66 = scmp.eq.s32.totalorder %s10, 1
    %p67 = por %p65, %p66
    %p68 = scmp.ne.s32.totalorder %s60, %s63
    %p69 = scmp.eq.s32.totalorder %s10, 0
    %p70 = por %p68, %p69
    %p71 = scmp.ne.s32.totalorder %s60, %s63
    %p72 = scmp.eq.s32.totalorder %s15, 1
    %p73 = por %p71, %p72
    %p74 = scmp.ne.s32.totalorder %s63, %s64
    %p75 = scmp.eq.s32.totalorder %s15, 0
    %p76 = por %p74, %p75
    %p77 = scmp.ne.s32.totalorder %s63, %s64
    %p78 = scmp.eq.s32.totalorder %s16, 1
    %p79 = por %p77, %p78
    %p81 = scmp.ne.s32.totalorder %s64, %s80
    %p82 = scmp.eq.s32.totalorder %s16, 0
    %p83 = por %p81, %p82
    %s85 = sadd.s32 %s84, 1
    %p88 = scmp.eq.s32.totalorder %s10, 1
    %p89 = scmp.ne.s32.totalorder %s84, %s86
    %p90 = scmp.eq.s32.totalorder %s10, 0
    %p91 = por %p89, %p90
    %p92 = scmp.ne.s32.totalorder %s84, %s86
    %p93 = scmp.eq.s32.totalorder %s15, 1
    %p94 = por %p92, %p93
    %p95 = scmp.ne.s32.totalorder %s86, %s87
    %p96 = scmp.eq.s32.totalorder %s15, 0
    %p97 = por %p95, %p96
    %p98 = scmp.ne.s32.totalorder %s86, %s87
    %p99 = scmp.eq.s32.totalorder %s16, 1
    %p100 = por %p98, %p99
    %p102 = scmp.ne.s32.totalorder %s87, %s101
    %p103 = scmp.eq.s32.totalorder %s16, 0
    %p104 = por %p102, %p103
    %s106 = sadd.s32 %s105, 1
    %p109 = scmp.eq.s32.totalorder %s10, 1
    %p110 = scmp.ne.s32.totalorder %s105, %s107
    %p111 = scmp.eq.s32.totalorder %s10, 0
    %p112 = por %p110, %p111
    %p113 = scmp.ne.s32.totalorder %s105, %s107
    %p114 = scmp.eq.s32.totalorder %s15, 1
    %p115 = por %p113, %p114
    %p116 = scmp.ne.s32.totalorder %s107, %s108
    %p117 = scmp.eq.s32.totalorder %s15, 0
    %p118 = por %p116, %p117
    %p119 = scmp.ne.s32.totalorder %s107, %s108
    %p120 = scmp.eq.s32.totalorder %s16, 1
    %p121 = por %p119, %p120
    %p123 = scmp.ne.s32.totalorder %s108, %s122
    %p124 = scmp.eq.s32.totalorder %s16, 0
    %p125 = por %p123, %p124
    %s126 = ssub.s32 %s17, %s29
    %s127 = ssub.s32 %s18, %s25
    %s128 = sor.u32 %s126, %s127
    %p129 = scmp.eq.s32.totalorder %s128, 0
    %s131 = sadd.s32 %s130, 1
    %s132 = scalar_select %p129, %s130, %s131
    %p135 = pneg %p129
    %p136 = scmp.eq.s32.totalorder %s10, 1
    %p137 = por %p135, %p136
    %p138 = scmp.ne.s32.totalorder %s130, %s133
    %p139 = scmp.eq.s32.totalorder %s10, 0
    %p140 = por %p138, %p139
    %p141 = scmp.ne.s32.totalorder %s130, %s133
    %p142 = scmp.eq.s32.totalorder %s15, 1
    %p143 = por %p141, %p142
    %p144 = scmp.ne.s32.totalorder %s133, %s134
    %p145 = scmp.eq.s32.totalorder %s15, 0
    %p146 = por %p144, %p145
    %p147 = scmp.ne.s32.totalorder %s133, %s134
    %p148 = scmp.eq.s32.totalorder %s16, 1
    %p149 = por %p147, %p148
    %p151 = scmp.ne.s32.totalorder %s134, %s150
    %p152 = scmp.eq.s32.totalorder %s16, 0
    %p153 = por %p151, %p152
    %p154 = scmp.le.s32.totalorder 1, %s10
    %p155 = scmp.lt.s32.totalorder %s10, 3
    %p156 = pnand %p154, %p155
    %p157 = pneg %p156
    // Predicated region
    $region9: #{glcn_encoder_forward.4} parent=5 // pred_check
      _
    $region10: #{glcn_encoder_forward.4} parent=5 // pred_check_branch
      %159 = sbr.rel (%p156) target = $region12
    $region11: #{glcn_encoder_forward.4} parent=5 // pred_region
      %s160 = ssub.s32 %s10, 1
      // Predicated region
      $region13: #{glcn_encoder_forward.4} parent=11 // pred_check
        %p161 = pneg %p97
      $region14: #{glcn_encoder_forward.4} parent=11 // pred_check_branch
        %163 = sbr.rel (%p161) target = $region16
      $region15: #{glcn_encoder_forward.4} parent=11 // pred_region
        _
      $region16: #{glcn_encoder_forward.4} parent=11 // pred_fallthru
        _
      // Predicated region
      $region17: #{glcn_encoder_forward.4} parent=11 // pred_check
        %p164 = pneg %p118
      $region18: #{glcn_encoder_forward.4} parent=11 // pred_check_branch
        %166 = sbr.rel (%p164) target = $region20
      $region19: #{glcn_encoder_forward.4} parent=11 // pred_region
        _
      $region20: #{glcn_encoder_forward.4} parent=11 // pred_fallthru
        _
    $region12: #{glcn_encoder_forward.4} parent=5 // pred_fallthru
      _
    %p167 = scmp.lt.s32.totalorder %s10, 2
    // Predicated region
    $region21: #{glcn_encoder_forward.4} parent=5 // pred_check
      %p168 = pneg %p167
    $region22: #{glcn_encoder_forward.4} parent=5 // pred_check_branch
      %170 = sbr.rel (%p168) target = $region24
    $region23: #{glcn_encoder_forward.4} parent=5 // pred_region
      // Predicated region
      $region25: #{glcn_encoder_forward.4} parent=23 // pred_check
        %p171 = pneg %p44
      $region26: #{glcn_encoder_forward.4} parent=23 // pred_check_branch
        %173 = sbr.rel (%p171) target = $region28
      $region27: #{glcn_encoder_forward.4} parent=23 // pred_region
        %s174 = smul.u32 2, %s18
        %p175 = scmp.lt.s32.totalorder %s17, 1
        %s176 = scalar_select %p175, %s17, 1
        %p177 = scmp.lt.s32.totalorder %s174, 1
        %s178 = scalar_select %p177, %s174, 1
        %s179 = smul.addr %s176, 2
        %s180 = sadd.s32 %s178, %s179
        %s181 = smul.addr %s180, 8
        %s182 = scalar_lea.vmem %s0, %s181
        %s183 = smul.u32 2, %s18
      $region28: #{glcn_encoder_forward.4} parent=23 // pred_fallthru
        _
      // Predicated region
      $region29: #{glcn_encoder_forward.4} parent=23 // pred_check
        %p184 = pneg %p70
      $region30: #{glcn_encoder_forward.4} parent=23 // pred_check_branch
        %186 = sbr.rel (%p184) target = $region32
      $region31: #{glcn_encoder_forward.4} parent=23 // pred_region
        %p187 = scmp.lt.s32.totalorder %s17, 1
        %s188 = scalar_select %p187, %s17, 1
        %s189 = smul.addr %s188, 2
        %s190 = smul.addr %s189, 8
        %s191 = scalar_lea.vmem %s1, %s190
      $region32: #{glcn_encoder_forward.4} parent=23 // pred_fallthru
        _
    $region24: #{glcn_encoder_forward.4} parent=5 // pred_fallthru
      _
    %p192 = scmp.le.s32.totalorder 1, %s10
    %p193 = scmp.lt.s32.totalorder %s10, 3
    %p194 = pnand %p192, %p193
    %p195 = pneg %p194
    // Predicated region
    $region33: #{glcn_encoder_forward.4} parent=5 // pred_check
      _
    $region34: #{glcn_encoder_forward.4} parent=5 // pred_check_branch
      %197 = sbr.rel (%p194) target = $region36
    $region35: #{glcn_encoder_forward.4} parent=5 // pred_region
      %s198 = ssub.s32 %s10, 1
      %s199 = smul.u32 2, %s20
      %p200 = scmp.lt.s32.totalorder %s19, 1
      %s201 = scalar_select %p200, %s19, 1
      %p202 = scmp.lt.s32.totalorder %s199, 1
      %s203 = scalar_select %p202, %s199, 1
      %s204 = smul.addr %s201, 2
      %s205 = sadd.s32 %s203, %s204
      %s206 = smul.addr %s205, 8
      %s207 = scalar_lea.vmem %s0, %s206
      %p208 = pneg %p50
      %p209 = pneg %p47
      %p210 = scmp.lt.s32.totalorder %s19, 1
      %s211 = scalar_select %p210, %s19, 1
      %s212 = smul.addr %s211, 2
      %s213 = smul.addr %s212, 8
      %s214 = scalar_lea.vmem %s1, %s213
      %p215 = pneg %p76
      %p216 = pneg %p73
      %p217 = pneg %p97
      %p218 = pneg %p94
      %p219 = pneg %p118
      %p220 = pneg %p115
      %p221 = pneg %p146
      %p222 = pneg %p143
      %s223 = smul.u32 2, %s20
      %p224 = scmp.lt.s32.totalorder %s19, 1
      %s225 = scalar_select %p224, %s19, 1
      %p226 = scmp.lt.s32.totalorder %s223, 1
      %s227 = scalar_select %p226, %s223, 1
      %s228 = smul.addr %s225, 2
      %s229 = sadd.s32 %s227, %s228
      %s230 = smul.addr %s229, 8
      %s231 = scalar_lea.vmem %s4, %s230
      %s232 = smul.u32 2, %s20
      %p233 = scmp.lt.s32.totalorder %s19, 1
      %s234 = scalar_select %p233, %s19, 1
      %p235 = scmp.lt.s32.totalorder %s232, 1
      %s236 = scalar_select %p235, %s232, 1
      %s237 = smul.addr %s234, 2
      %s238 = sadd.s32 %s236, %s237
      %s239 = smul.addr %s238, 8
      %s240 = scalar_lea.vmem %s0, %s239
      %s241 = smul.u32 2, %s20
      %p242 = scmp.lt.s32.totalorder %s19, 1
      %s243 = scalar_select %p242, %s19, 1
      %s244 = smul.addr %s243, 2
      %s245 = smul.addr %s244, 8
      %s246 = scalar_lea.vmem %s1, %s245
      %s247 = smul.u32 2, %s20
      %p248 = scmp.lt.s32.totalorder %s19, 1
      %s249 = scalar_select %p248, %s19, 1
      %p250 = scmp.lt.s32.totalorder %s247, 1
      %s251 = scalar_select %p250, %s247, 1
      %s252 = smul.addr %s249, 2
      %s253 = sadd.s32 %s251, %s252
      %s254 = smul.addr %s253, 8
      %s255 = scalar_lea.vmem %s4, %s254
      %s256 = smul.u32 2, %s20
      %v257 = vld [vmem:[%s240] sm:$0xff]
      %v258 = vld [vmem:[%s240 + $0x8] sm:$0xff]
      %v259 = vld [vmem:[%s246] sm:$0xff]
      %v260 = vld [vmem:[%s246 + $0x8] sm:$0xff]
      %v261 = vld [vmem:[%s2] sm:$0xff]
      %v262 = vld [vmem:[%s3] sm:$0x1]
      %vm263 = vcmask 64512
      %v265 = vsel %vm263, %v257, 0
      %v268 = vsel %vm263, %v258, 0
      %270 = vmatprep.subr.mxu0 0.0
      %271 = vmatpush1.msra.mxu0 0.0
      %272 = vmatprep.subr.mxu0 0.0
      %273 = vmatpush1.msra.mxu0 0.0
      %274 = vmatprep.subr.mxu0 0.0
      %275 = vmatpush1.msra.mxu0 0.0
      %276 = vmatprep.subr.mxu0 0.0
      %277 = vmatpush1.msra.mxu0 0.0
      %278 = vmatprep.subr.mxu0 0.0
      %279 = vmatpush1.msra.mxu0 0.0
      %280 = vmatprep.subr.mxu0 0.0
      %281 = vmatpush1.msra.mxu0 0.0
      %282 = vmatprep.subr.mxu0 0.0
      %283 = vmatpush1.msra.mxu0 0.0
      %284 = vmatprep.subr.mxu0 0.0
      %285 = vmatpush1.msra.mxu0 0.0
      %286 = vmatprep.subr.mxu0 0.0
      %287 = vmatpush1.msra.mxu0 0.0
      %288 = vmatprep.subr.mxu0 0.0
      %289 = vmatpush1.msra.mxu0 0.0
      %290 = vmatprep.subr.mxu0 0.0
      %291 = vmatpush1.msra.mxu0 0.0
      %292 = vmatprep.subr.mxu0 0.0
      %293 = vmatpush1.msra.mxu0 0.0
      %294 = vmatprep.subr.mxu0 0.0
      %295 = vmatpush1.msra.mxu0 0.0
      %296 = vmatprep.subr.mxu0 0.0
      %297 = vmatpush1.msra.mxu0 0.0
      %298 = vmatprep.subr.mxu0 0.0
      %299 = vmatpush1.msra.mxu0 0.0
      %300 = vmatprep.subr.mxu0 0.0
      %301 = vmatpush1.msra.mxu0 %v261
      %302 = vmatprep.subr.mxu0 0.0
      %303 = vmatpush2.msra.mxu0 0.0
      %304 = vmatprep.subr.mxu0 0.0
      %305 = vmatpush2.msra.mxu0 0.0
      %306 = vmatprep.subr.mxu0 0.0
      %307 = vmatpush2.msra.mxu0 0.0
      %308 = vmatprep.subr.mxu0 0.0
      %309 = vmatpush2.msra.mxu0 0.0
      %310 = vmatprep.subr.mxu0 0.0
      %311 = vmatpush2.msra.mxu0 0.0
      %312 = vmatprep.subr.mxu0 0.0
      %313 = vmatpush2.msra.mxu0 0.0
      %314 = vmatprep.subr.mxu0 0.0
      %315 = vmatpush2.msra.mxu0 0.0
      %316 = vmatprep.subr.mxu0 0.0
      %317 = vmatpush2.msra.mxu0 0.0
      %318 = vmatprep.subr.mxu0 0.0
      %319 = vmatpush2.msra.mxu0 0.0
      %320 = vmatprep.subr.mxu0 0.0
      %321 = vmatpush2.msra.mxu0 0.0
      %322 = vmatprep.subr.mxu0 0.0
      %323 = vmatpush2.msra.mxu0 0.0
      %324 = vmatprep.subr.mxu0 0.0
      %325 = vmatpush2.msra.mxu0 0.0
      %326 = vmatprep.subr.mxu0 0.0
      %327 = vmatpush2.msra.mxu0 0.0
      %328 = vmatprep.subr.mxu0 0.0
      %329 = vmatpush2.msra.mxu0 0.0
      %330 = vmatprep.subr.mxu0 0.0
      %331 = vmatpush2.msra.mxu0 0.0
      %332 = vmatprep.subr.mxu0 0.0
      %333 = vmatpush2.msra.mxu0 0.0
      %334 = vmatprep.mubr.f32.mxu0 0.0
      %335 = vmatmul.mubr.f32.gmra.mxu0 %v265
      %v336 = vpop.f32.mrf.mxu0
      %v337 = vadd.f32 0.0, %v336
      %v338 = vpop.f32.mrf.mxu0
      %339 = vmatprep.mubr.f32.mxu0 0.0
      %340 = vmatmul.mubr.f32.gmra.mxu0 %v268
      %v341 = vpop.f32.mrf.mxu0
      %v342 = vadd.f32 0.0, %v341
      %v343 = vpop.f32.mrf.mxu0
      %344 = vdwg.mxu0
      %v346 = vsel %vm263, %v259, 0
      %v349 = vsel %vm263, %v260, 0
      %351 = vmatprep.subr.mxu0 0.0
      %352 = vmatpush1.msra.mxu0 0.0
      %353 = vmatprep.subr.mxu0 0.0
      %354 = vmatpush1.msra.mxu0 0.0
      %355 = vmatprep.subr.mxu0 0.0
      %356 = vmatpush1.msra.mxu0 0.0
      %357 = vmatprep.subr.mxu0 0.0
      %358 = vmatpush1.msra.mxu0 0.0
      %359 = vmatprep.subr.mxu0 0.0
      %360 = vmatpush1.msra.mxu0 0.0
      %361 = vmatprep.subr.mxu0 0.0
      %362 = vmatpush1.msra.mxu0 0.0
      %363 = vmatprep.subr.mxu0 0.0
      %364 = vmatpush1.msra.mxu0 0.0
      %365 = vmatprep.subr.mxu0 0.0
      %366 = vmatpush1.msra.mxu0 0.0
      %367 = vmatprep.subr.mxu0 0.0
      %368 = vmatpush1.msra.mxu0 0.0
      %369 = vmatprep.subr.mxu0 0.0
      %370 = vmatpush1.msra.mxu0 0.0
      %371 = vmatprep.subr.mxu0 0.0
      %372 = vmatpush1.msra.mxu0 0.0
      %373 = vmatprep.subr.mxu0 0.0
      %374 = vmatpush1.msra.mxu0 0.0
      %375 = vmatprep.subr.mxu0 0.0
      %376 = vmatpush1.msra.mxu0 0.0
      %377 = vmatprep.subr.mxu0 0.0
      %378 = vmatpush1.msra.mxu0 0.0
      %379 = vmatprep.subr.mxu0 0.0
      %380 = vmatpush1.msra.mxu0 0.0
      %381 = vmatprep.subr.mxu0 0.0
      %382 = vmatpush1.msra.mxu0 %v261
      %383 = vmatprep.subr.mxu0 0.0
      %384 = vmatpush2.msra.mxu0 0.0
      %385 = vmatprep.subr.mxu0 0.0
      %386 = vmatpush2.msra.mxu0 0.0
      %387 = vmatprep.subr.mxu0 0.0
      %388 = vmatpush2.msra.mxu0 0.0
      %389 = vmatprep.subr.mxu0 0.0
      %390 = vmatpush2.msra.mxu0 0.0
      %391 = vmatprep.subr.mxu0 0.0
      %392 = vmatpush2.msra.mxu0 0.0
      %393 = vmatprep.subr.mxu0 0.0
      %394 = vmatpush2.msra.mxu0 0.0
      %395 = vmatprep.subr.mxu0 0.0
      %396 = vmatpush2.msra.mxu0 0.0
      %397 = vmatprep.subr.mxu0 0.0
      %398 = vmatpush2.msra.mxu0 0.0
      %399 = vmatprep.subr.mxu0 0.0
      %400 = vmatpush2.msra.mxu0 0.0
      %401 = vmatprep.subr.mxu0 0.0
      %402 = vmatpush2.msra.mxu0 0.0
      %403 = vmatprep.subr.mxu0 0.0
      %404 = vmatpush2.msra.mxu0 0.0
      %405 = vmatprep.subr.mxu0 0.0
      %406 = vmatpush2.msra.mxu0 0.0
      %407 = vmatprep.subr.mxu0 0.0
      %408 = vmatpush2.msra.mxu0 0.0
      %409 = vmatprep.subr.mxu0 0.0
      %410 = vmatpush2.msra.mxu0 0.0
      %411 = vmatprep.subr.mxu0 0.0
      %412 = vmatpush2.msra.mxu0 0.0
      %413 = vmatprep.subr.mxu0 0.0
      %414 = vmatpush2.msra.mxu0 0.0
      %415 = vmatprep.mubr.f32.mxu0 0.0
      %416 = vmatmul.mubr.f32.gmra.mxu0 %v346
      %v417 = vpop.f32.mrf.mxu0
      %v418 = vadd.f32 0.0, %v417
      %v419 = vpop.f32.mrf.mxu0
      %420 = vmatprep.mubr.f32.mxu0 0.0
      %421 = vmatmul.mubr.f32.gmra.mxu0 %v349
      %v422 = vpop.f32.mrf.mxu0
      %v423 = vadd.f32 0.0, %v422
      %v424 = vpop.f32.mrf.mxu0
      %425 = vdwg.mxu0
      %v428 = vcombine.high %v337, %v337
      %v430 = vunpack.c.l.s4 1966171168
      %v431 = vunpack.c.0.s8 %v430
      %v432 = vlaneseq
      %v433 = vshrl.u32 %v432, 7
      %v434 = vsub.s32 %v431, %v433
      %v435 = vrot.slane %v337, %v434
      %v437 = vunpack.c.l.s4 1966171168
      %v438 = vunpack.c.0.s8 %v437
      %v439 = vlaneseq
      %v440 = vshrl.u32 %v439, 7
      %v441 = vsub.s32 %v438, %v440
      %v442 = vrot.slane %v428, %v441
      %v443 = vcombine.high %v435, %v435
      %v444 = vcombine.high %v442, %v442
      %v446 = vunpack.c.l.s4 1966171168
      %v447 = vunpack.c.0.s8 %v446
      %v448 = vlaneseq
      %v449 = vshrl.u32 %v448, 7
      %v450 = vsub.s32 %v447, %v449
      %v451 = vrot.slane %v435, %v450
      %v453 = vunpack.c.l.s4 1966171168
      %v454 = vunpack.c.0.s8 %v453
      %v455 = vlaneseq
      %v456 = vshrl.u32 %v455, 7
      %v457 = vsub.s32 %v454, %v456
      %v458 = vrot.slane %v442, %v457
      %v460 = vunpack.c.l.s4 1966171168
      %v461 = vunpack.c.0.s8 %v460
      %v462 = vlaneseq
      %v463 = vshrl.u32 %v462, 7
      %v464 = vsub.s32 %v461, %v463
      %v465 = vrot.slane %v443, %v464
      %v467 = vunpack.c.l.s4 1966171168
      %v468 = vunpack.c.0.s8 %v467
      %v469 = vlaneseq
      %v470 = vshrl.u32 %v469, 7
      %v471 = vsub.s32 %v468, %v470
      %v472 = vrot.slane %v444, %v471
      %v473 = vcombine.high %v451, %v451
      %v474 = vcombine.high %v458, %v458
      %v475 = vcombine.high %v465, %v465
      %v476 = vcombine.high %v472, %v472
      %v477 = vcombine.high %v342, %v342
      %v479 = vunpack.c.l.s4 1966171168
      %v480 = vunpack.c.0.s8 %v479
      %v481 = vlaneseq
      %v482 = vshrl.u32 %v481, 7
      %v483 = vsub.s32 %v480, %v482
      %v484 = vrot.slane %v342, %v483
      %v486 = vunpack.c.l.s4 1966171168
      %v487 = vunpack.c.0.s8 %v486
      %v488 = vlaneseq
      %v489 = vshrl.u32 %v488, 7
      %v490 = vsub.s32 %v487, %v489
      %v491 = vrot.slane %v477, %v490
      %v492 = vcombine.high %v484, %v484
      %v493 = vcombine.high %v491, %v491
      %v495 = vunpack.c.l.s4 1966171168
      %v496 = vunpack.c.0.s8 %v495
      %v497 = vlaneseq
      %v498 = vshrl.u32 %v497, 7
      %v499 = vsub.s32 %v496, %v498
      %v500 = vrot.slane %v484, %v499
      %v502 = vunpack.c.l.s4 1966171168
      %v503 = vunpack.c.0.s8 %v502
      %v504 = vlaneseq
      %v505 = vshrl.u32 %v504, 7
      %v506 = vsub.s32 %v503, %v505
      %v507 = vrot.slane %v491, %v506
      %v509 = vunpack.c.l.s4 1966171168
      %v510 = vunpack.c.0.s8 %v509
      %v511 = vlaneseq
      %v512 = vshrl.u32 %v511, 7
      %v513 = vsub.s32 %v510, %v512
      %v514 = vrot.slane %v492, %v513
      %v516 = vunpack.c.l.s4 1966171168
      %v517 = vunpack.c.0.s8 %v516
      %v518 = vlaneseq
      %v519 = vshrl.u32 %v518, 7
      %v520 = vsub.s32 %v517, %v519
      %v521 = vrot.slane %v493, %v520
      %v522 = vcombine.high %v500, %v500
      %v523 = vcombine.high %v507, %v507
      %v524 = vcombine.high %v514, %v514
      %v525 = vcombine.high %v521, %v521
      %v526 = vlaneseq
      %v527 = vshrl.u32 %v526, 7
      %v528 = vsub.s32 0, %v527
      %v529 = vrot.slane %v451, %v528
      %v530 = vlaneseq
      %v531 = vshrl.u32 %v530, 7
      %v532 = vsub.s32 0, %v531
      %v533 = vrot.slane %v465, %v532
      %v534 = vlaneseq
      %v535 = vshrl.u32 %v534, 7
      %v536 = vsub.s32 0, %v535
      %v537 = vrot.slane %v473, %v536
      %v538 = vlaneseq
      %v539 = vshrl.u32 %v538, 7
      %v540 = vsub.s32 0, %v539
      %v541 = vrot.slane %v475, %v540
      %v542 = vlaneseq
      %v543 = vshrl.u32 %v542, 7
      %v544 = vsub.s32 0, %v543
      %v545 = vrot.slane %v458, %v544
      %v546 = vlaneseq
      %v547 = vshrl.u32 %v546, 7
      %v548 = vsub.s32 0, %v547
      %v549 = vrot.slane %v472, %v548
      %v550 = vlaneseq
      %v551 = vshrl.u32 %v550, 7
      %v552 = vsub.s32 0, %v551
      %v553 = vrot.slane %v474, %v552
      %v554 = vlaneseq
      %v555 = vshrl.u32 %v554, 7
      %v556 = vsub.s32 0, %v555
      %v557 = vrot.slane %v476, %v556
      %v558 = vlaneseq
      %v559 = vshrl.u32 %v558, 7
      %v560 = vsub.s32 0, %v559
      %v561 = vrot.slane %v500, %v560
      %v562 = vlaneseq
      %v563 = vshrl.u32 %v562, 7
      %v564 = vsub.s32 0, %v563
      %v565 = vrot.slane %v514, %v564
      %v566 = vlaneseq
      %v567 = vshrl.u32 %v566, 7
      %v568 = vsub.s32 0, %v567
      %v569 = vrot.slane %v522, %v568
      %v570 = vlaneseq
      %v571 = vshrl.u32 %v570, 7
      %v572 = vsub.s32 0, %v571
      %v573 = vrot.slane %v524, %v572
      %v574 = vlaneseq
      %v575 = vshrl.u32 %v574, 7
      %v576 = vsub.s32 0, %v575
      %v577 = vrot.slane %v507, %v576
      %v578 = vlaneseq
      %v579 = vshrl.u32 %v578, 7
      %v580 = vsub.s32 0, %v579
      %v581 = vrot.slane %v521, %v580
      %v582 = vlaneseq
      %v583 = vshrl.u32 %v582, 7
      %v584 = vsub.s32 0, %v583
      %v585 = vrot.slane %v523, %v584
      %v586 = vlaneseq
      %v587 = vshrl.u32 %v586, 7
      %v588 = vsub.s32 0, %v587
      %v589 = vrot.slane %v525, %v588
      %v606 = vsub.f32 %v529, %v418
      %v607 = vsub.f32 %v529, %v423
      %v608 = vsub.f32 %v533, %v418
      %v609 = vsub.f32 %v533, %v423
      %v610 = vsub.f32 %v537, %v418
      %v611 = vsub.f32 %v537, %v423
      %v612 = vsub.f32 %v541, %v418
      %v613 = vsub.f32 %v541, %v423
      %v614 = vsub.f32 %v545, %v418
      %v615 = vsub.f32 %v545, %v423
      %v616 = vsub.f32 %v549, %v418
      %v617 = vsub.f32 %v549, %v423
      %v618 = vsub.f32 %v553, %v418
      %v619 = vsub.f32 %v553, %v423
      %v620 = vsub.f32 %v557, %v418
      %v621 = vsub.f32 %v557, %v423
      %v622 = vsub.f32 %v561, %v418
      %v623 = vsub.f32 %v561, %v423
      %v624 = vsub.f32 %v565, %v418
      %v625 = vsub.f32 %v565, %v423
      %v626 = vsub.f32 %v569, %v418
      %v627 = vsub.f32 %v569, %v423
      %v628 = vsub.f32 %v573, %v418
      %v629 = vsub.f32 %v573, %v423
      %v630 = vsub.f32 %v577, %v418
      %v631 = vsub.f32 %v577, %v423
      %v632 = vsub.f32 %v581, %v418
      %v633 = vsub.f32 %v581, %v423
      %v634 = vsub.f32 %v585, %v418
      %v635 = vsub.f32 %v585, %v423
      %v636 = vsub.f32 %v589, %v418
      %v637 = vsub.f32 %v589, %v423
      %v638 = vand.u32 2147483647, %v606
      %v639 = vand.u32 2147483647, %v607
      %v640 = vand.u32 2147483647, %v608
      %v641 = vand.u32 2147483647, %v609
      %v642 = vand.u32 2147483647, %v610
      %v643 = vand.u32 2147483647, %v611
      %v644 = vand.u32 2147483647, %v612
      %v645 = vand.u32 2147483647, %v613
      %v646 = vand.u32 2147483647, %v614
      %v647 = vand.u32 2147483647, %v615
      %v648 = vand.u32 2147483647, %v616
      %v649 = vand.u32 2147483647, %v617
      %v650 = vand.u32 2147483647, %v618
      %v651 = vand.u32 2147483647, %v619
      %v652 = vand.u32 2147483647, %v620
      %v653 = vand.u32 2147483647, %v621
      %v654 = vand.u32 2147483647, %v622
      %v655 = vand.u32 2147483647, %v623
      %v656 = vand.u32 2147483647, %v624
      %v657 = vand.u32 2147483647, %v625
      %v658 = vand.u32 2147483647, %v626
      %v659 = vand.u32 2147483647, %v627
      %v660 = vand.u32 2147483647, %v628
      %v661 = vand.u32 2147483647, %v629
      %v662 = vand.u32 2147483647, %v630
      %v663 = vand.u32 2147483647, %v631
      %v664 = vand.u32 2147483647, %v632
      %v665 = vand.u32 2147483647, %v633
      %v666 = vand.u32 2147483647, %v634
      %v667 = vand.u32 2147483647, %v635
      %v668 = vand.u32 2147483647, %v636
      %v669 = vand.u32 2147483647, %v637
      %v671 = vlaneseq
      %v672 = vshrl.u32 %v671, 7
      %v673 = vsub.s32 0, %v672
      %v674 = vrot.slane %v262, %v673
      %v676 = vmul.f32 %v638, %v674
      %v677 = vmul.f32 %v639, %v674
      %v678 = vmul.f32 %v640, %v674
      %v679 = vmul.f32 %v641, %v674
      %v680 = vmul.f32 %v642, %v674
      %v681 = vmul.f32 %v643, %v674
      %v682 = vmul.f32 %v644, %v674
      %v683 = vmul.f32 %v645, %v674
      %v684 = vmul.f32 %v646, %v674
      %v685 = vmul.f32 %v647, %v674
      %v686 = vmul.f32 %v648, %v674
      %v687 = vmul.f32 %v649, %v674
      %v688 = vmul.f32 %v650, %v674
      %v689 = vmul.f32 %v651, %v674
      %v690 = vmul.f32 %v652, %v674
      %v691 = vmul.f32 %v653, %v674
      %v692 = vmul.f32 %v654, %v674
      %v693 = vmul.f32 %v655, %v674
      %v694 = vmul.f32 %v656, %v674
      %v695 = vmul.f32 %v657, %v674
      %v696 = vmul.f32 %v658, %v674
      %v697 = vmul.f32 %v659, %v674
      %v698 = vmul.f32 %v660, %v674
      %v699 = vmul.f32 %v661, %v674
      %v700 = vmul.f32 %v662, %v674
      %v701 = vmul.f32 %v663, %v674
      %v702 = vmul.f32 %v664, %v674
      %v703 = vmul.f32 %v665, %v674
      %v704 = vmul.f32 %v666, %v674
      %v705 = vmul.f32 %v667, %v674
      %v706 = vmul.f32 %v668, %v674
      %v707 = vmul.f32 %v669, %v674
      %vm708 = vcmask 261120
      %v709 = vsel %vm708, %v676, 0.0
      %710 = vadd.xlane.f32.xlu0 %v709
      %v711 = vpop.xlane.xlu0 %710
      %v712 = vsel %vm708, %v677, 0.0
      %713 = vadd.xlane.f32.xlu0 %v712
      %v714 = vpop.xlane.xlu0 %713
      %v715 = vsel %vm708, %v678, 0.0
      %716 = vadd.xlane.f32.xlu0 %v715
      %v717 = vpop.xlane.xlu0 %716
      %v718 = vsel %vm708, %v679, 0.0
      %719 = vadd.xlane.f32.xlu0 %v718
      %v720 = vpop.xlane.xlu0 %719
      %v721 = vsel %vm708, %v680, 0.0
      %722 = vadd.xlane.f32.xlu0 %v721
      %v723 = vpop.xlane.xlu0 %722
      %v724 = vsel %vm708, %v681, 0.0
      %725 = vadd.xlane.f32.xlu0 %v724
      %v726 = vpop.xlane.xlu0 %725
      %v727 = vsel %vm708, %v682, 0.0
      %728 = vadd.xlane.f32.xlu0 %v727
      %v729 = vpop.xlane.xlu0 %728
      %v730 = vsel %vm708, %v683, 0.0
      %731 = vadd.xlane.f32.xlu0 %v730
      %v732 = vpop.xlane.xlu0 %731
      %v733 = vsel %vm708, %v684, 0.0
      %734 = vadd.xlane.f32.xlu0 %v733
      %v735 = vpop.xlane.xlu0 %734
      %v736 = vsel %vm708, %v685, 0.0
      %737 = vadd.xlane.f32.xlu0 %v736
      %v738 = vpop.xlane.xlu0 %737
      %v739 = vsel %vm708, %v686, 0.0
      %740 = vadd.xlane.f32.xlu0 %v739
      %v741 = vpop.xlane.xlu0 %740
      %v742 = vsel %vm708, %v687, 0.0
      %743 = vadd.xlane.f32.xlu0 %v742
      %v744 = vpop.xlane.xlu0 %743
      %v745 = vsel %vm708, %v688, 0.0
      %746 = vadd.xlane.f32.xlu0 %v745
      %v747 = vpop.xlane.xlu0 %746
      %v748 = vsel %vm708, %v689, 0.0
      %749 = vadd.xlane.f32.xlu0 %v748
      %v750 = vpop.xlane.xlu0 %749
      %v751 = vsel %vm708, %v690, 0.0
      %752 = vadd.xlane.f32.xlu0 %v751
      %v753 = vpop.xlane.xlu0 %752
      %v754 = vsel %vm708, %v691, 0.0
      %755 = vadd.xlane.f32.xlu0 %v754
      %v756 = vpop.xlane.xlu0 %755
      %v757 = vsel %vm708, %v692, 0.0
      %758 = vadd.xlane.f32.xlu0 %v757
      %v759 = vpop.xlane.xlu0 %758
      %v760 = vsel %vm708, %v693, 0.0
      %761 = vadd.xlane.f32.xlu0 %v760
      %v762 = vpop.xlane.xlu0 %761
      %v763 = vsel %vm708, %v694, 0.0
      %764 = vadd.xlane.f32.xlu0 %v763
      %v765 = vpop.xlane.xlu0 %764
      %v766 = vsel %vm708, %v695, 0.0
      %767 = vadd.xlane.f32.xlu0 %v766
      %v768 = vpop.xlane.xlu0 %767
      %v769 = vsel %vm708, %v696, 0.0
      %770 = vadd.xlane.f32.xlu0 %v769
      %v771 = vpop.xlane.xlu0 %770
      %v772 = vsel %vm708, %v697, 0.0
      %773 = vadd.xlane.f32.xlu0 %v772
      %v774 = vpop.xlane.xlu0 %773
      %v775 = vsel %vm708, %v698, 0.0
      %776 = vadd.xlane.f32.xlu0 %v775
      %v777 = vpop.xlane.xlu0 %776
      %v778 = vsel %vm708, %v699, 0.0
      %779 = vadd.xlane.f32.xlu0 %v778
      %v780 = vpop.xlane.xlu0 %779
      %v781 = vsel %vm708, %v700, 0.0
      %782 = vadd.xlane.f32.xlu0 %v781
      %v783 = vpop.xlane.xlu0 %782
      %v784 = vsel %vm708, %v701, 0.0
      %785 = vadd.xlane.f32.xlu0 %v784
      %v786 = vpop.xlane.xlu0 %785
      %v787 = vsel %vm708, %v702, 0.0
      %788 = vadd.xlane.f32.xlu0 %v787
      %v789 = vpop.xlane.xlu0 %788
      %v790 = vsel %vm708, %v703, 0.0
      %791 = vadd.xlane.f32.xlu0 %v790
      %v792 = vpop.xlane.xlu0 %791
      %v793 = vsel %vm708, %v704, 0.0
      %794 = vadd.xlane.f32.xlu0 %v793
      %v795 = vpop.xlane.xlu0 %794
      %v796 = vsel %vm708, %v705, 0.0
      %797 = vadd.xlane.f32.xlu0 %v796
      %v798 = vpop.xlane.xlu0 %797
      %v799 = vsel %vm708, %v706, 0.0
      %800 = vadd.xlane.f32.xlu0 %v799
      %v801 = vpop.xlane.xlu0 %800
      %v802 = vsel %vm708, %v707, 0.0
      %803 = vadd.xlane.f32.xlu0 %v802
      %v804 = vpop.xlane.xlu0 %803
      %v805 = vmax.f32 %v711, 0.0
      %v806 = vmax.f32 %v714, 0.0
      %v807 = vmax.f32 %v717, 0.0
      %v808 = vmax.f32 %v720, 0.0
      %v809 = vmax.f32 %v723, 0.0
      %v810 = vmax.f32 %v726, 0.0
      %v811 = vmax.f32 %v729, 0.0
      %v812 = vmax.f32 %v732, 0.0
      %v813 = vmax.f32 %v735, 0.0
      %v814 = vmax.f32 %v738, 0.0
      %v815 = vmax.f32 %v741, 0.0
      %v816 = vmax.f32 %v744, 0.0
      %v817 = vmax.f32 %v747, 0.0
      %v818 = vmax.f32 %v750, 0.0
      %v819 = vmax.f32 %v753, 0.0
      %v820 = vmax.f32 %v756, 0.0
      %v821 = vmax.f32 %v759, 0.0
      %v822 = vmax.f32 %v762, 0.0
      %v823 = vmax.f32 %v765, 0.0
      %v824 = vmax.f32 %v768, 0.0
      %v825 = vmax.f32 %v771, 0.0
      %v826 = vmax.f32 %v774, 0.0
      %v827 = vmax.f32 %v777, 0.0
      %v828 = vmax.f32 %v780, 0.0
      %v829 = vmax.f32 %v783, 0.0
      %v830 = vmax.f32 %v786, 0.0
      %v831 = vmax.f32 %v789, 0.0
      %v832 = vmax.f32 %v792, 0.0
      %v833 = vmax.f32 %v795, 0.0
      %v834 = vmax.f32 %v798, 0.0
      %v835 = vmax.f32 %v801, 0.0
      %v836 = vmax.f32 %v804, 0.0
      %v869 = vlaneseq
      %v870 = vand.u32 %v869, 127
      %v871 = vlaneseq
      %v872 = vshrl.u32 %v871, 7
      %v873 = vsub.s32 %v870, %v872
      %v874 = vrot.slane %v805, %v873
      %v875 = vadd.s32 %v870, 4294967288
      %v876 = vlaneseq
      %v877 = vshrl.u32 %v876, 7
      %v878 = vsub.s32 %v875, %v877
      %v879 = vrot.slane %v806, %v878
      %vm880 = vcmask 130112
      %v881 = vsel %vm880, %v879, %v874
      %v882 = vlaneseq
      %v883 = vshrl.u32 %v882, 7
      %v884 = vsub.s32 %v870, %v883
      %v885 = vrot.slane %v807, %v884
      %v886 = vlaneseq
      %v887 = vshrl.u32 %v886, 7
      %v888 = vsub.s32 %v875, %v887
      %v889 = vrot.slane %v808, %v888
      %v890 = vsel %vm880, %v889, %v885
      %v891 = vlaneseq
      %v892 = vshrl.u32 %v891, 7
      %v893 = vsub.s32 %v870, %v892
      %v894 = vrot.slane %v809, %v893
      %v895 = vlaneseq
      %v896 = vshrl.u32 %v895, 7
      %v897 = vsub.s32 %v875, %v896
      %v898 = vrot.slane %v810, %v897
      %v899 = vsel %vm880, %v898, %v894
      %v900 = vlaneseq
      %v901 = vshrl.u32 %v900, 7
      %v902 = vsub.s32 %v870, %v901
      %v903 = vrot.slane %v811, %v902
      %v904 = vlaneseq
      %v905 = vshrl.u32 %v904, 7
      %v906 = vsub.s32 %v875, %v905
      %v907 = vrot.slane %v812, %v906
      %v908 = vsel %vm880, %v907, %v903
      %v909 = vlaneseq
      %v910 = vshrl.u32 %v909, 7
      %v911 = vsub.s32 %v870, %v910
      %v912 = vrot.slane %v813, %v911
      %v913 = vlaneseq
      %v914 = vshrl.u32 %v913, 7
      %v915 = vsub.s32 %v875, %v914
      %v916 = vrot.slane %v814, %v915
      %v917 = vsel %vm880, %v916, %v912
      %v918 = vlaneseq
      %v919 = vshrl.u32 %v918, 7
      %v920 = vsub.s32 %v870, %v919
      %v921 = vrot.slane %v815, %v920
      %v922 = vlaneseq
      %v923 = vshrl.u32 %v922, 7
      %v924 = vsub.s32 %v875, %v923
      %v925 = vrot.slane %v816, %v924
      %v926 = vsel %vm880, %v925, %v921
      %v927 = vlaneseq
      %v928 = vshrl.u32 %v927, 7
      %v929 = vsub.s32 %v870, %v928
      %v930 = vrot.slane %v817, %v929
      %v931 = vlaneseq
      %v932 = vshrl.u32 %v931, 7
      %v933 = vsub.s32 %v875, %v932
      %v934 = vrot.slane %v818, %v933
      %v935 = vsel %vm880, %v934, %v930
      %v936 = vlaneseq
      %v937 = vshrl.u32 %v936, 7
      %v938 = vsub.s32 %v870, %v937
      %v939 = vrot.slane %v819, %v938
      %v940 = vlaneseq
      %v941 = vshrl.u32 %v940, 7
      %v942 = vsub.s32 %v875, %v941
      %v943 = vrot.slane %v820, %v942
      %v944 = vsel %vm880, %v943, %v939
      %v945 = vlaneseq
      %v946 = vshrl.u32 %v945, 7
      %v947 = vsub.s32 %v870, %v946
      %v948 = vrot.slane %v821, %v947
      %v949 = vlaneseq
      %v950 = vshrl.u32 %v949, 7
      %v951 = vsub.s32 %v875, %v950
      %v952 = vrot.slane %v822, %v951
      %v953 = vsel %vm880, %v952, %v948
      %v954 = vlaneseq
      %v955 = vshrl.u32 %v954, 7
      %v956 = vsub.s32 %v870, %v955
      %v957 = vrot.slane %v823, %v956
      %v958 = vlaneseq
      %v959 = vshrl.u32 %v958, 7
      %v960 = vsub.s32 %v875, %v959
      %v961 = vrot.slane %v824, %v960
      %v962 = vsel %vm880, %v961, %v957
      %v963 = vlaneseq
      %v964 = vshrl.u32 %v963, 7
      %v965 = vsub.s32 %v870, %v964
      %v966 = vrot.slane %v825, %v965
      %v967 = vlaneseq
      %v968 = vshrl.u32 %v967, 7
      %v969 = vsub.s32 %v875, %v968
      %v970 = vrot.slane %v826, %v969
      %v971 = vsel %vm880, %v970, %v966
      %v972 = vlaneseq
      %v973 = vshrl.u32 %v972, 7
      %v974 = vsub.s32 %v870, %v973
      %v975 = vrot.slane %v827, %v974
      %v976 = vlaneseq
      %v977 = vshrl.u32 %v976, 7
      %v978 = vsub.s32 %v875, %v977
      %v979 = vrot.slane %v828, %v978
      %v980 = vsel %vm880, %v979, %v975
      %v981 = vlaneseq
      %v982 = vshrl.u32 %v981, 7
      %v983 = vsub.s32 %v870, %v982
      %v984 = vrot.slane %v829, %v983
      %v985 = vlaneseq
      %v986 = vshrl.u32 %v985, 7
      %v987 = vsub.s32 %v875, %v986
      %v988 = vrot.slane %v830, %v987
      %v989 = vsel %vm880, %v988, %v984
      %v990 = vlaneseq
      %v991 = vshrl.u32 %v990, 7
      %v992 = vsub.s32 %v870, %v991
      %v993 = vrot.slane %v831, %v992
      %v994 = vlaneseq
      %v995 = vshrl.u32 %v994, 7
      %v996 = vsub.s32 %v875, %v995
      %v997 = vrot.slane %v832, %v996
      %v998 = vsel %vm880, %v997, %v993
      %v999 = vlaneseq
      %v1000 = vshrl.u32 %v999, 7
      %v1001 = vsub.s32 %v870, %v1000
      %v1002 = vrot.slane %v833, %v1001
      %v1003 = vlaneseq
      %v1004 = vshrl.u32 %v1003, 7
      %v1005 = vsub.s32 %v875, %v1004
      %v1006 = vrot.slane %v834, %v1005
      %v1007 = vsel %vm880, %v1006, %v1002
      %v1008 = vlaneseq
      %v1009 = vshrl.u32 %v1008, 7
      %v1010 = vsub.s32 %v870, %v1009
      %v1011 = vrot.slane %v835, %v1010
      %v1012 = vlaneseq
      %v1013 = vshrl.u32 %v1012, 7
      %v1014 = vsub.s32 %v875, %v1013
      %v1015 = vrot.slane %v836, %v1014
      %v1016 = vsel %vm880, %v1015, %v1011
      %vm1017 = vcmask 1041409
      %v1018 = vsel %vm1017, %v890, %v881
      %vm1019 = vcmask 1042434
      %v1020 = vsel %vm1019, %v899, %v1018
      %vm1021 = vcmask 1043459
      %v1022 = vsel %vm1021, %v908, %v1020
      %vm1023 = vcmask 1044484
      %v1024 = vsel %vm1023, %v917, %v1022
      %vm1025 = vcmask 1045509
      %v1026 = vsel %vm1025, %v926, %v1024
      %vm1027 = vcmask 1046534
      %v1028 = vsel %vm1027, %v935, %v1026
      %vm1029 = vcmask 1047559
      %v1030 = vsel %vm1029, %v944, %v1028
      %v1031 = vsel %vm1017, %v962, %v953
      %v1032 = vsel %vm1019, %v971, %v1031
      %v1033 = vsel %vm1021, %v980, %v1032
      %v1034 = vsel %vm1023, %v989, %v1033
      %v1035 = vsel %vm1025, %v998, %v1034
      %v1036 = vsel %vm1027, %v1007, %v1035
      %v1037 = vsel %vm1029, %v1016, %v1036
      %vm1040 = vcmask 130048
      %v1041 = vsel %vm1040, %v1030, -inf
      %1042 = vmax.xlane.f32.xlu0 %v1041
      %v1043 = vpop.xlane.xlu0 %1042
      %v1044 = vsel %vm1040, %v1037, -inf
      %1045 = vmax.xlane.f32.xlu0 %v1044
      %v1046 = vpop.xlane.xlu0 %1045
      %v1049 = vlaneseq
      %v1050 = vshrl.u32 %v1049, 7
      %v1051 = vsub.s32 0, %v1050
      %v1052 = vrot.slane %v1043, %v1051
      %v1053 = vlaneseq
      %v1054 = vshrl.u32 %v1053, 7
      %v1055 = vsub.s32 1, %v1054
      %v1056 = vrot.slane %v1043, %v1055
      %v1057 = vlaneseq
      %v1058 = vshrl.u32 %v1057, 7
      %v1059 = vsub.s32 2, %v1058
      %v1060 = vrot.slane %v1043, %v1059
      %v1061 = vlaneseq
      %v1062 = vshrl.u32 %v1061, 7
      %v1063 = vsub.s32 3, %v1062
      %v1064 = vrot.slane %v1043, %v1063
      %v1065 = vlaneseq
      %v1066 = vshrl.u32 %v1065, 7
      %v1067 = vsub.s32 4, %v1066
      %v1068 = vrot.slane %v1043, %v1067
      %v1069 = vlaneseq
      %v1070 = vshrl.u32 %v1069, 7
      %v1071 = vsub.s32 5, %v1070
      %v1072 = vrot.slane %v1043, %v1071
      %v1073 = vlaneseq
      %v1074 = vshrl.u32 %v1073, 7
      %v1075 = vsub.s32 6, %v1074
      %v1076 = vrot.slane %v1043, %v1075
      %v1077 = vlaneseq
      %v1078 = vshrl.u32 %v1077, 7
      %v1079 = vsub.s32 7, %v1078
      %v1080 = vrot.slane %v1043, %v1079
      %v1081 = vlaneseq
      %v1082 = vshrl.u32 %v1081, 7
      %v1083 = vsub.s32 0, %v1082
      %v1084 = vrot.slane %v1046, %v1083
      %v1085 = vlaneseq
      %v1086 = vshrl.u32 %v1085, 7
      %v1087 = vsub.s32 1, %v1086
      %v1088 = vrot.slane %v1046, %v1087
      %v1089 = vlaneseq
      %v1090 = vshrl.u32 %v1089, 7
      %v1091 = vsub.s32 2, %v1090
      %v1092 = vrot.slane %v1046, %v1091
      %v1093 = vlaneseq
      %v1094 = vshrl.u32 %v1093, 7
      %v1095 = vsub.s32 3, %v1094
      %v1096 = vrot.slane %v1046, %v1095
      %v1097 = vlaneseq
      %v1098 = vshrl.u32 %v1097, 7
      %v1099 = vsub.s32 4, %v1098
      %v1100 = vrot.slane %v1046, %v1099
      %v1101 = vlaneseq
      %v1102 = vshrl.u32 %v1101, 7
      %v1103 = vsub.s32 5, %v1102
      %v1104 = vrot.slane %v1046, %v1103
      %v1105 = vlaneseq
      %v1106 = vshrl.u32 %v1105, 7
      %v1107 = vsub.s32 6, %v1106
      %v1108 = vrot.slane %v1046, %v1107
      %v1109 = vlaneseq
      %v1110 = vshrl.u32 %v1109, 7
      %v1111 = vsub.s32 7, %v1110
      %v1112 = vrot.slane %v1046, %v1111
      %v1129 = vsub.f32 %v805, %v1052
      %v1130 = vsub.f32 %v806, %v1052
      %v1131 = vsub.f32 %v807, %v1056
      %v1132 = vsub.f32 %v808, %v1056
      %v1133 = vsub.f32 %v809, %v1060
      %v1134 = vsub.f32 %v810, %v1060
      %v1135 = vsub.f32 %v811, %v1064
      %v1136 = vsub.f32 %v812, %v1064
      %v1137 = vsub.f32 %v813, %v1068
      %v1138 = vsub.f32 %v814, %v1068
      %v1139 = vsub.f32 %v815, %v1072
      %v1140 = vsub.f32 %v816, %v1072
      %v1141 = vsub.f32 %v817, %v1076
      %v1142 = vsub.f32 %v818, %v1076
      %v1143 = vsub.f32 %v819, %v1080
      %v1144 = vsub.f32 %v820, %v1080
      %v1145 = vsub.f32 %v821, %v1084
      %v1146 = vsub.f32 %v822, %v1084
      %v1147 = vsub.f32 %v823, %v1088
      %v1148 = vsub.f32 %v824, %v1088
      %v1149 = vsub.f32 %v825, %v1092
      %v1150 = vsub.f32 %v826, %v1092
      %v1151 = vsub.f32 %v827, %v1096
      %v1152 = vsub.f32 %v828, %v1096
      %v1153 = vsub.f32 %v829, %v1100
      %v1154 = vsub.f32 %v830, %v1100
      %v1155 = vsub.f32 %v831, %v1104
      %v1156 = vsub.f32 %v832, %v1104
      %v1157 = vsub.f32 %v833, %v1108
      %v1158 = vsub.f32 %v834, %v1108
      %v1159 = vsub.f32 %v835, %v1112
      %v1160 = vsub.f32 %v836, %v1112
      %v1161 = vmul.f32 %v1129, 1.442695
      %v1162 = vpow.pop %v1161
      %v1163 = vmul.f32 %v1130, 1.442695
      %v1164 = vpow.pop %v1163
      %v1165 = vmul.f32 %v1131, 1.442695
      %v1166 = vpow.pop %v1165
      %v1167 = vmul.f32 %v1132, 1.442695
      %v1168 = vpow.pop %v1167
      %v1169 = vmul.f32 %v1133, 1.442695
      %v1170 = vpow.pop %v1169
      %v1171 = vmul.f32 %v1134, 1.442695
      %v1172 = vpow.pop %v1171
      %v1173 = vmul.f32 %v1135, 1.442695
      %v1174 = vpow.pop %v1173
      %v1175 = vmul.f32 %v1136, 1.442695
      %v1176 = vpow.pop %v1175
      %v1177 = vmul.f32 %v1137, 1.442695
      %v1178 = vpow.pop %v1177
      %v1179 = vmul.f32 %v1138, 1.442695
      %v1180 = vpow.pop %v1179
      %v1181 = vmul.f32 %v1139, 1.442695
      %v1182 = vpow.pop %v1181
      %v1183 = vmul.f32 %v1140, 1.442695
      %v1184 = vpow.pop %v1183
      %v1185 = vmul.f32 %v1141, 1.442695
      %v1186 = vpow.pop %v1185
      %v1187 = vmul.f32 %v1142, 1.442695
      %v1188 = vpow.pop %v1187
      %v1189 = vmul.f32 %v1143, 1.442695
      %v1190 = vpow.pop %v1189
      %v1191 = vmul.f32 %v1144, 1.442695
      %v1192 = vpow.pop %v1191
      %v1193 = vmul.f32 %v1145, 1.442695
      %v1194 = vpow.pop %v1193
      %v1195 = vmul.f32 %v1146, 1.442695
      %v1196 = vpow.pop %v1195
      %v1197 = vmul.f32 %v1147, 1.442695
      %v1198 = vpow.pop %v1197
      %v1199 = vmul.f32 %v1148, 1.442695
      %v1200 = vpow.pop %v1199
      %v1201 = vmul.f32 %v1149, 1.442695
      %v1202 = vpow.pop %v1201
      %v1203 = vmul.f32 %v1150, 1.442695
      %v1204 = vpow.pop %v1203
      %v1205 = vmul.f32 %v1151, 1.442695
      %v1206 = vpow.pop %v1205
      %v1207 = vmul.f32 %v1152, 1.442695
      %v1208 = vpow.pop %v1207
      %v1209 = vmul.f32 %v1153, 1.442695
      %v1210 = vpow.pop %v1209
      %v1211 = vmul.f32 %v1154, 1.442695
      %v1212 = vpow.pop %v1211
      %v1213 = vmul.f32 %v1155, 1.442695
      %v1214 = vpow.pop %v1213
      %v1215 = vmul.f32 %v1156, 1.442695
      %v1216 = vpow.pop %v1215
      %v1217 = vmul.f32 %v1157, 1.442695
      %v1218 = vpow.pop %v1217
      %v1219 = vmul.f32 %v1158, 1.442695
      %v1220 = vpow.pop %v1219
      %v1221 = vmul.f32 %v1159, 1.442695
      %v1222 = vpow.pop %v1221
      %v1223 = vmul.f32 %v1160, 1.442695
      %v1224 = vpow.pop %v1223
      %1257 = vset.pattern.permute.xlu0 0
      %1258 = vperm.xlu0 %1257, %v1162
      %v1259 = vpop.permute.xlu0 %1258
      %1260 = vset.pattern.permute.xlu0 0
      %1261 = vperm.xlu0 %1260, %v1164
      %v1262 = vpop.permute.xlu0 %1261
      %1263 = vset.pattern.permute.xlu0 0
      %1264 = vperm.xlu0 %1263, %v1166
      %v1265 = vpop.permute.xlu0 %1264
      %1266 = vset.pattern.permute.xlu0 0
      %1267 = vperm.xlu0 %1266, %v1168
      %v1268 = vpop.permute.xlu0 %1267
      %1269 = vset.pattern.permute.xlu0 0
      %1270 = vperm.xlu0 %1269, %v1170
      %v1271 = vpop.permute.xlu0 %1270
      %1272 = vset.pattern.permute.xlu0 0
      %1273 = vperm.xlu0 %1272, %v1172
      %v1274 = vpop.permute.xlu0 %1273
      %1275 = vset.pattern.permute.xlu0 0
      %1276 = vperm.xlu0 %1275, %v1174
      %v1277 = vpop.permute.xlu0 %1276
      %1278 = vset.pattern.permute.xlu0 0
      %1279 = vperm.xlu0 %1278, %v1176
      %v1280 = vpop.permute.xlu0 %1279
      %1281 = vset.pattern.permute.xlu0 0
      %1282 = vperm.xlu0 %1281, %v1178
      %v1283 = vpop.permute.xlu0 %1282
      %1284 = vset.pattern.permute.xlu0 0
      %1285 = vperm.xlu0 %1284, %v1180
      %v1286 = vpop.permute.xlu0 %1285
      %1287 = vset.pattern.permute.xlu0 0
      %1288 = vperm.xlu0 %1287, %v1182
      %v1289 = vpop.permute.xlu0 %1288
      %1290 = vset.pattern.permute.xlu0 0
      %1291 = vperm.xlu0 %1290, %v1184
      %v1292 = vpop.permute.xlu0 %1291
      %1293 = vset.pattern.permute.xlu0 0
      %1294 = vperm.xlu0 %1293, %v1186
      %v1295 = vpop.permute.xlu0 %1294
      %1296 = vset.pattern.permute.xlu0 0
      %1297 = vperm.xlu0 %1296, %v1188
      %v1298 = vpop.permute.xlu0 %1297
      %1299 = vset.pattern.permute.xlu0 0
      %1300 = vperm.xlu0 %1299, %v1190
      %v1301 = vpop.permute.xlu0 %1300
      %1302 = vset.pattern.permute.xlu0 0
      %1303 = vperm.xlu0 %1302, %v1192
      %v1304 = vpop.permute.xlu0 %1303
      %1305 = vset.pattern.permute.xlu0 0
      %1306 = vperm.xlu0 %1305, %v1194
      %v1307 = vpop.permute.xlu0 %1306
      %1308 = vset.pattern.permute.xlu0 0
      %1309 = vperm.xlu0 %1308, %v1196
      %v1310 = vpop.permute.xlu0 %1309
      %1311 = vset.pattern.permute.xlu0 0
      %1312 = vperm.xlu0 %1311, %v1198
      %v1313 = vpop.permute.xlu0 %1312
      %1314 = vset.pattern.permute.xlu0 0
      %1315 = vperm.xlu0 %1314, %v1200
      %v1316 = vpop.permute.xlu0 %1315
      %1317 = vset.pattern.permute.xlu0 0
      %1318 = vperm.xlu0 %1317, %v1202
      %v1319 = vpop.permute.xlu0 %1318
      %1320 = vset.pattern.permute.xlu0 0
      %1321 = vperm.xlu0 %1320, %v1204
      %v1322 = vpop.permute.xlu0 %1321
      %1323 = vset.pattern.permute.xlu0 0
      %1324 = vperm.xlu0 %1323, %v1206
      %v1325 = vpop.permute.xlu0 %1324
      %1326 = vset.pattern.permute.xlu0 0
      %1327 = vperm.xlu0 %1326, %v1208
      %v1328 = vpop.permute.xlu0 %1327
      %1329 = vset.pattern.permute.xlu0 0
      %1330 = vperm.xlu0 %1329, %v1210
      %v1331 = vpop.permute.xlu0 %1330
      %1332 = vset.pattern.permute.xlu0 0
      %1333 = vperm.xlu0 %1332, %v1212
      %v1334 = vpop.permute.xlu0 %1333
      %1335 = vset.pattern.permute.xlu0 0
      %1336 = vperm.xlu0 %1335, %v1214
      %v1337 = vpop.permute.xlu0 %1336
      %1338 = vset.pattern.permute.xlu0 0
      %1339 = vperm.xlu0 %1338, %v1216
      %v1340 = vpop.permute.xlu0 %1339
      %1341 = vset.pattern.permute.xlu0 0
      %1342 = vperm.xlu0 %1341, %v1218
      %v1343 = vpop.permute.xlu0 %1342
      %1344 = vset.pattern.permute.xlu0 0
      %1345 = vperm.xlu0 %1344, %v1220
      %v1346 = vpop.permute.xlu0 %1345
      %1347 = vset.pattern.permute.xlu0 0
      %1348 = vperm.xlu0 %1347, %v1222
      %v1349 = vpop.permute.xlu0 %1348
      %1350 = vset.pattern.permute.xlu0 0
      %1351 = vperm.xlu0 %1350, %v1224
      %v1352 = vpop.permute.xlu0 %1351
      %v1353 = vlaneseq
      %v1354 = vshrl.u32 %v1353, 7
      %v1355 = vsub.s32 %v870, %v1354
      %v1356 = vrot.slane %v1259, %v1355
      %v1357 = vlaneseq
      %v1358 = vshrl.u32 %v1357, 7
      %v1359 = vsub.s32 %v875, %v1358
      %v1360 = vrot.slane %v1262, %v1359
      %v1361 = vsel %vm880, %v1360, %v1356
      %v1362 = vlaneseq
      %v1363 = vshrl.u32 %v1362, 7
      %v1364 = vsub.s32 %v870, %v1363
      %v1365 = vrot.slane %v1265, %v1364
      %v1366 = vlaneseq
      %v1367 = vshrl.u32 %v1366, 7
      %v1368 = vsub.s32 %v875, %v1367
      %v1369 = vrot.slane %v1268, %v1368
      %v1370 = vsel %vm880, %v1369, %v1365
      %v1371 = vlaneseq
      %v1372 = vshrl.u32 %v1371, 7
      %v1373 = vsub.s32 %v870, %v1372
      %v1374 = vrot.slane %v1271, %v1373
      %v1375 = vlaneseq
      %v1376 = vshrl.u32 %v1375, 7
      %v1377 = vsub.s32 %v875, %v1376
      %v1378 = vrot.slane %v1274, %v1377
      %v1379 = vsel %vm880, %v1378, %v1374
      %v1380 = vlaneseq
      %v1381 = vshrl.u32 %v1380, 7
      %v1382 = vsub.s32 %v870, %v1381
      %v1383 = vrot.slane %v1277, %v1382
      %v1384 = vlaneseq
      %v1385 = vshrl.u32 %v1384, 7
      %v1386 = vsub.s32 %v875, %v1385
      %v1387 = vrot.slane %v1280, %v1386
      %v1388 = vsel %vm880, %v1387, %v1383
      %v1389 = vlaneseq
      %v1390 = vshrl.u32 %v1389, 7
      %v1391 = vsub.s32 %v870, %v1390
      %v1392 = vrot.slane %v1283, %v1391
      %v1393 = vlaneseq
      %v1394 = vshrl.u32 %v1393, 7
      %v1395 = vsub.s32 %v875, %v1394
      %v1396 = vrot.slane %v1286, %v1395
      %v1397 = vsel %vm880, %v1396, %v1392
      %v1398 = vlaneseq
      %v1399 = vshrl.u32 %v1398, 7
      %v1400 = vsub.s32 %v870, %v1399
      %v1401 = vrot.slane %v1289, %v1400
      %v1402 = vlaneseq
      %v1403 = vshrl.u32 %v1402, 7
      %v1404 = vsub.s32 %v875, %v1403
      %v1405 = vrot.slane %v1292, %v1404
      %v1406 = vsel %vm880, %v1405, %v1401
      %v1407 = vlaneseq
      %v1408 = vshrl.u32 %v1407, 7
      %v1409 = vsub.s32 %v870, %v1408
      %v1410 = vrot.slane %v1295, %v1409
      %v1411 = vlaneseq
      %v1412 = vshrl.u32 %v1411, 7
      %v1413 = vsub.s32 %v875, %v1412
      %v1414 = vrot.slane %v1298, %v1413
      %v1415 = vsel %vm880, %v1414, %v1410
      %v1416 = vlaneseq
      %v1417 = vshrl.u32 %v1416, 7
      %v1418 = vsub.s32 %v870, %v1417
      %v1419 = vrot.slane %v1301, %v1418
      %v1420 = vlaneseq
      %v1421 = vshrl.u32 %v1420, 7
      %v1422 = vsub.s32 %v875, %v1421
      %v1423 = vrot.slane %v1304, %v1422
      %v1424 = vsel %vm880, %v1423, %v1419
      %v1425 = vlaneseq
      %v1426 = vshrl.u32 %v1425, 7
      %v1427 = vsub.s32 %v870, %v1426
      %v1428 = vrot.slane %v1307, %v1427
      %v1429 = vlaneseq
      %v1430 = vshrl.u32 %v1429, 7
      %v1431 = vsub.s32 %v875, %v1430
      %v1432 = vrot.slane %v1310, %v1431
      %v1433 = vsel %vm880, %v1432, %v1428
      %v1434 = vlaneseq
      %v1435 = vshrl.u32 %v1434, 7
      %v1436 = vsub.s32 %v870, %v1435
      %v1437 = vrot.slane %v1313, %v1436
      %v1438 = vlaneseq
      %v1439 = vshrl.u32 %v1438, 7
      %v1440 = vsub.s32 %v875, %v1439
      %v1441 = vrot.slane %v1316, %v1440
      %v1442 = vsel %vm880, %v1441, %v1437
      %v1443 = vlaneseq
      %v1444 = vshrl.u32 %v1443, 7
      %v1445 = vsub.s32 %v870, %v1444
      %v1446 = vrot.slane %v1319, %v1445
      %v1447 = vlaneseq
      %v1448 = vshrl.u32 %v1447, 7
      %v1449 = vsub.s32 %v875, %v1448
      %v1450 = vrot.slane %v1322, %v1449
      %v1451 = vsel %vm880, %v1450, %v1446
      %v1452 = vlaneseq
      %v1453 = vshrl.u32 %v1452, 7
      %v1454 = vsub.s32 %v870, %v1453
      %v1455 = vrot.slane %v1325, %v1454
      %v1456 = vlaneseq
      %v1457 = vshrl.u32 %v1456, 7
      %v1458 = vsub.s32 %v875, %v1457
      %v1459 = vrot.slane %v1328, %v1458
      %v1460 = vsel %vm880, %v1459, %v1455
      %v1461 = vlaneseq
      %v1462 = vshrl.u32 %v1461, 7
      %v1463 = vsub.s32 %v870, %v1462
      %v1464 = vrot.slane %v1331, %v1463
      %v1465 = vlaneseq
      %v1466 = vshrl.u32 %v1465, 7
      %v1467 = vsub.s32 %v875, %v1466
      %v1468 = vrot.slane %v1334, %v1467
      %v1469 = vsel %vm880, %v1468, %v1464
      %v1470 = vlaneseq
      %v1471 = vshrl.u32 %v1470, 7
      %v1472 = vsub.s32 %v870, %v1471
      %v1473 = vrot.slane %v1337, %v1472
      %v1474 = vlaneseq
      %v1475 = vshrl.u32 %v1474, 7
      %v1476 = vsub.s32 %v875, %v1475
      %v1477 = vrot.slane %v1340, %v1476
      %v1478 = vsel %vm880, %v1477, %v1473
      %v1479 = vlaneseq
      %v1480 = vshrl.u32 %v1479, 7
      %v1481 = vsub.s32 %v870, %v1480
      %v1482 = vrot.slane %v1343, %v1481
      %v1483 = vlaneseq
      %v1484 = vshrl.u32 %v1483, 7
      %v1485 = vsub.s32 %v875, %v1484
      %v1486 = vrot.slane %v1346, %v1485
      %v1487 = vsel %vm880, %v1486, %v1482
      %v1488 = vlaneseq
      %v1489 = vshrl.u32 %v1488, 7
      %v1490 = vsub.s32 %v870, %v1489
      %v1491 = vrot.slane %v1349, %v1490
      %v1492 = vlaneseq
      %v1493 = vshrl.u32 %v1492, 7
      %v1494 = vsub.s32 %v875, %v1493
      %v1495 = vrot.slane %v1352, %v1494
      %v1496 = vsel %vm880, %v1495, %v1491
      %v1497 = vsel %vm1017, %v1370, %v1361
      %v1498 = vsel %vm1019, %v1379, %v1497
      %v1499 = vsel %vm1021, %v1388, %v1498
      %v1500 = vsel %vm1023, %v1397, %v1499
      %v1501 = vsel %vm1025, %v1406, %v1500
      %v1502 = vsel %vm1027, %v1415, %v1501
      %v1503 = vsel %vm1029, %v1424, %v1502
      %v1504 = vsel %vm1017, %v1442, %v1433
      %v1505 = vsel %vm1019, %v1451, %v1504
      %v1506 = vsel %vm1021, %v1460, %v1505
      %v1507 = vsel %vm1023, %v1469, %v1506
      %v1508 = vsel %vm1025, %v1478, %v1507
      %v1509 = vsel %vm1027, %v1487, %v1508
      %v1510 = vsel %vm1029, %v1496, %v1509
      %v1513 = vsel %vm1040, %v1503, 0.0
      %1514 = vadd.xlane.f32.xlu0 %v1513
      %v1515 = vpop.xlane.xlu0 %1514
      %v1516 = vsel %vm1040, %v1510, 0.0
      %1517 = vadd.xlane.f32.xlu0 %v1516
      %v1518 = vpop.xlane.xlu0 %1517
      %v1519 = vrcp.pop %v1515
      %v1520 = vrcp.pop %v1518
      %v1523 = vlaneseq
      %v1524 = vshrl.u32 %v1523, 7
      %v1525 = vsub.s32 0, %v1524
      %v1526 = vrot.slane %v1519, %v1525
      %v1527 = vlaneseq
      %v1528 = vshrl.u32 %v1527, 7
      %v1529 = vsub.s32 1, %v1528
      %v1530 = vrot.slane %v1519, %v1529
      %v1531 = vlaneseq
      %v1532 = vshrl.u32 %v1531, 7
      %v1533 = vsub.s32 2, %v1532
      %v1534 = vrot.slane %v1519, %v1533
      %v1535 = vlaneseq
      %v1536 = vshrl.u32 %v1535, 7
      %v1537 = vsub.s32 3, %v1536
      %v1538 = vrot.slane %v1519, %v1537
      %v1539 = vlaneseq
      %v1540 = vshrl.u32 %v1539, 7
      %v1541 = vsub.s32 4, %v1540
      %v1542 = vrot.slane %v1519, %v1541
      %v1543 = vlaneseq
      %v1544 = vshrl.u32 %v1543, 7
      %v1545 = vsub.s32 5, %v1544
      %v1546 = vrot.slane %v1519, %v1545
      %v1547 = vlaneseq
      %v1548 = vshrl.u32 %v1547, 7
      %v1549 = vsub.s32 6, %v1548
      %v1550 = vrot.slane %v1519, %v1549
      %v1551 = vlaneseq
      %v1552 = vshrl.u32 %v1551, 7
      %v1553 = vsub.s32 7, %v1552
      %v1554 = vrot.slane %v1519, %v1553
      %v1555 = vlaneseq
      %v1556 = vshrl.u32 %v1555, 7
      %v1557 = vsub.s32 0, %v1556
      %v1558 = vrot.slane %v1520, %v1557
      %v1559 = vlaneseq
      %v1560 = vshrl.u32 %v1559, 7
      %v1561 = vsub.s32 1, %v1560
      %v1562 = vrot.slane %v1520, %v1561
      %v1563 = vlaneseq
      %v1564 = vshrl.u32 %v1563, 7
      %v1565 = vsub.s32 2, %v1564
      %v1566 = vrot.slane %v1520, %v1565
      %v1567 = vlaneseq
      %v1568 = vshrl.u32 %v1567, 7
      %v1569 = vsub.s32 3, %v1568
      %v1570 = vrot.slane %v1520, %v1569
      %v1571 = vlaneseq
      %v1572 = vshrl.u32 %v1571, 7
      %v1573 = vsub.s32 4, %v1572
      %v1574 = vrot.slane %v1520, %v1573
      %v1575 = vlaneseq
      %v1576 = vshrl.u32 %v1575, 7
      %v1577 = vsub.s32 5, %v1576
      %v1578 = vrot.slane %v1520, %v1577
      %v1579 = vlaneseq
      %v1580 = vshrl.u32 %v1579, 7
      %v1581 = vsub.s32 6, %v1580
      %v1582 = vrot.slane %v1520, %v1581
      %v1583 = vlaneseq
      %v1584 = vshrl.u32 %v1583, 7
      %v1585 = vsub.s32 7, %v1584
      %v1586 = vrot.slane %v1520, %v1585
      %v1603 = vmul.f32 %v1162, %v1526
      %v1604 = vmul.f32 %v1164, %v1526
      %v1605 = vmul.f32 %v1166, %v1530
      %v1606 = vmul.f32 %v1168, %v1530
      %v1607 = vmul.f32 %v1170, %v1534
      %v1608 = vmul.f32 %v1172, %v1534
      %v1609 = vmul.f32 %v1174, %v1538
      %v1610 = vmul.f32 %v1176, %v1538
      %v1611 = vmul.f32 %v1178, %v1542
      %v1612 = vmul.f32 %v1180, %v1542
      %v1613 = vmul.f32 %v1182, %v1546
      %v1614 = vmul.f32 %v1184, %v1546
      %v1615 = vmul.f32 %v1186, %v1550
      %v1616 = vmul.f32 %v1188, %v1550
      %v1617 = vmul.f32 %v1190, %v1554
      %v1618 = vmul.f32 %v1192, %v1554
      %v1619 = vmul.f32 %v1194, %v1558
      %v1620 = vmul.f32 %v1196, %v1558
      %v1621 = vmul.f32 %v1198, %v1562
      %v1622 = vmul.f32 %v1200, %v1562
      %v1623 = vmul.f32 %v1202, %v1566
      %v1624 = vmul.f32 %v1204, %v1566
      %v1625 = vmul.f32 %v1206, %v1570
      %v1626 = vmul.f32 %v1208, %v1570
      %v1627 = vmul.f32 %v1210, %v1574
      %v1628 = vmul.f32 %v1212, %v1574
      %v1629 = vmul.f32 %v1214, %v1578
      %v1630 = vmul.f32 %v1216, %v1578
      %v1631 = vmul.f32 %v1218, %v1582
      %v1632 = vmul.f32 %v1220, %v1582
      %v1633 = vmul.f32 %v1222, %v1586
      %v1634 = vmul.f32 %v1224, %v1586
      %1667 = vset.pattern.permute.xlu0 0
      %1668 = vperm.xlu0 %1667, %v1603
      %v1669 = vpop.permute.xlu0 %1668
      %1670 = vset.pattern.permute.xlu0 0
      %1671 = vperm.xlu0 %1670, %v1604
      %v1672 = vpop.permute.xlu0 %1671
      %1673 = vset.pattern.permute.xlu0 0
      %1674 = vperm.xlu0 %1673, %v1605
      %v1675 = vpop.permute.xlu0 %1674
      %1676 = vset.pattern.permute.xlu0 0
      %1677 = vperm.xlu0 %1676, %v1606
      %v1678 = vpop.permute.xlu0 %1677
      %1679 = vset.pattern.permute.xlu0 0
      %1680 = vperm.xlu0 %1679, %v1607
      %v1681 = vpop.permute.xlu0 %1680
      %1682 = vset.pattern.permute.xlu0 0
      %1683 = vperm.xlu0 %1682, %v1608
      %v1684 = vpop.permute.xlu0 %1683
      %1685 = vset.pattern.permute.xlu0 0
      %1686 = vperm.xlu0 %1685, %v1609
      %v1687 = vpop.permute.xlu0 %1686
      %1688 = vset.pattern.permute.xlu0 0
      %1689 = vperm.xlu0 %1688, %v1610
      %v1690 = vpop.permute.xlu0 %1689
      %1691 = vset.pattern.permute.xlu0 0
      %1692 = vperm.xlu0 %1691, %v1611
      %v1693 = vpop.permute.xlu0 %1692
      %1694 = vset.pattern.permute.xlu0 0
      %1695 = vperm.xlu0 %1694, %v1612
      %v1696 = vpop.permute.xlu0 %1695
      %1697 = vset.pattern.permute.xlu0 0
      %1698 = vperm.xlu0 %1697, %v1613
      %v1699 = vpop.permute.xlu0 %1698
      %1700 = vset.pattern.permute.xlu0 0
      %1701 = vperm.xlu0 %1700, %v1614
      %v1702 = vpop.permute.xlu0 %1701
      %1703 = vset.pattern.permute.xlu0 0
      %1704 = vperm.xlu0 %1703, %v1615
      %v1705 = vpop.permute.xlu0 %1704
      %1706 = vset.pattern.permute.xlu0 0
      %1707 = vperm.xlu0 %1706, %v1616
      %v1708 = vpop.permute.xlu0 %1707
      %1709 = vset.pattern.permute.xlu0 0
      %1710 = vperm.xlu0 %1709, %v1617
      %v1711 = vpop.permute.xlu0 %1710
      %1712 = vset.pattern.permute.xlu0 0
      %1713 = vperm.xlu0 %1712, %v1618
      %v1714 = vpop.permute.xlu0 %1713
      %1715 = vset.pattern.permute.xlu0 0
      %1716 = vperm.xlu0 %1715, %v1619
      %v1717 = vpop.permute.xlu0 %1716
      %1718 = vset.pattern.permute.xlu0 0
      %1719 = vperm.xlu0 %1718, %v1620
      %v1720 = vpop.permute.xlu0 %1719
      %1721 = vset.pattern.permute.xlu0 0
      %1722 = vperm.xlu0 %1721, %v1621
      %v1723 = vpop.permute.xlu0 %1722
      %1724 = vset.pattern.permute.xlu0 0
      %1725 = vperm.xlu0 %1724, %v1622
      %v1726 = vpop.permute.xlu0 %1725
      %1727 = vset.pattern.permute.xlu0 0
      %1728 = vperm.xlu0 %1727, %v1623
      %v1729 = vpop.permute.xlu0 %1728
      %1730 = vset.pattern.permute.xlu0 0
      %1731 = vperm.xlu0 %1730, %v1624
      %v1732 = vpop.permute.xlu0 %1731
      %1733 = vset.pattern.permute.xlu0 0
      %1734 = vperm.xlu0 %1733, %v1625
      %v1735 = vpop.permute.xlu0 %1734
      %1736 = vset.pattern.permute.xlu0 0
      %1737 = vperm.xlu0 %1736, %v1626
      %v1738 = vpop.permute.xlu0 %1737
      %1739 = vset.pattern.permute.xlu0 0
      %1740 = vperm.xlu0 %1739, %v1627
      %v1741 = vpop.permute.xlu0 %1740
      %1742 = vset.pattern.permute.xlu0 0
      %1743 = vperm.xlu0 %1742, %v1628
      %v1744 = vpop.permute.xlu0 %1743
      %1745 = vset.pattern.permute.xlu0 0
      %1746 = vperm.xlu0 %1745, %v1629
      %v1747 = vpop.permute.xlu0 %1746
      %1748 = vset.pattern.permute.xlu0 0
      %1749 = vperm.xlu0 %1748, %v1630
      %v1750 = vpop.permute.xlu0 %1749
      %1751 = vset.pattern.permute.xlu0 0
      %1752 = vperm.xlu0 %1751, %v1631
      %v1753 = vpop.permute.xlu0 %1752
      %1754 = vset.pattern.permute.xlu0 0
      %1755 = vperm.xlu0 %1754, %v1632
      %v1756 = vpop.permute.xlu0 %1755
      %1757 = vset.pattern.permute.xlu0 0
      %1758 = vperm.xlu0 %1757, %v1633
      %v1759 = vpop.permute.xlu0 %1758
      %1760 = vset.pattern.permute.xlu0 0
      %1761 = vperm.xlu0 %1760, %v1634
      %v1762 = vpop.permute.xlu0 %1761
      %v1763 = vlaneseq
      %v1764 = vshrl.u32 %v1763, 7
      %v1765 = vsub.s32 %v870, %v1764
      %v1766 = vrot.slane %v1669, %v1765
      %v1767 = vlaneseq
      %v1768 = vshrl.u32 %v1767, 7
      %v1769 = vsub.s32 %v875, %v1768
      %v1770 = vrot.slane %v1672, %v1769
      %v1771 = vsel %vm880, %v1770, %v1766
      %v1772 = vlaneseq
      %v1773 = vshrl.u32 %v1772, 7
      %v1774 = vsub.s32 %v870, %v1773
      %v1775 = vrot.slane %v1675, %v1774
      %v1776 = vlaneseq
      %v1777 = vshrl.u32 %v1776, 7
      %v1778 = vsub.s32 %v875, %v1777
      %v1779 = vrot.slane %v1678, %v1778
      %v1780 = vsel %vm880, %v1779, %v1775
      %v1781 = vlaneseq
      %v1782 = vshrl.u32 %v1781, 7
      %v1783 = vsub.s32 %v870, %v1782
      %v1784 = vrot.slane %v1681, %v1783
      %v1785 = vlaneseq
      %v1786 = vshrl.u32 %v1785, 7
      %v1787 = vsub.s32 %v875, %v1786
      %v1788 = vrot.slane %v1684, %v1787
      %v1789 = vsel %vm880, %v1788, %v1784
      %v1790 = vlaneseq
      %v1791 = vshrl.u32 %v1790, 7
      %v1792 = vsub.s32 %v870, %v1791
      %v1793 = vrot.slane %v1687, %v1792
      %v1794 = vlaneseq
      %v1795 = vshrl.u32 %v1794, 7
      %v1796 = vsub.s32 %v875, %v1795
      %v1797 = vrot.slane %v1690, %v1796
      %v1798 = vsel %vm880, %v1797, %v1793
      %v1799 = vlaneseq
      %v1800 = vshrl.u32 %v1799, 7
      %v1801 = vsub.s32 %v870, %v1800
      %v1802 = vrot.slane %v1693, %v1801
      %v1803 = vlaneseq
      %v1804 = vshrl.u32 %v1803, 7
      %v1805 = vsub.s32 %v875, %v1804
      %v1806 = vrot.slane %v1696, %v1805
      %v1807 = vsel %vm880, %v1806, %v1802
      %v1808 = vlaneseq
      %v1809 = vshrl.u32 %v1808, 7
      %v1810 = vsub.s32 %v870, %v1809
      %v1811 = vrot.slane %v1699, %v1810
      %v1812 = vlaneseq
      %v1813 = vshrl.u32 %v1812, 7
      %v1814 = vsub.s32 %v875, %v1813
      %v1815 = vrot.slane %v1702, %v1814
      %v1816 = vsel %vm880, %v1815, %v1811
      %v1817 = vlaneseq
      %v1818 = vshrl.u32 %v1817, 7
      %v1819 = vsub.s32 %v870, %v1818
      %v1820 = vrot.slane %v1705, %v1819
      %v1821 = vlaneseq
      %v1822 = vshrl.u32 %v1821, 7
      %v1823 = vsub.s32 %v875, %v1822
      %v1824 = vrot.slane %v1708, %v1823
      %v1825 = vsel %vm880, %v1824, %v1820
      %v1826 = vlaneseq
      %v1827 = vshrl.u32 %v1826, 7
      %v1828 = vsub.s32 %v870, %v1827
      %v1829 = vrot.slane %v1711, %v1828
      %v1830 = vlaneseq
      %v1831 = vshrl.u32 %v1830, 7
      %v1832 = vsub.s32 %v875, %v1831
      %v1833 = vrot.slane %v1714, %v1832
      %v1834 = vsel %vm880, %v1833, %v1829
      %v1835 = vlaneseq
      %v1836 = vshrl.u32 %v1835, 7
      %v1837 = vsub.s32 %v870, %v1836
      %v1838 = vrot.slane %v1717, %v1837
      %v1839 = vlaneseq
      %v1840 = vshrl.u32 %v1839, 7
      %v1841 = vsub.s32 %v875, %v1840
      %v1842 = vrot.slane %v1720, %v1841
      %v1843 = vsel %vm880, %v1842, %v1838
      %v1844 = vlaneseq
      %v1845 = vshrl.u32 %v1844, 7
      %v1846 = vsub.s32 %v870, %v1845
      %v1847 = vrot.slane %v1723, %v1846
      %v1848 = vlaneseq
      %v1849 = vshrl.u32 %v1848, 7
      %v1850 = vsub.s32 %v875, %v1849
      %v1851 = vrot.slane %v1726, %v1850
      %v1852 = vsel %vm880, %v1851, %v1847
      %v1853 = vlaneseq
      %v1854 = vshrl.u32 %v1853, 7
      %v1855 = vsub.s32 %v870, %v1854
      %v1856 = vrot.slane %v1729, %v1855
      %v1857 = vlaneseq
      %v1858 = vshrl.u32 %v1857, 7
      %v1859 = vsub.s32 %v875, %v1858
      %v1860 = vrot.slane %v1732, %v1859
      %v1861 = vsel %vm880, %v1860, %v1856
      %v1862 = vlaneseq
      %v1863 = vshrl.u32 %v1862, 7
      %v1864 = vsub.s32 %v870, %v1863
      %v1865 = vrot.slane %v1735, %v1864
      %v1866 = vlaneseq
      %v1867 = vshrl.u32 %v1866, 7
      %v1868 = vsub.s32 %v875, %v1867
      %v1869 = vrot.slane %v1738, %v1868
      %v1870 = vsel %vm880, %v1869, %v1865
      %v1871 = vlaneseq
      %v1872 = vshrl.u32 %v1871, 7
      %v1873 = vsub.s32 %v870, %v1872
      %v1874 = vrot.slane %v1741, %v1873
      %v1875 = vlaneseq
      %v1876 = vshrl.u32 %v1875, 7
      %v1877 = vsub.s32 %v875, %v1876
      %v1878 = vrot.slane %v1744, %v1877
      %v1879 = vsel %vm880, %v1878, %v1874
      %v1880 = vlaneseq
      %v1881 = vshrl.u32 %v1880, 7
      %v1882 = vsub.s32 %v870, %v1881
      %v1883 = vrot.slane %v1747, %v1882
      %v1884 = vlaneseq
      %v1885 = vshrl.u32 %v1884, 7
      %v1886 = vsub.s32 %v875, %v1885
      %v1887 = vrot.slane %v1750, %v1886
      %v1888 = vsel %vm880, %v1887, %v1883
      %v1889 = vlaneseq
      %v1890 = vshrl.u32 %v1889, 7
      %v1891 = vsub.s32 %v870, %v1890
      %v1892 = vrot.slane %v1753, %v1891
      %v1893 = vlaneseq
      %v1894 = vshrl.u32 %v1893, 7
      %v1895 = vsub.s32 %v875, %v1894
      %v1896 = vrot.slane %v1756, %v1895
      %v1897 = vsel %vm880, %v1896, %v1892
      %v1898 = vlaneseq
      %v1899 = vshrl.u32 %v1898, 7
      %v1900 = vsub.s32 %v870, %v1899
      %v1901 = vrot.slane %v1759, %v1900
      %v1902 = vlaneseq
      %v1903 = vshrl.u32 %v1902, 7
      %v1904 = vsub.s32 %v875, %v1903
      %v1905 = vrot.slane %v1762, %v1904
      %v1906 = vsel %vm880, %v1905, %v1901
      %v1907 = vsel %vm1017, %v1780, %v1771
      %v1908 = vsel %vm1019, %v1789, %v1907
      %v1909 = vsel %vm1021, %v1798, %v1908
      %v1910 = vsel %vm1023, %v1807, %v1909
      %v1911 = vsel %vm1025, %v1816, %v1910
      %v1912 = vsel %vm1027, %v1825, %v1911
      %v1913 = vsel %vm1029, %v1834, %v1912
      %v1914 = vsel %vm1017, %v1852, %v1843
      %v1915 = vsel %vm1019, %v1861, %v1914
      %v1916 = vsel %vm1021, %v1870, %v1915
      %v1917 = vsel %vm1023, %v1879, %v1916
      %v1918 = vsel %vm1025, %v1888, %v1917
      %v1919 = vsel %vm1027, %v1897, %v1918
      %v1920 = vsel %vm1029, %v1906, %v1919
      %1923 = vst.msk [vmem:[%s255] sm:$0xff] %vm1040, %v1913
      %1924 = vst.msk [vmem:[%s255 + $0x8] sm:$0xff] %vm1040, %v1920
      %s1925 = smul.u32 2, %s20
      %p1926 = scmp.lt.s32.totalorder %s19, 1
      %s1927 = scalar_select %p1926, %s19, 1
      %p1928 = scmp.lt.s32.totalorder %s1925, 1
      %s1929 = scalar_select %p1928, %s1925, 1
      %s1930 = smul.addr %s1927, 2
      %s1931 = sadd.s32 %s1929, %s1930
      %s1932 = smul.addr %s1931, 8
      %s1933 = scalar_lea.vmem %s4, %s1932
      // Predicated region
      $region37: #{glcn_encoder_forward.4} parent=35 // pred_check
        %p1934 = pneg %p143
      $region38: #{glcn_encoder_forward.4} parent=35 // pred_check_branch
        %1936 = sbr.rel (%p1934) target = $region40
      $region39: #{glcn_encoder_forward.4} parent=35 // pred_region
        %s1937 = smul.u32 2, %s20
      $region40: #{glcn_encoder_forward.4} parent=35 // pred_fallthru
        _
    $region36: #{glcn_encoder_forward.4} parent=5 // pred_fallthru
      _
    %p1938 = scmp.le.s32.totalorder 2, %s10
    // Predicated region
    $region41: #{glcn_encoder_forward.4} parent=5 // pred_check
      %p1939 = pneg %p1938
    $region42: #{glcn_encoder_forward.4} parent=5 // pred_check_branch
      %1941 = sbr.rel (%p1939) target = $region44
    $region43: #{glcn_encoder_forward.4} parent=5 // pred_region
      %s1942 = ssub.s32 %s10, 2
      // Predicated region
      $region45: #{glcn_encoder_forward.4} parent=43 // pred_check
        %p1943 = pneg %p149
      $region46: #{glcn_encoder_forward.4} parent=43 // pred_check_branch
        %1945 = sbr.rel (%p1943) target = $region48
      $region47: #{glcn_encoder_forward.4} parent=43 // pred_region
        %s1946 = smul.u32 2, %s22
        %p1947 = scmp.lt.s32.totalorder %s21, 1
        %s1948 = scalar_select %p1947, %s21, 1
        %p1949 = scmp.lt.s32.totalorder %s1946, 1
        %s1950 = scalar_select %p1949, %s1946, 1
        %s1951 = smul.addr %s1948, 2
        %s1952 = sadd.s32 %s1950, %s1951
        %s1953 = smul.addr %s1952, 8
        %s1954 = scalar_lea.vmem %s4, %s1953
      $region48: #{glcn_encoder_forward.4} parent=43 // pred_fallthru
        _
    $region44: #{glcn_encoder_forward.4} parent=5 // pred_fallthru
      _
  $region6: #{glcn_encoder_forward.4} parent=0 // loop_footer
    %s14 = sadd.s32 1, %s10
  $region7: #{glcn_encoder_forward.4} parent=0 // loop_footer_branch
    %9 = sbr.rel target = $region3
  $region8: #{glcn_encoder_forward.4} parent=0 // loop_exit
    _

// kernel: glcn_encoder_forward.7
$region0: #{glcn_encoder_forward.7}
  #allocation0 [shape = 'u32[]', space=smem, size = 0x4, offset = 0x4, fixed_abs, tag = 'smem constant byte address 0x4 - core index']
  #allocation1 [shape = 'u32[144,128]{1,0:T(1,128)}', space=vmem, size = 0x12000, scoped, tag = 'internal scratch']
  %s0 = inlined_call_operand.vmem [shape: f32[2,16,16], index: 0, kind: input, shape index: {}]
  %s1 = inlined_call_operand.vmem [shape: f32[2,16,32], index: 1, kind: input, shape index: {}, may-alias: {1,5}]
  %s2 = inlined_call_operand.vmem [shape: f32[32,32], index: 2, kind: input, shape index: {}]
  %s3 = inlined_call_operand.vmem [shape: f32[1,32], index: 3, kind: input, shape index: {}]
  %s4 = inlined_call_operand.vmem [shape: f32[2,16,32], index: 4, kind: input, shape index: {}]
  %s5 = inlined_call_operand.vmem [shape: f32[2,16,32], index: 5, kind: input, shape index: {}, may-alias: {1,5}]
  %s6 = inlined_call_operand.vmem [shape: f32[32,8], index: 6, kind: input, shape index: {}]
  %s7 = inlined_call_operand.vmem [shape: f32[32,8], index: 7, kind: input, shape index: {}]
  %s8 = inlined_call_operand.vmem [shape: f32[32,8], index: 8, kind: input, shape index: {}]
  %s9 = inlined_call_operand.vmem [shape: f32[1,8], index: 9, kind: input, shape index: {}]
  %s10 = inlined_call_operand.vmem [shape: f32[2,16,8], index: 10, kind: output, shape index: {}]
  %s11 = sld [smem:[#allocation0]]
  $region50: #{glcn_encoder_forward.7} parent=0
    _
  %s13 = ssub.s32 1, %s11
  %s14 = scalar_select 0, %s13, %s11
  // Predicated region
  $region2: #{glcn_encoder_forward.7} parent=0 // pred_check
    _
  $region3: #{glcn_encoder_forward.7} parent=0 // pred_check_branch
    %16 = sbr.rel (0) target = $region5
  $region4: #{glcn_encoder_forward.7} parent=0 // pred_region
    _
  $region5: #{glcn_encoder_forward.7} parent=0 // pred_fallthru
    _
  // Predicated region
  $region6: #{glcn_encoder_forward.7} parent=0 // pred_check
    _
  $region7: #{glcn_encoder_forward.7} parent=0 // pred_check_branch
    %18 = sbr.rel (0) target = $region9
  $region8: #{glcn_encoder_forward.7} parent=0 // pred_region
    _
  $region9: #{glcn_encoder_forward.7} parent=0 // pred_fallthru
    _
  // Predicated region
  $region10: #{glcn_encoder_forward.7} parent=0 // pred_check
    _
  $region11: #{glcn_encoder_forward.7} parent=0 // pred_check_branch
    %20 = sbr.rel (0) target = $region13
  $region12: #{glcn_encoder_forward.7} parent=0 // pred_region
    _
  $region13: #{glcn_encoder_forward.7} parent=0 // pred_fallthru
    _
  // Predicated region
  $region14: #{glcn_encoder_forward.7} parent=0 // pred_check
    _
  $region15: #{glcn_encoder_forward.7} parent=0 // pred_check_branch
    %22 = sbr.rel (0) target = $region17
  $region16: #{glcn_encoder_forward.7} parent=0 // pred_region
    _
  $region17: #{glcn_encoder_forward.7} parent=0 // pred_fallthru
    _
  // Predicated region
  $region18: #{glcn_encoder_forward.7} parent=0 // pred_check
    _
  $region19: #{glcn_encoder_forward.7} parent=0 // pred_check_branch
    %24 = sbr.rel (0) target = $region21
  $region20: #{glcn_encoder_forward.7} parent=0 // pred_region
    _
  $region21: #{glcn_encoder_forward.7} parent=0 // pred_fallthru
    _
  // Predicated region
  $region22: #{glcn_encoder_forward.7} parent=0 // pred_check
    _
  $region23: #{glcn_encoder_forward.7} parent=0 // pred_check_branch
    %26 = sbr.rel (0) target = $region25
  $region24: #{glcn_encoder_forward.7} parent=0 // pred_region
    _
  $region25: #{glcn_encoder_forward.7} parent=0 // pred_fallthru
    _
  // Predicated region
  $region26: #{glcn_encoder_forward.7} parent=0 // pred_check
    _
  $region27: #{glcn_encoder_forward.7} parent=0 // pred_check_branch
    %28 = sbr.rel (0) target = $region29
  $region28: #{glcn_encoder_forward.7} parent=0 // pred_region
    _
  $region29: #{glcn_encoder_forward.7} parent=0 // pred_fallthru
    _
  // Predicated region
  $region30: #{glcn_encoder_forward.7} parent=0 // pred_check
    _
  $region31: #{glcn_encoder_forward.7} parent=0 // pred_check_branch
    %30 = sbr.rel (0) target = $region33
  $region32: #{glcn_encoder_forward.7} parent=0 // pred_region
    _
  $region33: #{glcn_encoder_forward.7} parent=0 // pred_fallthru
    _
  // Predicated region
  $region34: #{glcn_encoder_forward.7} parent=0 // pred_check
    _
  $region35: #{glcn_encoder_forward.7} parent=0 // pred_check_branch
    %32 = sbr.rel (0) target = $region37
  $region36: #{glcn_encoder_forward.7} parent=0 // pred_region
    _
  $region37: #{glcn_encoder_forward.7} parent=0 // pred_fallthru
    _
  // Predicated region
  $region38: #{glcn_encoder_forward.7} parent=0 // pred_check
    _
  $region39: #{glcn_encoder_forward.7} parent=0 // pred_check_branch
    %34 = sbr.rel (0) target = $region41
  $region40: #{glcn_encoder_forward.7} parent=0 // pred_region
    _
  $region41: #{glcn_encoder_forward.7} parent=0 // pred_fallthru
    _
  %v36 = vld [vmem:[%s2] sm:$0xff]
  %v37 = vld [vmem:[%s2 + $0x8] sm:$0xff]
  %v38 = vld [vmem:[%s2 + $0x10] sm:$0xff]
  %v39 = vld [vmem:[%s2 + $0x18] sm:$0xff]
  %v40 = vld [vmem:[%s3] sm:$0x1]
  %v41 = vld [vmem:[%s6] sm:$0xff]
  %v42 = vld [vmem:[%s6 + $0x8] sm:$0xff]
  %v43 = vld [vmem:[%s6 + $0x10] sm:$0xff]
  %v44 = vld [vmem:[%s6 + $0x18] sm:$0xff]
  %v45 = vld [vmem:[%s7] sm:$0xff]
  %v46 = vld [vmem:[%s7 + $0x8] sm:$0xff]
  %v47 = vld [vmem:[%s7 + $0x10] sm:$0xff]
  %v48 = vld [vmem:[%s7 + $0x18] sm:$0xff]
  %v49 = vld [vmem:[%s8] sm:$0xff]
  %v50 = vld [vmem:[%s8 + $0x8] sm:$0xff]
  %v51 = vld [vmem:[%s8 + $0x10] sm:$0xff]
  %v52 = vld [vmem:[%s8 + $0x18] sm:$0xff]
  %v53 = vld [vmem:[%s9] sm:$0x1]
  %v54 = vld [vmem:[%s0] sm:$0xff]
  %v55 = vld [vmem:[%s0 + $0x8] sm:$0xff]
  %v56 = vpack.c.bf16 %v55, %v54
  %v57 = vld [vmem:[%s1] sm:$0xff]
  %v58 = vld [vmem:[%s1 + $0x8] sm:$0xff]
  %v59 = vpack.c.bf16 %v58, %v57
  %vm60 = vcmask 130048
  %v62 = vsel %vm60, %v56, 0
  %64 = vmatprep.subr.bf16.mxu0 0
  %65 = vmatpush1.bf16.msra.mxu0 0
  %66 = vmatprep.subr.bf16.mxu0 0
  %67 = vmatpush1.bf16.msra.mxu0 0
  %68 = vmatprep.subr.bf16.mxu0 0
  %69 = vmatpush1.bf16.msra.mxu0 0
  %70 = vmatprep.subr.bf16.mxu0 0
  %71 = vmatpush1.bf16.msra.mxu0 0
  %72 = vmatprep.subr.bf16.mxu0 0
  %73 = vmatpush1.bf16.msra.mxu0 0
  %74 = vmatprep.subr.bf16.mxu0 0
  %75 = vmatpush1.bf16.msra.mxu0 0
  %76 = vmatprep.subr.bf16.mxu0 0
  %77 = vmatpush1.bf16.msra.mxu0 0
  %78 = vmatprep.subr.bf16.mxu0 0
  %79 = vmatpush1.bf16.msra.mxu0 %v59
  %80 = vmatprep.subr.bf16.mxu0 0
  %81 = vmatpush2.bf16.msra.mxu0 0
  %82 = vmatprep.subr.bf16.mxu0 0
  %83 = vmatpush2.bf16.msra.mxu0 0
  %84 = vmatprep.subr.bf16.mxu0 0
  %85 = vmatpush2.bf16.msra.mxu0 0
  %86 = vmatprep.subr.bf16.mxu0 0
  %87 = vmatpush2.bf16.msra.mxu0 0
  %88 = vmatprep.subr.bf16.mxu0 0
  %89 = vmatpush2.bf16.msra.mxu0 0
  %90 = vmatprep.subr.bf16.mxu0 0
  %91 = vmatpush2.bf16.msra.mxu0 0
  %92 = vmatprep.subr.bf16.mxu0 0
  %93 = vmatpush2.bf16.msra.mxu0 0
  %94 = vmatprep.subr.bf16.mxu0 0
  %95 = vmatpush2.bf16.msra.mxu0 0
  %96 = vmatprep.mubr.bf16.mxu0 0
  %97 = vmatmul.mubr.bf16.gmra.mxu0 %v62
  %v98 = vpop.f32.mrf.mxu0
  %v99 = vadd.f32 0.0, %v98
  %v100 = vpop.f32.mrf.mxu0
  %v101 = vpop.f32.mrf.mxu0
  %v102 = vadd.f32 0.0, %v101
  %v103 = vpop.f32.mrf.mxu0
  %104 = vdwg.mxu0
  %v106 = vlaneseq
  %v107 = vshrl.u32 %v106, 7
  %v108 = vsub.s32 0, %v107
  %v109 = vrot.slane %v40, %v108
  %vm111 = vcmask 261120
  %v113 = vsel %vm111, %v99, 0
  %v116 = vsel %vm111, %v102, 0
  %118 = vmatprep.subr.mxu0 0.0
  %119 = vmatpush1.msra.mxu0 0.0
  %120 = vmatprep.subr.mxu0 0.0
  %121 = vmatpush1.msra.mxu0 0.0
  %122 = vmatprep.subr.mxu0 0.0
  %123 = vmatpush1.msra.mxu0 0.0
  %124 = vmatprep.subr.mxu0 0.0
  %125 = vmatpush1.msra.mxu0 0.0
  %126 = vmatprep.subr.mxu0 0.0
  %127 = vmatpush1.msra.mxu0 0.0
  %128 = vmatprep.subr.mxu0 0.0
  %129 = vmatpush1.msra.mxu0 0.0
  %130 = vmatprep.subr.mxu0 0.0
  %131 = vmatpush1.msra.mxu0 0.0
  %132 = vmatprep.subr.mxu0 0.0
  %133 = vmatpush1.msra.mxu0 0.0
  %134 = vmatprep.subr.mxu0 0.0
  %135 = vmatpush1.msra.mxu0 0.0
  %136 = vmatprep.subr.mxu0 0.0
  %137 = vmatpush1.msra.mxu0 0.0
  %138 = vmatprep.subr.mxu0 0.0
  %139 = vmatpush1.msra.mxu0 0.0
  %140 = vmatprep.subr.mxu0 0.0
  %141 = vmatpush1.msra.mxu0 0.0
  %142 = vmatprep.subr.mxu0 0.0
  %143 = vmatpush1.msra.mxu0 %v39
  %144 = vmatprep.subr.mxu0 0.0
  %145 = vmatpush1.msra.mxu0 %v38
  %146 = vmatprep.subr.mxu0 0.0
  %147 = vmatpush1.msra.mxu0 %v37
  %148 = vmatprep.subr.mxu0 0.0
  %149 = vmatpush1.msra.mxu0 %v36
  %150 = vmatprep.subr.mxu0 0.0
  %151 = vmatpush2.msra.mxu0 0.0
  %152 = vmatprep.subr.mxu0 0.0
  %153 = vmatpush2.msra.mxu0 0.0
  %154 = vmatprep.subr.mxu0 0.0
  %155 = vmatpush2.msra.mxu0 0.0
  %156 = vmatprep.subr.mxu0 0.0
  %157 = vmatpush2.msra.mxu0 0.0
  %158 = vmatprep.subr.mxu0 0.0
  %159 = vmatpush2.msra.mxu0 0.0
  %160 = vmatprep.subr.mxu0 0.0
  %161 = vmatpush2.msra.mxu0 0.0
  %162 = vmatprep.subr.mxu0 0.0
  %163 = vmatpush2.msra.mxu0 0.0
  %164 = vmatprep.subr.mxu0 0.0
  %165 = vmatpush2.msra.mxu0 0.0
  %166 = vmatprep.subr.mxu0 0.0
  %167 = vmatpush2.msra.mxu0 0.0
  %168 = vmatprep.subr.mxu0 0.0
  %169 = vmatpush2.msra.mxu0 0.0
  %170 = vmatprep.subr.mxu0 0.0
  %171 = vmatpush2.msra.mxu0 0.0
  %172 = vmatprep.subr.mxu0 0.0
  %173 = vmatpush2.msra.mxu0 0.0
  %174 = vmatprep.subr.mxu0 0.0
  %175 = vmatpush2.msra.mxu0 0.0
  %176 = vmatprep.subr.mxu0 0.0
  %177 = vmatpush2.msra.mxu0 0.0
  %178 = vmatprep.subr.mxu0 0.0
  %179 = vmatpush2.msra.mxu0 0.0
  %180 = vmatprep.subr.mxu0 0.0
  %181 = vmatpush2.msra.mxu0 0.0
  %182 = vmatprep.mubr.f32.mxu0 0.0
  %183 = vmatmul.mubr.f32.gmra.mxu0 %v113
  %v184 = vpop.f32.mrf.mxu0
  %v185 = vadd.f32 %v109, %v184
  %v186 = vpop.f32.mrf.mxu0
  %187 = vmatprep.mubr.f32.mxu0 0.0
  %188 = vmatmul.mubr.f32.gmra.mxu0 %v116
  %v189 = vpop.f32.mrf.mxu0
  %v190 = vadd.f32 %v109, %v189
  %v191 = vpop.f32.mrf.mxu0
  %192 = vdwg.mxu0
  %v193 = vmul.f32 %v185, %v185
  %v194 = vmul.f32 %v190, %v190
  %v195 = vsel %vm111, %v193, 0.0
  %196 = vadd.xlane.f32.xlu0 %v195
  %v197 = vpop.xlane.xlu0 %196
  %v198 = vsel %vm111, %v194, 0.0
  %199 = vadd.xlane.f32.xlu0 %v198
  %v200 = vpop.xlane.xlu0 %199
  %v201 = vmax.f32 %v197, 1e-24
  %v202 = vmax.f32 %v200, 1e-24
  %v203 = vrsqrt.pop %v201
  %v204 = vrsqrt.pop %v202
  %v205 = vmul.f32 %v185, %v203
  %v206 = vmul.f32 %v190, %v204
  %v207 = vld [vmem:[%s4] sm:$0xff]
  %v208 = vld [vmem:[%s4 + $0x8] sm:$0xff]
  %v209 = vld [vmem:[%s5] sm:$0xff]
  %v210 = vld [vmem:[%s5 + $0x8] sm:$0xff]
  %v212 = vsel %vm111, %v209, 0
  %v215 = vsel %vm111, %v210, 0
  %217 = vmatprep.subr.mxu0 0.0
  %218 = vmatpush1.msra.mxu0 0.0
  %219 = vmatprep.subr.mxu0 0.0
  %220 = vmatpush1.msra.mxu0 0.0
  %221 = vmatprep.subr.mxu0 0.0
  %222 = vmatpush1.msra.mxu0 0.0
  %223 = vmatprep.subr.mxu0 0.0
  %224 = vmatpush1.msra.mxu0 0.0
  %225 = vmatprep.subr.mxu0 0.0
  %226 = vmatpush1.msra.mxu0 0.0
  %227 = vmatprep.subr.mxu0 0.0
  %228 = vmatpush1.msra.mxu0 0.0
  %229 = vmatprep.subr.mxu0 0.0
  %230 = vmatpush1.msra.mxu0 0.0
  %231 = vmatprep.subr.mxu0 0.0
  %232 = vmatpush1.msra.mxu0 0.0
  %233 = vmatprep.subr.mxu0 0.0
  %234 = vmatpush1.msra.mxu0 0.0
  %235 = vmatprep.subr.mxu0 0.0
  %236 = vmatpush1.msra.mxu0 0.0
  %237 = vmatprep.subr.mxu0 0.0
  %238 = vmatpush1.msra.mxu0 0.0
  %239 = vmatprep.subr.mxu0 0.0
  %240 = vmatpush1.msra.mxu0 0.0
  %241 = vmatprep.subr.mxu0 0.0
  %242 = vmatpush1.msra.mxu0 %v48
  %243 = vmatprep.subr.mxu0 0.0
  %244 = vmatpush1.msra.mxu0 %v47
  %245 = vmatprep.subr.mxu0 0.0
  %246 = vmatpush1.msra.mxu0 %v46
  %247 = vmatprep.subr.mxu0 0.0
  %248 = vmatpush1.msra.mxu0 %v45
  %249 = vmatprep.subr.mxu0 0.0
  %250 = vmatpush2.msra.mxu0 0.0
  %251 = vmatprep.subr.mxu0 0.0
  %252 = vmatpush2.msra.mxu0 0.0
  %253 = vmatprep.subr.mxu0 0.0
  %254 = vmatpush2.msra.mxu0 0.0
  %255 = vmatprep.subr.mxu0 0.0
  %256 = vmatpush2.msra.mxu0 0.0
  %257 = vmatprep.subr.mxu0 0.0
  %258 = vmatpush2.msra.mxu0 0.0
  %259 = vmatprep.subr.mxu0 0.0
  %260 = vmatpush2.msra.mxu0 0.0
  %261 = vmatprep.subr.mxu0 0.0
  %262 = vmatpush2.msra.mxu0 0.0
  %263 = vmatprep.subr.mxu0 0.0
  %264 = vmatpush2.msra.mxu0 0.0
  %265 = vmatprep.subr.mxu0 0.0
  %266 = vmatpush2.msra.mxu0 0.0
  %267 = vmatprep.subr.mxu0 0.0
  %268 = vmatpush2.msra.mxu0 0.0
  %269 = vmatprep.subr.mxu0 0.0
  %270 = vmatpush2.msra.mxu0 0.0
  %271 = vmatprep.subr.mxu0 0.0
  %272 = vmatpush2.msra.mxu0 0.0
  %273 = vmatprep.subr.mxu0 0.0
  %274 = vmatpush2.msra.mxu0 0.0
  %275 = vmatprep.subr.mxu0 0.0
  %276 = vmatpush2.msra.mxu0 0.0
  %277 = vmatprep.subr.mxu0 0.0
  %278 = vmatpush2.msra.mxu0 0.0
  %279 = vmatprep.subr.mxu0 0.0
  %280 = vmatpush2.msra.mxu0 0.0
  %281 = vmatprep.mubr.f32.mxu0 0.0
  %282 = vmatmul.mubr.f32.gmra.mxu0 %v212
  %v283 = vpop.f32.mrf.mxu0
  %v284 = vadd.f32 0.0, %v283
  %v285 = vpop.f32.mrf.mxu0
  %286 = vmatprep.mubr.f32.mxu0 0.0
  %287 = vmatmul.mubr.f32.gmra.mxu0 %v215
  %v288 = vpop.f32.mrf.mxu0
  %v289 = vadd.f32 0.0, %v288
  %v290 = vpop.f32.mrf.mxu0
  %291 = vdwg.mxu0
  %v293 = vsel %vm111, %v207, 0
  %v296 = vsel %vm111, %v208, 0
  %298 = vmatprep.subr.mxu0 0.0
  %299 = vmatpush1.msra.mxu0 0.0
  %300 = vmatprep.subr.mxu0 0.0
  %301 = vmatpush1.msra.mxu0 0.0
  %302 = vmatprep.subr.mxu0 0.0
  %303 = vmatpush1.msra.mxu0 0.0
  %304 = vmatprep.subr.mxu0 0.0
  %305 = vmatpush1.msra.mxu0 0.0
  %306 = vmatprep.subr.mxu0 0.0
  %307 = vmatpush1.msra.mxu0 0.0
  %308 = vmatprep.subr.mxu0 0.0
  %309 = vmatpush1.msra.mxu0 0.0
  %310 = vmatprep.subr.mxu0 0.0
  %311 = vmatpush1.msra.mxu0 0.0
  %312 = vmatprep.subr.mxu0 0.0
  %313 = vmatpush1.msra.mxu0 0.0
  %314 = vmatprep.subr.mxu0 0.0
  %315 = vmatpush1.msra.mxu0 0.0
  %316 = vmatprep.subr.mxu0 0.0
  %317 = vmatpush1.msra.mxu0 0.0
  %318 = vmatprep.subr.mxu0 0.0
  %319 = vmatpush1.msra.mxu0 0.0
  %320 = vmatprep.subr.mxu0 0.0
  %321 = vmatpush1.msra.mxu0 0.0
  %322 = vmatprep.subr.mxu0 0.0
  %323 = vmatpush1.msra.mxu0 %v44
  %324 = vmatprep.subr.mxu0 0.0
  %325 = vmatpush1.msra.mxu0 %v43
  %326 = vmatprep.subr.mxu0 0.0
  %327 = vmatpush1.msra.mxu0 %v42
  %328 = vmatprep.subr.mxu0 0.0
  %329 = vmatpush1.msra.mxu0 %v41
  %330 = vmatprep.subr.mxu0 0.0
  %331 = vmatpush2.msra.mxu0 0.0
  %332 = vmatprep.subr.mxu0 0.0
  %333 = vmatpush2.msra.mxu0 0.0
  %334 = vmatprep.subr.mxu0 0.0
  %335 = vmatpush2.msra.mxu0 0.0
  %336 = vmatprep.subr.mxu0 0.0
  %337 = vmatpush2.msra.mxu0 0.0
  %338 = vmatprep.subr.mxu0 0.0
  %339 = vmatpush2.msra.mxu0 0.0
  %340 = vmatprep.subr.mxu0 0.0
  %341 = vmatpush2.msra.mxu0 0.0
  %342 = vmatprep.subr.mxu0 0.0
  %343 = vmatpush2.msra.mxu0 0.0
  %344 = vmatprep.subr.mxu0 0.0
  %345 = vmatpush2.msra.mxu0 0.0
  %346 = vmatprep.subr.mxu0 0.0
  %347 = vmatpush2.msra.mxu0 0.0
  %348 = vmatprep.subr.mxu0 0.0
  %349 = vmatpush2.msra.mxu0 0.0
  %350 = vmatprep.subr.mxu0 0.0
  %351 = vmatpush2.msra.mxu0 0.0
  %352 = vmatprep.subr.mxu0 0.0
  %353 = vmatpush2.msra.mxu0 0.0
  %354 = vmatprep.subr.mxu0 0.0
  %355 = vmatpush2.msra.mxu0 0.0
  %356 = vmatprep.subr.mxu0 0.0
  %357 = vmatpush2.msra.mxu0 0.0
  %358 = vmatprep.subr.mxu0 0.0
  %359 = vmatpush2.msra.mxu0 0.0
  %360 = vmatprep.subr.mxu0 0.0
  %361 = vmatpush2.msra.mxu0 0.0
  %362 = vmatprep.mubr.f32.mxu0 0.0
  %363 = vmatmul.mubr.f32.gmra.mxu0 %v293
  %v364 = vpop.f32.mrf.mxu0
  %v365 = vadd.f32 %v284, %v364
  %v366 = vpop.f32.mrf.mxu0
  %367 = vmatprep.mubr.f32.mxu0 0.0
  %368 = vmatmul.mubr.f32.gmra.mxu0 %v296
  %v369 = vpop.f32.mrf.mxu0
  %v370 = vadd.f32 %v289, %v369
  %v371 = vpop.f32.mrf.mxu0
  %372 = vdwg.mxu0
  %v374 = vsel %vm111, %v205, 0
  %v377 = vsel %vm111, %v206, 0
  %379 = vmatprep.subr.mxu0 0.0
  %380 = vmatpush1.msra.mxu0 0.0
  %381 = vmatprep.subr.mxu0 0.0
  %382 = vmatpush1.msra.mxu0 0.0
  %383 = vmatprep.subr.mxu0 0.0
  %384 = vmatpush1.msra.mxu0 0.0
  %385 = vmatprep.subr.mxu0 0.0
  %386 = vmatpush1.msra.mxu0 0.0
  %387 = vmatprep.subr.mxu0 0.0
  %388 = vmatpush1.msra.mxu0 0.0
  %389 = vmatprep.subr.mxu0 0.0
  %390 = vmatpush1.msra.mxu0 0.0
  %391 = vmatprep.subr.mxu0 0.0
  %392 = vmatpush1.msra.mxu0 0.0
  %393 = vmatprep.subr.mxu0 0.0
  %394 = vmatpush1.msra.mxu0 0.0
  %395 = vmatprep.subr.mxu0 0.0
  %396 = vmatpush1.msra.mxu0 0.0
  %397 = vmatprep.subr.mxu0 0.0
  %398 = vmatpush1.msra.mxu0 0.0
  %399 = vmatprep.subr.mxu0 0.0
  %400 = vmatpush1.msra.mxu0 0.0
  %401 = vmatprep.subr.mxu0 0.0
  %402 = vmatpush1.msra.mxu0 0.0
  %403 = vmatprep.subr.mxu0 0.0
  %404 = vmatpush1.msra.mxu0 %v52
  %405 = vmatprep.subr.mxu0 0.0
  %406 = vmatpush1.msra.mxu0 %v51
  %407 = vmatprep.subr.mxu0 0.0
  %408 = vmatpush1.msra.mxu0 %v50
  %409 = vmatprep.subr.mxu0 0.0
  %410 = vmatpush1.msra.mxu0 %v49
  %411 = vmatprep.subr.mxu0 0.0
  %412 = vmatpush2.msra.mxu0 0.0
  %413 = vmatprep.subr.mxu0 0.0
  %414 = vmatpush2.msra.mxu0 0.0
  %415 = vmatprep.subr.mxu0 0.0
  %416 = vmatpush2.msra.mxu0 0.0
  %417 = vmatprep.subr.mxu0 0.0
  %418 = vmatpush2.msra.mxu0 0.0
  %419 = vmatprep.subr.mxu0 0.0
  %420 = vmatpush2.msra.mxu0 0.0
  %421 = vmatprep.subr.mxu0 0.0
  %422 = vmatpush2.msra.mxu0 0.0
  %423 = vmatprep.subr.mxu0 0.0
  %424 = vmatpush2.msra.mxu0 0.0
  %425 = vmatprep.subr.mxu0 0.0
  %426 = vmatpush2.msra.mxu0 0.0
  %427 = vmatprep.subr.mxu0 0.0
  %428 = vmatpush2.msra.mxu0 0.0
  %429 = vmatprep.subr.mxu0 0.0
  %430 = vmatpush2.msra.mxu0 0.0
  %431 = vmatprep.subr.mxu0 0.0
  %432 = vmatpush2.msra.mxu0 0.0
  %433 = vmatprep.subr.mxu0 0.0
  %434 = vmatpush2.msra.mxu0 0.0
  %435 = vmatprep.subr.mxu0 0.0
  %436 = vmatpush2.msra.mxu0 0.0
  %437 = vmatprep.subr.mxu0 0.0
  %438 = vmatpush2.msra.mxu0 0.0
  %439 = vmatprep.subr.mxu0 0.0
  %440 = vmatpush2.msra.mxu0 0.0
  %441 = vmatprep.subr.mxu0 0.0
  %442 = vmatpush2.msra.mxu0 0.0
  %443 = vmatprep.mubr.f32.mxu0 0.0
  %444 = vmatmul.mubr.f32.gmra.mxu0 %v374
  %v445 = vpop.f32.mrf.mxu0
  %v446 = vadd.f32 0.0, %v445
  %v447 = vpop.f32.mrf.mxu0
  %448 = vmatprep.mubr.f32.mxu0 0.0
  %449 = vmatmul.mubr.f32.gmra.mxu0 %v377
  %v450 = vpop.f32.mrf.mxu0
  %v451 = vadd.f32 0.0, %v450
  %v452 = vpop.f32.mrf.mxu0
  %453 = vdwg.mxu0
  %v454 = vadd.f32 %v365, %v446
  %v455 = vadd.f32 %v370, %v451
  %v457 = vlaneseq
  %v458 = vshrl.u32 %v457, 7
  %v459 = vsub.s32 0, %v458
  %v460 = vrot.slane %v53, %v459
  %v462 = vadd.f32 %v454, %v460
  %v463 = vadd.f32 %v455, %v460
  %vm464 = vcmask 64512
  %465 = vst.msk [vmem:[%s10] sm:$0xff] %vm464, %v462
  %466 = vst.msk [vmem:[%s10 + $0x8] sm:$0xff] %vm464, %v463
  %s467 = scalar_lea.vmem %s0, 16
  %v468 = vld [vmem:[%s467] sm:$0xff]
  %v469 = vld [vmem:[%s467 + $0x8] sm:$0xff]
  %v470 = vpack.c.bf16 %v469, %v468
  %s471 = scalar_lea.vmem %s1, 16
  %v472 = vld [vmem:[%s471] sm:$0xff]
  %v473 = vld [vmem:[%s471 + $0x8] sm:$0xff]
  %v474 = vpack.c.bf16 %v473, %v472
  %v476 = vsel %vm60, %v470, 0
  %478 = vmatprep.subr.bf16.mxu0 0
  %479 = vmatpush1.bf16.msra.mxu0 0
  %480 = vmatprep.subr.bf16.mxu0 0
  %481 = vmatpush1.bf16.msra.mxu0 0
  %482 = vmatprep.subr.bf16.mxu0 0
  %483 = vmatpush1.bf16.msra.mxu0 0
  %484 = vmatprep.subr.bf16.mxu0 0
  %485 = vmatpush1.bf16.msra.mxu0 0
  %486 = vmatprep.subr.bf16.mxu0 0
  %487 = vmatpush1.bf16.msra.mxu0 0
  %488 = vmatprep.subr.bf16.mxu0 0
  %489 = vmatpush1.bf16.msra.mxu0 0
  %490 = vmatprep.subr.bf16.mxu0 0
  %491 = vmatpush1.bf16.msra.mxu0 0
  %492 = vmatprep.subr.bf16.mxu0 0
  %493 = vmatpush1.bf16.msra.mxu0 %v474
  %494 = vmatprep.subr.bf16.mxu0 0
  %495 = vmatpush2.bf16.msra.mxu0 0
  %496 = vmatprep.subr.bf16.mxu0 0
  %497 = vmatpush2.bf16.msra.mxu0 0
  %498 = vmatprep.subr.bf16.mxu0 0
  %499 = vmatpush2.bf16.msra.mxu0 0
  %500 = vmatprep.subr.bf16.mxu0 0
  %501 = vmatpush2.bf16.msra.mxu0 0
  %502 = vmatprep.subr.bf16.mxu0 0
  %503 = vmatpush2.bf16.msra.mxu0 0
  %504 = vmatprep.subr.bf16.mxu0 0
  %505 = vmatpush2.bf16.msra.mxu0 0
  %506 = vmatprep.subr.bf16.mxu0 0
  %507 = vmatpush2.bf16.msra.mxu0 0
  %508 = vmatprep.subr.bf16.mxu0 0
  %509 = vmatpush2.bf16.msra.mxu0 0
  %510 = vmatprep.mubr.bf16.mxu0 0
  %511 = vmatmul.mubr.bf16.gmra.mxu0 %v476
  %v512 = vpop.f32.mrf.mxu0
  %v513 = vadd.f32 0.0, %v512
  %v514 = vpop.f32.mrf.mxu0
  %v515 = vpop.f32.mrf.mxu0
  %v516 = vadd.f32 0.0, %v515
  %v517 = vpop.f32.mrf.mxu0
  %518 = vdwg.mxu0
  %v520 = vsel %vm111, %v513, 0
  %v523 = vsel %vm111, %v516, 0
  %525 = vmatprep.subr.mxu0 0.0
  %526 = vmatpush1.msra.mxu0 0.0
  %527 = vmatprep.subr.mxu0 0.0
  %528 = vmatpush1.msra.mxu0 0.0
  %529 = vmatprep.subr.mxu0 0.0
  %530 = vmatpush1.msra.mxu0 0.0
  %531 = vmatprep.subr.mxu0 0.0
  %532 = vmatpush1.msra.mxu0 0.0
  %533 = vmatprep.subr.mxu0 0.0
  %534 = vmatpush1.msra.mxu0 0.0
  %535 = vmatprep.subr.mxu0 0.0
  %536 = vmatpush1.msra.mxu0 0.0
  %537 = vmatprep.subr.mxu0 0.0
  %538 = vmatpush1.msra.mxu0 0.0
  %539 = vmatprep.subr.mxu0 0.0
  %540 = vmatpush1.msra.mxu0 0.0
  %541 = vmatprep.subr.mxu0 0.0
  %542 = vmatpush1.msra.mxu0 0.0
  %543 = vmatprep.subr.mxu0 0.0
  %544 = vmatpush1.msra.mxu0 0.0
  %545 = vmatprep.subr.mxu0 0.0
  %546 = vmatpush1.msra.mxu0 0.0
  %547 = vmatprep.subr.mxu0 0.0
  %548 = vmatpush1.msra.mxu0 0.0
  %549 = vmatprep.subr.mxu0 0.0
  %550 = vmatpush1.msra.mxu0 %v39
  %551 = vmatprep.subr.mxu0 0.0
  %552 = vmatpush1.msra.mxu0 %v38
  %553 = vmatprep.subr.mxu0 0.0
  %554 = vmatpush1.msra.mxu0 %v37
  %555 = vmatprep.subr.mxu0 0.0
  %556 = vmatpush1.msra.mxu0 %v36
  %557 = vmatprep.subr.mxu0 0.0
  %558 = vmatpush2.msra.mxu0 0.0
  %559 = vmatprep.subr.mxu0 0.0
  %560 = vmatpush2.msra.mxu0 0.0
  %561 = vmatprep.subr.mxu0 0.0
  %562 = vmatpush2.msra.mxu0 0.0
  %563 = vmatprep.subr.mxu0 0.0
  %564 = vmatpush2.msra.mxu0 0.0
  %565 = vmatprep.subr.mxu0 0.0
  %566 = vmatpush2.msra.mxu0 0.0
  %567 = vmatprep.subr.mxu0 0.0
  %568 = vmatpush2.msra.mxu0 0.0
  %569 = vmatprep.subr.mxu0 0.0
  %570 = vmatpush2.msra.mxu0 0.0
  %571 = vmatprep.subr.mxu0 0.0
  %572 = vmatpush2.msra.mxu0 0.0
  %573 = vmatprep.subr.mxu0 0.0
  %574 = vmatpush2.msra.mxu0 0.0
  %575 = vmatprep.subr.mxu0 0.0
  %576 = vmatpush2.msra.mxu0 0.0
  %577 = vmatprep.subr.mxu0 0.0
  %578 = vmatpush2.msra.mxu0 0.0
  %579 = vmatprep.subr.mxu0 0.0
  %580 = vmatpush2.msra.mxu0 0.0
  %581 = vmatprep.subr.mxu0 0.0
  %582 = vmatpush2.msra.mxu0 0.0
  %583 = vmatprep.subr.mxu0 0.0
  %584 = vmatpush2.msra.mxu0 0.0
  %585 = vmatprep.subr.mxu0 0.0
  %586 = vmatpush2.msra.mxu0 0.0
  %587 = vmatprep.subr.mxu0 0.0
  %588 = vmatpush2.msra.mxu0 0.0
  %589 = vmatprep.mubr.f32.mxu0 0.0
  %590 = vmatmul.mubr.f32.gmra.mxu0 %v520
  %v591 = vpop.f32.mrf.mxu0
  %v592 = vadd.f32 %v109, %v591
  %v593 = vpop.f32.mrf.mxu0
  %594 = vmatprep.mubr.f32.mxu0 0.0
  %595 = vmatmul.mubr.f32.gmra.mxu0 %v523
  %v596 = vpop.f32.mrf.mxu0
  %v597 = vadd.f32 %v109, %v596
  %v598 = vpop.f32.mrf.mxu0
  %599 = vdwg.mxu0
  %v600 = vmul.f32 %v592, %v592
  %v601 = vmul.f32 %v597, %v597
  %v602 = vsel %vm111, %v600, 0.0
  %603 = vadd.xlane.f32.xlu0 %v602
  %v604 = vpop.xlane.xlu0 %603
  %v605 = vsel %vm111, %v601, 0.0
  %606 = vadd.xlane.f32.xlu0 %v605
  %v607 = vpop.xlane.xlu0 %606
  %v608 = vmax.f32 %v604, 1e-24
  %v609 = vmax.f32 %v607, 1e-24
  %v610 = vrsqrt.pop %v608
  %v611 = vrsqrt.pop %v609
  %v612 = vmul.f32 %v592, %v610
  %v613 = vmul.f32 %v597, %v611
  %s614 = scalar_lea.vmem %s4, 16
  %v615 = vld [vmem:[%s614] sm:$0xff]
  %v616 = vld [vmem:[%s614 + $0x8] sm:$0xff]
  %s617 = scalar_lea.vmem %s5, 16
  %v618 = vld [vmem:[%s617] sm:$0xff]
  %v619 = vld [vmem:[%s617 + $0x8] sm:$0xff]
  %v621 = vsel %vm111, %v618, 0
  %v624 = vsel %vm111, %v619, 0
  %626 = vmatprep.subr.mxu0 0.0
  %627 = vmatpush1.msra.mxu0 0.0
  %628 = vmatprep.subr.mxu0 0.0
  %629 = vmatpush1.msra.mxu0 0.0
  %630 = vmatprep.subr.mxu0 0.0
  %631 = vmatpush1.msra.mxu0 0.0
  %632 = vmatprep.subr.mxu0 0.0
  %633 = vmatpush1.msra.mxu0 0.0
  %634 = vmatprep.subr.mxu0 0.0
  %635 = vmatpush1.msra.mxu0 0.0
  %636 = vmatprep.subr.mxu0 0.0
  %637 = vmatpush1.msra.mxu0 0.0
  %638 = vmatprep.subr.mxu0 0.0
  %639 = vmatpush1.msra.mxu0 0.0
  %640 = vmatprep.subr.mxu0 0.0
  %641 = vmatpush1.msra.mxu0 0.0
  %642 = vmatprep.subr.mxu0 0.0
  %643 = vmatpush1.msra.mxu0 0.0
  %644 = vmatprep.subr.mxu0 0.0
  %645 = vmatpush1.msra.mxu0 0.0
  %646 = vmatprep.subr.mxu0 0.0
  %647 = vmatpush1.msra.mxu0 0.0
  %648 = vmatprep.subr.mxu0 0.0
  %649 = vmatpush1.msra.mxu0 0.0
  %650 = vmatprep.subr.mxu0 0.0
  %651 = vmatpush1.msra.mxu0 %v48
  %652 = vmatprep.subr.mxu0 0.0
  %653 = vmatpush1.msra.mxu0 %v47
  %654 = vmatprep.subr.mxu0 0.0
  %655 = vmatpush1.msra.mxu0 %v46
  %656 = vmatprep.subr.mxu0 0.0
  %657 = vmatpush1.msra.mxu0 %v45
  %658 = vmatprep.subr.mxu0 0.0
  %659 = vmatpush2.msra.mxu0 0.0
  %660 = vmatprep.subr.mxu0 0.0
  %661 = vmatpush2.msra.mxu0 0.0
  %662 = vmatprep.subr.mxu0 0.0
  %663 = vmatpush2.msra.mxu0 0.0
  %664 = vmatprep.subr.mxu0 0.0
  %665 = vmatpush2.msra.mxu0 0.0
  %666 = vmatprep.subr.mxu0 0.0
  %667 = vmatpush2.msra.mxu0 0.0
  %668 = vmatprep.subr.mxu0 0.0
  %669 = vmatpush2.msra.mxu0 0.0
  %670 = vmatprep.subr.mxu0 0.0
  %671 = vmatpush2.msra.mxu0 0.0
  %672 = vmatprep.subr.mxu0 0.0
  %673 = vmatpush2.msra.mxu0 0.0
  %674 = vmatprep.subr.mxu0 0.0
  %675 = vmatpush2.msra.mxu0 0.0
  %676 = vmatprep.subr.mxu0 0.0
  %677 = vmatpush2.msra.mxu0 0.0
  %678 = vmatprep.subr.mxu0 0.0
  %679 = vmatpush2.msra.mxu0 0.0
  %680 = vmatprep.subr.mxu0 0.0
  %681 = vmatpush2.msra.mxu0 0.0
  %682 = vmatprep.subr.mxu0 0.0
  %683 = vmatpush2.msra.mxu0 0.0
  %684 = vmatprep.subr.mxu0 0.0
  %685 = vmatpush2.msra.mxu0 0.0
  %686 = vmatprep.subr.mxu0 0.0
  %687 = vmatpush2.msra.mxu0 0.0
  %688 = vmatprep.subr.mxu0 0.0
  %689 = vmatpush2.msra.mxu0 0.0
  %690 = vmatprep.mubr.f32.mxu0 0.0
  %691 = vmatmul.mubr.f32.gmra.mxu0 %v621
  %v692 = vpop.f32.mrf.mxu0
  %v693 = vadd.f32 0.0, %v692
  %v694 = vpop.f32.mrf.mxu0
  %695 = vmatprep.mubr.f32.mxu0 0.0
  %696 = vmatmul.mubr.f32.gmra.mxu0 %v624
  %v697 = vpop.f32.mrf.mxu0
  %v698 = vadd.f32 0.0, %v697
  %v699 = vpop.f32.mrf.mxu0
  %700 = vdwg.mxu0
  %v702 = vsel %vm111, %v615, 0
  %v705 = vsel %vm111, %v616, 0
  %707 = vmatprep.subr.mxu0 0.0
  %708 = vmatpush1.msra.mxu0 0.0
  %709 = vmatprep.subr.mxu0 0.0
  %710 = vmatpush1.msra.mxu0 0.0
  %711 = vmatprep.subr.mxu0 0.0
  %712 = vmatpush1.msra.mxu0 0.0
  %713 = vmatprep.subr.mxu0 0.0
  %714 = vmatpush1.msra.mxu0 0.0
  %715 = vmatprep.subr.mxu0 0.0
  %716 = vmatpush1.msra.mxu0 0.0
  %717 = vmatprep.subr.mxu0 0.0
  %718 = vmatpush1.msra.mxu0 0.0
  %719 = vmatprep.subr.mxu0 0.0
  %720 = vmatpush1.msra.mxu0 0.0
  %721 = vmatprep.subr.mxu0 0.0
  %722 = vmatpush1.msra.mxu0 0.0
  %723 = vmatprep.subr.mxu0 0.0
  %724 = vmatpush1.msra.mxu0 0.0
  %725 = vmatprep.subr.mxu0 0.0
  %726 = vmatpush1.msra.mxu0 0.0
  %727 = vmatprep.subr.mxu0 0.0
  %728 = vmatpush1.msra.mxu0 0.0
  %729 = vmatprep.subr.mxu0 0.0
  %730 = vmatpush1.msra.mxu0 0.0
  %731 = vmatprep.subr.mxu0 0.0
  %732 = vmatpush1.msra.mxu0 %v44
  %733 = vmatprep.subr.mxu0 0.0
  %734 = vmatpush1.msra.mxu0 %v43
  %735 = vmatprep.subr.mxu0 0.0
  %736 = vmatpush1.msra.mxu0 %v42
  %737 = vmatprep.subr.mxu0 0.0
  %738 = vmatpush1.msra.mxu0 %v41
  %739 = vmatprep.subr.mxu0 0.0
  %740 = vmatpush2.msra.mxu0 0.0
  %741 = vmatprep.subr.mxu0 0.0
  %742 = vmatpush2.msra.mxu0 0.0
  %743 = vmatprep.subr.mxu0 0.0
  %744 = vmatpush2.msra.mxu0 0.0
  %745 = vmatprep.subr.mxu0 0.0
  %746 = vmatpush2.msra.mxu0 0.0
  %747 = vmatprep.subr.mxu0 0.0
  %748 = vmatpush2.msra.mxu0 0.0
  %749 = vmatprep.subr.mxu0 0.0
  %750 = vmatpush2.msra.mxu0 0.0
  %751 = vmatprep.subr.mxu0 0.0
  %752 = vmatpush2.msra.mxu0 0.0
  %753 = vmatprep.subr.mxu0 0.0
  %754 = vmatpush2.msra.mxu0 0.0
  %755 = vmatprep.subr.mxu0 0.0
  %756 = vmatpush2.msra.mxu0 0.0
  %757 = vmatprep.subr.mxu0 0.0
  %758 = vmatpush2.msra.mxu0 0.0
  %759 = vmatprep.subr.mxu0 0.0
  %760 = vmatpush2.msra.mxu0 0.0
  %761 = vmatprep.subr.mxu0 0.0
  %762 = vmatpush2.msra.mxu0 0.0
  %763 = vmatprep.subr.mxu0 0.0
  %764 = vmatpush2.msra.mxu0 0.0
  %765 = vmatprep.subr.mxu0 0.0
  %766 = vmatpush2.msra.mxu0 0.0
  %767 = vmatprep.subr.mxu0 0.0
  %768 = vmatpush2.msra.mxu0 0.0
  %769 = vmatprep.subr.mxu0 0.0
  %770 = vmatpush2.msra.mxu0 0.0
  %771 = vmatprep.mubr.f32.mxu0 0.0
  %772 = vmatmul.mubr.f32.gmra.mxu0 %v702
  %v773 = vpop.f32.mrf.mxu0
  %v774 = vadd.f32 %v693, %v773
  %v775 = vpop.f32.mrf.mxu0
  %776 = vmatprep.mubr.f32.mxu0 0.0
  %777 = vmatmul.mubr.f32.gmra.mxu0 %v705
  %v778 = vpop.f32.mrf.mxu0
  %v779 = vadd.f32 %v698, %v778
  %v780 = vpop.f32.mrf.mxu0
  %781 = vdwg.mxu0
  %v783 = vsel %vm111, %v612, 0
  %v786 = vsel %vm111, %v613, 0
  %788 = vmatprep.subr.mxu0 0.0
  %789 = vmatpush1.msra.mxu0 0.0
  %790 = vmatprep.subr.mxu0 0.0
  %791 = vmatpush1.msra.mxu0 0.0
  %792 = vmatprep.subr.mxu0 0.0
  %793 = vmatpush1.msra.mxu0 0.0
  %794 = vmatprep.subr.mxu0 0.0
  %795 = vmatpush1.msra.mxu0 0.0
  %796 = vmatprep.subr.mxu0 0.0
  %797 = vmatpush1.msra.mxu0 0.0
  %798 = vmatprep.subr.mxu0 0.0
  %799 = vmatpush1.msra.mxu0 0.0
  %800 = vmatprep.subr.mxu0 0.0
  %801 = vmatpush1.msra.mxu0 0.0
  %802 = vmatprep.subr.mxu0 0.0
  %803 = vmatpush1.msra.mxu0 0.0
  %804 = vmatprep.subr.mxu0 0.0
  %805 = vmatpush1.msra.mxu0 0.0
  %806 = vmatprep.subr.mxu0 0.0
  %807 = vmatpush1.msra.mxu0 0.0
  %808 = vmatprep.subr.mxu0 0.0
  %809 = vmatpush1.msra.mxu0 0.0
  %810 = vmatprep.subr.mxu0 0.0
  %811 = vmatpush1.msra.mxu0 0.0
  %812 = vmatprep.subr.mxu0 0.0
  %813 = vmatpush1.msra.mxu0 %v52
  %814 = vmatprep.subr.mxu0 0.0
  %815 = vmatpush1.msra.mxu0 %v51
  %816 = vmatprep.subr.mxu0 0.0
  %817 = vmatpush1.msra.mxu0 %v50
  %818 = vmatprep.subr.mxu0 0.0
  %819 = vmatpush1.msra.mxu0 %v49
  %820 = vmatprep.subr.mxu0 0.0
  %821 = vmatpush2.msra.mxu0 0.0
  %822 = vmatprep.subr.mxu0 0.0
  %823 = vmatpush2.msra.mxu0 0.0
  %824 = vmatprep.subr.mxu0 0.0
  %825 = vmatpush2.msra.mxu0 0.0
  %826 = vmatprep.subr.mxu0 0.0
  %827 = vmatpush2.msra.mxu0 0.0
  %828 = vmatprep.subr.mxu0 0.0
  %829 = vmatpush2.msra.mxu0 0.0
  %830 = vmatprep.subr.mxu0 0.0
  %831 = vmatpush2.msra.mxu0 0.0
  %832 = vmatprep.subr.mxu0 0.0
  %833 = vmatpush2.msra.mxu0 0.0
  %834 = vmatprep.subr.mxu0 0.0
  %835 = vmatpush2.msra.mxu0 0.0
  %836 = vmatprep.subr.mxu0 0.0
  %837 = vmatpush2.msra.mxu0 0.0
  %838 = vmatprep.subr.mxu0 0.0
  %839 = vmatpush2.msra.mxu0 0.0
  %840 = vmatprep.subr.mxu0 0.0
  %841 = vmatpush2.msra.mxu0 0.0
  %842 = vmatprep.subr.mxu0 0.0
  %843 = vmatpush2.msra.mxu0 0.0
  %844 = vmatprep.subr.mxu0 0.0
  %845 = vmatpush2.msra.mxu0 0.0
  %846 = vmatprep.subr.mxu0 0.0
  %847 = vmatpush2.msra.mxu0 0.0
  %848 = vmatprep.subr.mxu0 0.0
  %849 = vmatpush2.msra.mxu0 0.0
  %850 = vmatprep.subr.mxu0 0.0
  %851 = vmatpush2.msra.mxu0 0.0
  %852 = vmatprep.mubr.f32.mxu0 0.0
  %853 = vmatmul.mubr.f32.gmra.mxu0 %v783
  %v854 = vpop.f32.mrf.mxu0
  %v855 = vadd.f32 0.0, %v854
  %v856 = vpop.f32.mrf.mxu0
  %857 = vmatprep.mubr.f32.mxu0 0.0
  %858 = vmatmul.mubr.f32.gmra.mxu0 %v786
  %v859 = vpop.f32.mrf.mxu0
  %v860 = vadd.f32 0.0, %v859
  %v861 = vpop.f32.mrf.mxu0
  %862 = vdwg.mxu0
  %v863 = vadd.f32 %v774, %v855
  %v864 = vadd.f32 %v779, %v860
  %v865 = vadd.f32 %v863, %v460
  %v866 = vadd.f32 %v864, %v460
  %s867 = scalar_lea.vmem %s10, 16
  %868 = vst.msk [vmem:[%s867] sm:$0xff] %vm464, %v865
  %869 = vst.msk [vmem:[%s867 + $0x8] sm:$0xff] %vm464, %v866
  // Predicated region
  $region42: #{glcn_encoder_forward.7} parent=0 // pred_check
    _
  $region43: #{glcn_encoder_forward.7} parent=0 // pred_check_branch
    %871 = sbr.rel (0) target = $region45
  $region44: #{glcn_encoder_forward.7} parent=0 // pred_region
    _
  $region45: #{glcn_encoder_forward.7} parent=0 // pred_fallthru
    _
  // Predicated region
  $region46: #{glcn_encoder_forward.7} parent=0 // pred_check
    _
  $region47: #{glcn_encoder_forward.7} parent=0 // pred_check_branch
    %873 = sbr.rel (0) target = $region49
  $region48: #{glcn_encoder_forward.7} parent=0 // pred_region
    _
  $region49: #{glcn_encoder_forward.7} parent=0 // pred_fallthru
    _

</llo_original>
